<compile_context>
chip_gen: v7x
topology: tpu7x:2x2x1
jax: 0.10.0
libtpu: 0.0.40
codegen_flags: <defaults>
</compile_context>

<pallas_src>
import math

import jax
import jax.numpy as jnp
from jax import lax
from jax.experimental import pallas as pl
from jax.experimental.pallas import tpu as pltpu

# -----------------------------------------------------------------------------
# "config" values (the reference's `config` module is not provided).
# -----------------------------------------------------------------------------
HIDDEN_SIZE = 128          # config.hidden_size
EMBEDDING_DIM = 128        # config.embedding_dim
NL_VOCAB_SIZE = 124        # config.nl_vocab_size   (124 + 4 OOV = 128 lanes)
MAX_OOV_NUM = 4
USE_POINTER_GEN = True     # config.use_pointer_gen — kernel implements this path
EPS = 1e-12                # config.eps
# TODO(synk): config.decoder_dropout_rate -> nn.Dropout is eval-mode identity
# here; no in-kernel RNG dropout is applied.

_NEG_INF = -1e30

# Params that live in VMEM inside the per-step kernel (embedding stays in HBM,
# attn_w2t is consumed only by the once-per-sequence encoder precompute).
_KPARAMS = (
    "attn_w1t",   # (H, H)     bf16  attn.weight[:, :H].T (acts on decoder hidden)
    "attn_b",     # (1, H)     f32
    "attn_v",     # (1, H)     f32
    "pick_wt",    # (H, 1)     bf16
    "pick_b",     # (1, 1)     f32
    "pgen_wt",    # (3H+E, 1)  bf16
    "pgen_b",     # (1, 1)     f32
    "gru_wih_t",  # (E+2H, 3H) bf16  torch weight_ih rows ordered [r | z | n]
    "gru_whh_t",  # (H, 3H)    bf16
    "gru_bih",    # (1, 3H)    f32
    "gru_bhh",    # (1, 3H)    f32
    "out_wt",     # (3H, VEXT) bf16, columns >= NL are zero
    "out_b",      # (1, VEXT)  f32,  columns >= NL are -1e30 (softmax mask)
)
_N_DATA = 7   # tok, hid, embedding(HBM), enc_all, proj_all, ext_ids, extra_ext


# -----------------------------------------------------------------------------
# Shared math (used verbatim by the Pallas kernel body and the JAX reference).
# -----------------------------------------------------------------------------
def _sigmoid(x):
    return 1.0 / (1.0 + jnp.exp(-x))


def _softmax(x, axis):
    m = jnp.max(x, axis=axis, keepdims=True)
    e = jnp.exp(x - m)
    return e / jnp.sum(e, axis=axis, keepdims=True)


def _bdot(x, w_bf16):
    """bf16 operands, f32 accumulation (MXU-native on v6e/v7x)."""
    return jnp.dot(x.astype(jnp.bfloat16), w_bf16,
                   preferred_element_type=jnp.float32)


def _decoder_math(p, embedded, hid, enc_all, proj_all, ext_ids, extra_ext):
    """embedded (B,E) f32 | hid (B,H) f32 | enc_all/proj_all (3B,T,H) bf16
    ext_ids (B,T) i32 | extra_ext (B,VEXT) f32 (extra_zeros placed at lanes>=NL)."""
    f32, bf16 = jnp.float32, jnp.bfloat16
    B, H = hid.shape
    B3, T, _ = enc_all.shape          # B3 == 3*B, stacked [code | gat | tree]
    VEXT = extra_ext.shape[1]

    # --- additive attention, per-step half (enc projection precomputed) ------
    hid_proj = _bdot(hid, p["attn_w1t"]) + p["attn_b"]                  # (B,H)
    hid3 = jnp.concatenate([hid_proj, hid_proj, hid_proj], axis=0)      # (3B,H)
    energy = jnp.maximum(proj_all.astype(f32) + hid3[:, None, :], 0.0)  # (3B,T,H)
    scores = jnp.sum(energy * p["attn_v"][None, :, :], axis=-1)         # (3B,T)
    w = _softmax(scores, axis=1)                                        # (3B,T)
    ctx = jnp.einsum("bqt,bth->bqh", w[:, None, :].astype(bf16), enc_all,
                     preferred_element_type=f32)[:, 0, :]               # (3B,H)
    code_w = w[:B]
    code_ctx, gat_ctx, tree_ctx = ctx[:B], ctx[B:2 * B], ctx[2 * B:]

    # --- pick gate: poss = sigmoid(pick(softmax(hidden))) --------------------
    poss = _sigmoid(_bdot(_softmax(hid, axis=1), p["pick_wt"]) + p["pick_b"])
    full_ctx = jnp.concatenate([gat_ctx, code_ctx + poss * tree_ctx], axis=1)

    # --- pointer-generator gate ----------------------------------------------
    pgen_in = jnp.concatenate([full_ctx, hid, embedded], axis=1)        # (B,3H+E)
    p_gen = _sigmoid(_bdot(pgen_in, p["pgen_wt"]) + p["pgen_b"])        # (B,1)

    # --- single-step GRU cell (torch gate order r, z, n) ----------------------
    rnn_in = jnp.concatenate([embedded, full_ctx], axis=1)              # (B,E+2H)
    gi = _bdot(rnn_in, p["gru_wih_t"]) + p["gru_bih"]
    gh = _bdot(hid, p["gru_whh_t"]) + p["gru_bhh"]
    r = _sigmoid(gi[:, :H] + gh[:, :H])
    z = _sigmoid(gi[:, H:2 * H] + gh[:, H:2 * H])
    n = jnp.tanh(gi[:, 2 * H:] + r * gh[:, 2 * H:])
    h_new = (1.0 - z) * n + z * hid                                     # (B,H)

    # --- vocab distribution (lane-dense VEXT wide, pad logits masked) --------
    out_in = jnp.concatenate([h_new, full_ctx], axis=1)                 # (B,3H)
    logits = _bdot(out_in, p["out_wt"]) + p["out_b"]                    # (B,VEXT)
    vocab_dist = _softmax(logits, axis=1)                               # pads -> 0
    attn_dist = (1.0 - p_gen) * code_w                                  # (B,T)
    extended = p_gen * vocab_dist + extra_ext                           # (B,VEXT)

    # scatter_add(dim=1, index=ext_ids, src=attn_dist) as a one-hot MXU matmul.
    vext_iota = lax.broadcasted_iota(jnp.int32, (B, T, VEXT), 2)
    onehot = (vext_iota == ext_ids[:, :, None]).astype(f32)
    scat = jnp.einsum("bqt,btv->bqv", attn_dist[:, None, :], onehot,
                      preferred_element_type=f32)[:, 0, :]              # (B,VEXT)

    final = jnp.log(extended + scat + EPS)
    return final, h_new


# -----------------------------------------------------------------------------
# Pallas kernel: one fused invocation; per-step tensors are VMEM-resident, the
# embedding table stays in HBM and only the B needed rows are DMA-gathered.
# -----------------------------------------------------------------------------
def _decoder_step_kernel(*refs):
    n_par = len(_KPARAMS)
    (tok_ref, hid_ref, emb_hbm, enc_ref, proj_ref, ext_ref,
     extraz_ref) = refs[:_N_DATA]
    param_refs = refs[_N_DATA:_N_DATA + n_par]
    final_ref, hidden_ref = refs[_N_DATA + n_par:_N_DATA + n_par + 2]
    emb_vmem, emb_sem = refs[_N_DATA + n_par + 2:]

    B = emb_vmem.shape[0]
    # Embedding row gather: one small HBM->VMEM DMA per token (ids in SMEM).
    copies = []
    for b in range(B):
        cp = pltpu.make_async_copy(emb_hbm.at[pl.ds(tok_ref[b], 1), :],
                                   emb_vmem.at[pl.ds(b, 1), :],
                                   emb_sem.at[b])
        cp.start()
        copies.append(cp)
    for cp in copies:
        cp.wait()

    p = {name: r[...] for name, r in zip(_KPARAMS, param_refs)}
    final, h_new = _decoder_math(
        p, emb_vmem[...], hid_ref[...], enc_ref[...], proj_ref[...],
        ext_ref[...], extraz_ref[...])

    final_ref[...] = final.astype(final_ref.dtype)
    hidden_ref[...] = h_new.astype(hidden_ref.dtype)


# -----------------------------------------------------------------------------
# Once-per-model / once-per-sequence host-side preparation.
# -----------------------------------------------------------------------------
def prepare_decoder_params(params, pad_width):
    """Kernel-ready params: transposed, bf16 matmul weights, output projection
    padded to the lane-dense extended width (nl_vocab + max_oov).  In a real
    decode loop call this once per model."""
    f32, bf16 = jnp.float32, jnp.bfloat16
    H = params["attn_weight"].shape[0]
    NL = params["out_bias"].shape[0]
    assert pad_width >= NL and pad_width % 128 == 0, \
        "extended vocab must be lane-dense (multiple of 128)"
    aw = params["attn_weight"].astype(f32)
    out_wt = jnp.pad(params["out_weight"].astype(f32).T,
                     ((0, 0), (0, pad_width - NL)))
    out_b = jnp.concatenate([params["out_bias"].astype(f32),
                             jnp.full((pad_width - NL,), _NEG_INF, f32)])
    return {
        "embedding": params["embedding"].astype(f32),        # stays in HBM
        "attn_w2t": aw[:, H:].T.astype(bf16),                # precompute only
        "attn_w1t": aw[:, :H].T.astype(bf16),
        "attn_b": params["attn_bias"].astype(f32).reshape(1, H),
        "attn_v": params["attn_v"].astype(f32).reshape(1, H),
        "pick_wt": params["pick_weight"].astype(f32).T.astype(bf16),
        "pick_b": params["pick_bias"].astype(f32).reshape(1, 1),
        "pgen_wt": params["pgen_weight"].astype(f32).T.astype(bf16),
        "pgen_b": params["pgen_bias"].astype(f32).reshape(1, 1),
        "gru_wih_t": params["gru_wih"].astype(f32).T.astype(bf16),
        "gru_whh_t": params["gru_whh"].astype(f32).T.astype(bf16),
        "gru_bih": params["gru_bih"].astype(f32).reshape(1, -1),
        "gru_bhh": params["gru_bhh"].astype(f32).reshape(1, -1),
        "out_wt": out_wt.astype(bf16),
        "out_b": out_b.reshape(1, pad_width),
    }


def precompute_encoder_state(kparams, code_outputs, gat_outputs, tree_outputs):
    """Loop-invariant encoder work hoisted out of the per-step kernel:
    [T,B,H]->[B,T,H] transpose + encoder-side attn projection, all three
    encoders stacked along batch.  In a real decode loop call once per sequence."""
    bf16 = jnp.bfloat16
    enc = jnp.concatenate(
        [jnp.transpose(x, (1, 0, 2))
         for x in (code_outputs, gat_outputs, tree_outputs)],
        axis=0).astype(bf16)                                            # (3B,T,H)
    proj = jnp.einsum("bth,hk->btk", enc, kparams["attn_w2t"],
                      preferred_element_type=jnp.float32).astype(bf16)  # (3B,T,H)
    return enc, proj


# -----------------------------------------------------------------------------
# Per-step Pallas call.
# -----------------------------------------------------------------------------
def decoder_step(kparams, enc_all, proj_all, inputs, last_hidden,
                 extend_type_batch, extra_zeros):
    B = inputs.shape[0]
    H = last_hidden.shape[-1]
    T = enc_all.shape[1]
    _, E = kparams["embedding"].shape
    VEXT = kparams["out_b"].shape[1]
    NL = VEXT - extra_zeros.shape[1]

    tok = inputs.astype(jnp.int32).reshape(B)
    hid = last_hidden.reshape(B, H).astype(jnp.float32)
    ext = extend_type_batch.astype(jnp.int32)
    extra_ext = jnp.concatenate(
        [jnp.zeros((B, NL), jnp.float32), extra_zeros.astype(jnp.float32)],
        axis=1)                                                         # (B,VEXT)

    args = (tok, hid, kparams["embedding"], enc_all, proj_all, ext, extra_ext) \
        + tuple(kparams[n] for n in _KPARAMS)

    vmem = lambda: pl.BlockSpec(memory_space=pltpu.MemorySpace.VMEM)
    in_specs = ([pl.BlockSpec(memory_space=pltpu.MemorySpace.SMEM),  # token ids
                 vmem(),                                             # hidden state
                 pl.BlockSpec(memory_space=pl.ANY)]                  # embedding HBM
                + [vmem() for _ in range(len(args) - 3)])

    flops = 2 * B * (H * H + 6 * T * H + H + (3 * H + E)
                     + (E + 2 * H) * 3 * H + H * 3 * H + 3 * H * VEXT + T * VEXT)
    transcendentals = B * (3 * T + H + 2 * VEXT + 4 * H + 8)
    bytes_accessed = (sum(int(a.size) * a.dtype.itemsize for a in args[:2])
                      + sum(int(a.size) * a.dtype.itemsize for a in args[3:])
                      + 4 * B * E + 4 * B * (VEXT + H))

    final, h_new = pl.pallas_call(
        _decoder_step_kernel,
        out_shape=(jax.ShapeDtypeStruct((B, VEXT), jnp.float32),
                   jax.ShapeDtypeStruct((B, H), jnp.float32)),
        in_specs=in_specs,
        out_specs=(vmem(), vmem()),
        scratch_shapes=[pltpu.VMEM((B, E), jnp.float32),
                        pltpu.SemaphoreType.DMA((B,))],
        input_output_aliases={1: 1},   # GRU hidden state updated in place (P8)
        compiler_params=pltpu.CompilerParams(vmem_limit_bytes=32 * 1024 * 1024),
        cost_estimate=pl.CostEstimate(flops=flops,
                                      transcendentals=transcendentals,
                                      bytes_accessed=bytes_accessed),
    )(*args)
    return final, h_new[None]


def decoder_forward(params, inputs, last_hidden, code_outputs, gat_outputs,
                    tree_outputs, extend_type_batch, extra_zeros):
    """Pallas port of Decoder.forward (single decode step, eval mode).

    inputs (B,) i32 | last_hidden (1,B,H) | code/gat/tree (T,B,H) |
    extend_type_batch (B,T) i32 | extra_zeros (B,OOV)
    returns (final_dist (B, NL+OOV), hidden (1,B,H)).

    NOTE: a real decode loop should call prepare_decoder_params once per model
    and precompute_encoder_state once per sequence; they are re-done here only
    to keep the reference module's call signature.
    """
    NL = params["out_bias"].shape[0]
    kparams = prepare_decoder_params(params, NL + extra_zeros.shape[1])
    enc_all, proj_all = precompute_encoder_state(
        kparams, code_outputs, gat_outputs, tree_outputs)
    return decoder_step(kparams, enc_all, proj_all, inputs, last_hidden,
                        extend_type_batch, extra_zeros)


# -----------------------------------------------------------------------------
# Pure-JAX reference (same math, XLA lowering) for a numerical cross-check.
# -----------------------------------------------------------------------------
def decoder_forward_ref(params, inputs, last_hidden, code_outputs, gat_outputs,
                        tree_outputs, extend_type_batch, extra_zeros):
    NL = params["out_bias"].shape[0]
    kparams = prepare_decoder_params(params, NL + extra_zeros.shape[1])
    enc_all, proj_all = precompute_encoder_state(
        kparams, code_outputs, gat_outputs, tree_outputs)
    B = inputs.shape[0]
    H = last_hidden.shape[-1]
    VEXT = kparams["out_b"].shape[1]
    tok = inputs.astype(jnp.int32)
    hid = last_hidden.reshape(B, H).astype(jnp.float32)
    embedded = jnp.take(kparams["embedding"], tok, axis=0)
    extra_ext = jnp.concatenate(
        [jnp.zeros((B, VEXT - extra_zeros.shape[1]), jnp.float32),
         extra_zeros.astype(jnp.float32)], axis=1)
    final, h_new = _decoder_math(
        {n: kparams[n] for n in _KPARAMS}, embedded, hid, enc_all, proj_all,
        extend_type_batch.astype(jnp.int32), extra_ext)
    return final, h_new[None]


# -----------------------------------------------------------------------------
# Deterministic parameter construction (torch-layout float32 "checkpoint").
# -----------------------------------------------------------------------------
def init_decoder_params(key, vocab_size, nl_vocab_size, hidden_size,
                        embedding_dim):
    H, E, NL = hidden_size, embedding_dim, nl_vocab_size
    ks = jax.random.split(key, 14)
    s = 0.05

    def nrm(k, shape, scale=s):
        return (scale * jax.random.normal(k, shape)).astype(jnp.float32)

    return {
        "embedding": nrm(ks[0], (vocab_size, E)),
        "attn_weight": nrm(ks[1], (H, 2 * H)),     # nn.Linear(2H, H).weight
        "attn_bias": nrm(ks[2], (H,)),
        "attn_v": nrm(ks[3], (H,), scale=1.0 / math.sqrt(H)),
        "pick_weight": nrm(ks[4], (1, H)),
        "pick_bias": nrm(ks[5], (1,)),
        # TODO(synk): reference declares p_gen_linear with in-features 2H+E but
        # feeds it a (2H + H + E)-wide input; sized 3H+E here so forward runs.
        "pgen_weight": nrm(ks[6], (1, 3 * H + E)),
        "pgen_bias": nrm(ks[7], (1,)),
        "gru_wih": nrm(ks[8], (3 * H, E + 2 * H)),
        "gru_whh": nrm(ks[9], (3 * H, H)),
        "gru_bih": nrm(ks[10], (3 * H,)),
        "gru_bhh": nrm(ks[11], (3 * H,)),
        "out_weight": nrm(ks[12], (NL, 3 * H)),
        "out_bias": nrm(ks[13], (NL,)),
    }


if __name__ == "__main__":
    B, T = 2, 8
    H, E = HIDDEN_SIZE, EMBEDDING_DIM
    VOCAB, NL, OOV = 50, NL_VOCAB_SIZE, MAX_OOV_NUM

    key = jax.random.PRNGKey(0)
    kp, k1, k2, k3, k4, k5, k6 = jax.random.split(key, 7)
    params = init_decoder_params(kp, VOCAB, NL, H, E)

    inputs = jax.random.randint(k1, (B,), 0, VOCAB, dtype=jnp.int32)
    last_hidden = 0.5 * jax.random.normal(k2, (1, B, H), dtype=jnp.float32)
    code_outputs = 0.5 * jax.random.normal(k3, (T, B, H), dtype=jnp.float32)
    gat_outputs = 0.5 * jax.random.normal(k4, (T, B, H), dtype=jnp.float32)
    tree_outputs = 0.5 * jax.random.normal(k5, (T, B, H), dtype=jnp.float32)
    extend_type_batch = jax.random.randint(k6, (B, T), 0, NL + OOV,
                                           dtype=jnp.int32)
    extra_zeros = jnp.zeros((B, OOV), dtype=jnp.float32)

    final_dist, hidden = jax.jit(decoder_forward)(
        params, inputs, last_hidden, code_outputs, gat_outputs, tree_outputs,
        extend_type_batch, extra_zeros)
    jax.block_until_ready((final_dist, hidden))

    ref_final, ref_hidden = decoder_forward_ref(
        params, inputs, last_hidden, code_outputs, gat_outputs, tree_outputs,
        extend_type_batch, extra_zeros)

    assert final_dist.shape == (B, NL + OOV)
    assert hidden.shape == (1, B, H)
    assert bool(jnp.all(jnp.isfinite(final_dist)))
    assert bool(jnp.allclose(final_dist, ref_final, atol=3e-3, rtol=3e-3)), \
        float(jnp.max(jnp.abs(final_dist - ref_final)))
    assert bool(jnp.allclose(hidden, ref_hidden, atol=3e-3, rtol=3e-3)), \
        float(jnp.max(jnp.abs(hidden - ref_hidden)))
    print("KERNEL_OK")
</pallas_src>

<mosaic_0001>
module attributes {stable_mosaic.version = 11 : i64} {
  func.func @_decoder_step_kernel(%arg0: memref<2xi32, #tpu.memory_space<smem>>, %arg1: memref<2x128xf32, #tpu.memory_space<vmem>>, %arg2: memref<50x128xf32, #tpu.memory_space<any>>, %arg3: memref<6x8x128xbf16, #tpu.memory_space<vmem>>, %arg4: memref<6x8x128xbf16, #tpu.memory_space<vmem>>, %arg5: memref<2x8xi32, #tpu.memory_space<vmem>>, %arg6: memref<2x128xf32, #tpu.memory_space<vmem>>, %arg7: memref<128x128xbf16, #tpu.memory_space<vmem>>, %arg8: memref<1x128xf32, #tpu.memory_space<vmem>>, %arg9: memref<1x128xf32, #tpu.memory_space<vmem>>, %arg10: memref<128x1xbf16, #tpu.memory_space<vmem>>, %arg11: memref<1x1xf32, #tpu.memory_space<vmem>>, %arg12: memref<512x1xbf16, #tpu.memory_space<vmem>>, %arg13: memref<1x1xf32, #tpu.memory_space<vmem>>, %arg14: memref<384x384xbf16, #tpu.memory_space<vmem>>, %arg15: memref<128x384xbf16, #tpu.memory_space<vmem>>, %arg16: memref<1x384xf32, #tpu.memory_space<vmem>>, %arg17: memref<1x384xf32, #tpu.memory_space<vmem>>, %arg18: memref<384x128xbf16, #tpu.memory_space<vmem>>, %arg19: memref<1x128xf32, #tpu.memory_space<vmem>>, %arg20: memref<2x128xf32, #tpu.memory_space<vmem>>, %arg21: memref<2x128xf32, #tpu.memory_space<vmem>>, %arg22: memref<2x128xf32, #tpu.memory_space<vmem>>, %arg23: memref<2x!tpu.dma_semaphore, #tpu.memory_space<semaphore_mem>>) attributes {dimension_semantics = [], scalar_prefetch = 0 : i64, scratch_operands = 2 : i64, tpu.core_type = #tpu.core_type<tc>} {
    %c0 = arith.constant 0 : index
    %0 = memref.load %arg0[%c0] : memref<2xi32, #tpu.memory_space<smem>>
    %c0_i32 = arith.constant 0 : i32
    %c0_i32_0 = arith.constant 0 : i32
    %1 = tpu.memref_slice %arg2[%0, %c0_i32_0] : memref<50x128xf32, #tpu.memory_space<any>> -> memref<1x128xf32, #tpu.memory_space<any>>
    %c0_i32_1 = arith.constant 0 : i32
    %c0_i32_2 = arith.constant 0 : i32
    %2 = tpu.memref_slice %arg22[%c0_i32_1, %c0_i32_2] : memref<2x128xf32, #tpu.memory_space<vmem>> -> memref<1x128xf32, #tpu.memory_space<vmem>>
    %3 = tpu.memref_slice %arg23[%c0_i32] : memref<2x!tpu.dma_semaphore, #tpu.memory_space<semaphore_mem>> -> memref<1x!tpu.dma_semaphore, #tpu.memory_space<semaphore_mem>>
    %4 = tpu.memref_squeeze %3 : memref<1x!tpu.dma_semaphore, #tpu.memory_space<semaphore_mem>> -> memref<!tpu.dma_semaphore, #tpu.memory_space<semaphore_mem>>
    tpu.enqueue_dma source(%1 : memref<1x128xf32, #tpu.memory_space<any>>) target(%2 : memref<1x128xf32, #tpu.memory_space<vmem>>) target_semaphore(%4 : memref<!tpu.dma_semaphore, #tpu.memory_space<semaphore_mem>>)
    %c1 = arith.constant 1 : index
    %5 = memref.load %arg0[%c1] : memref<2xi32, #tpu.memory_space<smem>>
    %c1_i32 = arith.constant 1 : i32
    %c0_i32_3 = arith.constant 0 : i32
    %6 = tpu.memref_slice %arg2[%5, %c0_i32_3] : memref<50x128xf32, #tpu.memory_space<any>> -> memref<1x128xf32, #tpu.memory_space<any>>
    %c1_i32_4 = arith.constant 1 : i32
    %c0_i32_5 = arith.constant 0 : i32
    %7 = tpu.memref_slice %arg22[%c1_i32_4, %c0_i32_5] : memref<2x128xf32, #tpu.memory_space<vmem>> -> memref<1x128xf32, #tpu.memory_space<vmem>>
    %8 = tpu.memref_slice %arg23[%c1_i32] : memref<2x!tpu.dma_semaphore, #tpu.memory_space<semaphore_mem>> -> memref<1x!tpu.dma_semaphore, #tpu.memory_space<semaphore_mem>>
    %9 = tpu.memref_squeeze %8 : memref<1x!tpu.dma_semaphore, #tpu.memory_space<semaphore_mem>> -> memref<!tpu.dma_semaphore, #tpu.memory_space<semaphore_mem>>
    tpu.enqueue_dma source(%6 : memref<1x128xf32, #tpu.memory_space<any>>) target(%7 : memref<1x128xf32, #tpu.memory_space<vmem>>) target_semaphore(%9 : memref<!tpu.dma_semaphore, #tpu.memory_space<semaphore_mem>>)
    %c0_i32_6 = arith.constant 0 : i32
    %c0_i32_7 = arith.constant 0 : i32
    %10 = tpu.memref_slice %arg2[%0, %c0_i32_7] : memref<50x128xf32, #tpu.memory_space<any>> -> memref<1x128xf32, #tpu.memory_space<any>>
    %c0_i32_8 = arith.constant 0 : i32
    %c0_i32_9 = arith.constant 0 : i32
    %11 = tpu.memref_slice %arg22[%c0_i32_8, %c0_i32_9] : memref<2x128xf32, #tpu.memory_space<vmem>> -> memref<1x128xf32, #tpu.memory_space<vmem>>
    %12 = tpu.memref_slice %arg23[%c0_i32_6] : memref<2x!tpu.dma_semaphore, #tpu.memory_space<semaphore_mem>> -> memref<1x!tpu.dma_semaphore, #tpu.memory_space<semaphore_mem>>
    %13 = tpu.memref_squeeze %12 : memref<1x!tpu.dma_semaphore, #tpu.memory_space<semaphore_mem>> -> memref<!tpu.dma_semaphore, #tpu.memory_space<semaphore_mem>>
    tpu.wait_dma2 semaphore(%13 : memref<!tpu.dma_semaphore, #tpu.memory_space<semaphore_mem>>) src(%10 : memref<1x128xf32, #tpu.memory_space<any>>) dst(%11 : memref<1x128xf32, #tpu.memory_space<vmem>>)
    %c1_i32_10 = arith.constant 1 : i32
    %c0_i32_11 = arith.constant 0 : i32
    %14 = tpu.memref_slice %arg2[%5, %c0_i32_11] : memref<50x128xf32, #tpu.memory_space<any>> -> memref<1x128xf32, #tpu.memory_space<any>>
    %c1_i32_12 = arith.constant 1 : i32
    %c0_i32_13 = arith.constant 0 : i32
    %15 = tpu.memref_slice %arg22[%c1_i32_12, %c0_i32_13] : memref<2x128xf32, #tpu.memory_space<vmem>> -> memref<1x128xf32, #tpu.memory_space<vmem>>
    %16 = tpu.memref_slice %arg23[%c1_i32_10] : memref<2x!tpu.dma_semaphore, #tpu.memory_space<semaphore_mem>> -> memref<1x!tpu.dma_semaphore, #tpu.memory_space<semaphore_mem>>
    %17 = tpu.memref_squeeze %16 : memref<1x!tpu.dma_semaphore, #tpu.memory_space<semaphore_mem>> -> memref<!tpu.dma_semaphore, #tpu.memory_space<semaphore_mem>>
    tpu.wait_dma2 semaphore(%17 : memref<!tpu.dma_semaphore, #tpu.memory_space<semaphore_mem>>) src(%14 : memref<1x128xf32, #tpu.memory_space<any>>) dst(%15 : memref<1x128xf32, #tpu.memory_space<vmem>>)
    %c0_14 = arith.constant 0 : index
    %c0_15 = arith.constant 0 : index
    %18 = vector.load %arg7[%c0_14, %c0_15] : memref<128x128xbf16, #tpu.memory_space<vmem>>, vector<128x128xbf16>
    %c0_16 = arith.constant 0 : index
    %c0_17 = arith.constant 0 : index
    %19 = vector.load %arg8[%c0_16, %c0_17] : memref<1x128xf32, #tpu.memory_space<vmem>>, vector<1x128xf32>
    %c0_18 = arith.constant 0 : index
    %c0_19 = arith.constant 0 : index
    %20 = vector.load %arg9[%c0_18, %c0_19] : memref<1x128xf32, #tpu.memory_space<vmem>>, vector<1x128xf32>
    %c0_20 = arith.constant 0 : index
    %c0_21 = arith.constant 0 : index
    %21 = vector.load %arg10[%c0_20, %c0_21] : memref<128x1xbf16, #tpu.memory_space<vmem>>, vector<128x1xbf16>
    %c0_22 = arith.constant 0 : index
    %c0_23 = arith.constant 0 : index
    %22 = vector.load %arg11[%c0_22, %c0_23] : memref<1x1xf32, #tpu.memory_space<vmem>>, vector<1x1xf32>
    %c0_24 = arith.constant 0 : index
    %c0_25 = arith.constant 0 : index
    %23 = vector.load %arg12[%c0_24, %c0_25] : memref<512x1xbf16, #tpu.memory_space<vmem>>, vector<512x1xbf16>
    %c0_26 = arith.constant 0 : index
    %c0_27 = arith.constant 0 : index
    %24 = vector.load %arg13[%c0_26, %c0_27] : memref<1x1xf32, #tpu.memory_space<vmem>>, vector<1x1xf32>
    %c0_28 = arith.constant 0 : index
    %c0_29 = arith.constant 0 : index
    %25 = vector.load %arg14[%c0_28, %c0_29] : memref<384x384xbf16, #tpu.memory_space<vmem>>, vector<384x384xbf16>
    %c0_30 = arith.constant 0 : index
    %c0_31 = arith.constant 0 : index
    %26 = vector.load %arg15[%c0_30, %c0_31] : memref<128x384xbf16, #tpu.memory_space<vmem>>, vector<128x384xbf16>
    %c0_32 = arith.constant 0 : index
    %c0_33 = arith.constant 0 : index
    %27 = vector.load %arg16[%c0_32, %c0_33] : memref<1x384xf32, #tpu.memory_space<vmem>>, vector<1x384xf32>
    %c0_34 = arith.constant 0 : index
    %c0_35 = arith.constant 0 : index
    %28 = vector.load %arg17[%c0_34, %c0_35] : memref<1x384xf32, #tpu.memory_space<vmem>>, vector<1x384xf32>
    %c0_36 = arith.constant 0 : index
    %c0_37 = arith.constant 0 : index
    %29 = vector.load %arg18[%c0_36, %c0_37] : memref<384x128xbf16, #tpu.memory_space<vmem>>, vector<384x128xbf16>
    %c0_38 = arith.constant 0 : index
    %c0_39 = arith.constant 0 : index
    %30 = vector.load %arg19[%c0_38, %c0_39] : memref<1x128xf32, #tpu.memory_space<vmem>>, vector<1x128xf32>
    %c0_40 = arith.constant 0 : index
    %c0_41 = arith.constant 0 : index
    %31 = vector.load %arg22[%c0_40, %c0_41] : memref<2x128xf32, #tpu.memory_space<vmem>>, vector<2x128xf32>
    %c0_42 = arith.constant 0 : index
    %c0_43 = arith.constant 0 : index
    %32 = vector.load %arg1[%c0_42, %c0_43] : memref<2x128xf32, #tpu.memory_space<vmem>>, vector<2x128xf32>
    %c0_44 = arith.constant 0 : index
    %c0_45 = arith.constant 0 : index
    %c0_46 = arith.constant 0 : index
    %33 = vector.load %arg3[%c0_44, %c0_45, %c0_46] : memref<6x8x128xbf16, #tpu.memory_space<vmem>>, vector<6x8x128xbf16>
    %c0_47 = arith.constant 0 : index
    %c0_48 = arith.constant 0 : index
    %c0_49 = arith.constant 0 : index
    %34 = vector.load %arg4[%c0_47, %c0_48, %c0_49] : memref<6x8x128xbf16, #tpu.memory_space<vmem>>, vector<6x8x128xbf16>
    %c0_50 = arith.constant 0 : index
    %c0_51 = arith.constant 0 : index
    %35 = vector.load %arg5[%c0_50, %c0_51] : memref<2x8xi32, #tpu.memory_space<vmem>>, vector<2x8xi32>
    %c0_52 = arith.constant 0 : index
    %c0_53 = arith.constant 0 : index
    %36 = vector.load %arg6[%c0_52, %c0_53] : memref<2x128xf32, #tpu.memory_space<vmem>>, vector<2x128xf32>
    %37 = arith.truncf %32 : vector<2x128xf32> to vector<2x128xbf16>
    %cst = arith.constant dense<0.000000e+00> : vector<2x128xf32>
    %38 = tpu.matmul %37, %18, %cst {dimension_numbers = #tpu.dot_dimension_numbers<[1], [0], [0], [1], [0, 0, 1, 1], [], []>} : vector<2x128xbf16>, vector<128x128xbf16>, vector<2x128xf32> -> vector<2x128xf32>
    %39 = vector.broadcast %19 : vector<1x128xf32> to vector<2x128xf32>
    %40 = arith.addf %38, %39 : vector<2x128xf32>
    %41 = tpu.concatenate %40, %40, %40 in 0 : vector<2x128xf32>, vector<2x128xf32>, vector<2x128xf32> -> vector<6x128xf32>
    %42 = arith.extf %34 : vector<6x8x128xbf16> to vector<6x8x128xf32>
    %43 = vector.shape_cast %41 : vector<6x128xf32> to vector<6x1x128xf32>
    %44 = vector.broadcast %43 : vector<6x1x128xf32> to vector<6x8x128xf32>
    %45 = arith.addf %42, %44 : vector<6x8x128xf32>
    %cst_54 = arith.constant 0.000000e+00 : f32
    %46 = vector.broadcast %cst_54 : f32 to vector<6x8x128xf32>
    %47 = arith.maximumf %45, %46 : vector<6x8x128xf32>
    %48 = vector.shape_cast %20 : vector<1x128xf32> to vector<1x1x128xf32>
    %49 = vector.broadcast %48 : vector<1x1x128xf32> to vector<6x8x128xf32>
    %50 = arith.mulf %47, %49 : vector<6x8x128xf32>
    %cst_55 = arith.constant dense<0.000000e+00> : vector<6x8xf32>
    %51 = vector.multi_reduction <add>, %50, %cst_55 [2] : vector<6x8x128xf32> to vector<6x8xf32>
    %cst_56 = arith.constant dense<0xFF800000> : vector<6xf32>
    %52 = vector.multi_reduction <maximumf>, %51, %cst_56 [1] : vector<6x8xf32> to vector<6xf32>
    %53 = vector.shape_cast %52 : vector<6xf32> to vector<6x1xf32>
    %54 = vector.broadcast %53 : vector<6x1xf32> to vector<6x8xf32>
    %55 = arith.subf %51, %54 : vector<6x8xf32>
    %56 = math.exp %55 : vector<6x8xf32>
    %cst_57 = arith.constant dense<0.000000e+00> : vector<6xf32>
    %57 = vector.multi_reduction <add>, %56, %cst_57 [1] : vector<6x8xf32> to vector<6xf32>
    %58 = vector.shape_cast %57 : vector<6xf32> to vector<6x1xf32>
    %59 = vector.broadcast %58 : vector<6x1xf32> to vector<6x8xf32>
    %60 = arith.divf %56, %59 : vector<6x8xf32>
    %61 = vector.shape_cast %60 : vector<6x8xf32> to vector<6x1x8xf32>
    %62 = arith.truncf %61 : vector<6x1x8xf32> to vector<6x1x8xbf16>
    "tpu.trace_start"() <{level = 10 : i32, message = "bqt,bth->bqh"}> : () -> ()
    %cst_58 = arith.constant dense<0.000000e+00> : vector<6x1x128xf32>
    %63 = tpu.matmul %62, %33, %cst_58 {dimension_numbers = #tpu.dot_dimension_numbers<[2], [1], [1], [2], [0, 0, 0, 1, 1, 2], [0], [0]>} : vector<6x1x8xbf16>, vector<6x8x128xbf16>, vector<6x1x128xf32> -> vector<6x1x128xf32>
    "tpu.trace_stop"() : () -> ()
    %64 = vector.shape_cast %63 : vector<6x1x128xf32> to vector<6x128xf32>
    %65 = vector.extract_strided_slice %60 {offsets = [0, 0], sizes = [2, 8], strides = [1, 1]} : vector<6x8xf32> to vector<2x8xf32>
    %66 = vector.extract_strided_slice %64 {offsets = [0, 0], sizes = [2, 128], strides = [1, 1]} : vector<6x128xf32> to vector<2x128xf32>
    %67 = vector.extract_strided_slice %64 {offsets = [2, 0], sizes = [2, 128], strides = [1, 1]} : vector<6x128xf32> to vector<2x128xf32>
    %68 = vector.extract_strided_slice %64 {offsets = [4, 0], sizes = [2, 128], strides = [1, 1]} : vector<6x128xf32> to vector<2x128xf32>
    %cst_59 = arith.constant dense<0xFF800000> : vector<2xf32>
    %69 = vector.multi_reduction <maximumf>, %32, %cst_59 [1] : vector<2x128xf32> to vector<2xf32>
    %70 = vector.shape_cast %69 : vector<2xf32> to vector<2x1xf32>
    %71 = vector.broadcast %70 : vector<2x1xf32> to vector<2x128xf32>
    %72 = arith.subf %32, %71 : vector<2x128xf32>
    %73 = math.exp %72 : vector<2x128xf32>
    %cst_60 = arith.constant dense<0.000000e+00> : vector<2xf32>
    %74 = vector.multi_reduction <add>, %73, %cst_60 [1] : vector<2x128xf32> to vector<2xf32>
    %75 = vector.shape_cast %74 : vector<2xf32> to vector<2x1xf32>
    %76 = vector.broadcast %75 : vector<2x1xf32> to vector<2x128xf32>
    %77 = arith.divf %73, %76 : vector<2x128xf32>
    %78 = arith.truncf %77 : vector<2x128xf32> to vector<2x128xbf16>
    %cst_61 = arith.constant dense<0.000000e+00> : vector<2x1xf32>
    %79 = tpu.matmul %78, %21, %cst_61 {dimension_numbers = #tpu.dot_dimension_numbers<[1], [0], [0], [1], [0, 0, 1, 1], [], []>} : vector<2x128xbf16>, vector<128x1xbf16>, vector<2x1xf32> -> vector<2x1xf32>
    %80 = vector.broadcast %22 : vector<1x1xf32> to vector<2x1xf32>
    %81 = arith.addf %79, %80 : vector<2x1xf32>
    %cst_62 = arith.constant 0.000000e+00 : f32
    %82 = vector.broadcast %cst_62 : f32 to vector<2x1xf32>
    %83 = arith.subf %82, %81 : vector<2x1xf32>
    %84 = math.exp %83 : vector<2x1xf32>
    %cst_63 = arith.constant 1.000000e+00 : f32
    %85 = vector.broadcast %cst_63 : f32 to vector<2x1xf32>
    %86 = arith.addf %85, %84 : vector<2x1xf32>
    %cst_64 = arith.constant 1.000000e+00 : f32
    %87 = vector.broadcast %cst_64 : f32 to vector<2x1xf32>
    %88 = arith.divf %87, %86 : vector<2x1xf32>
    %89 = vector.broadcast %88 : vector<2x1xf32> to vector<2x128xf32>
    %90 = arith.mulf %89, %68 : vector<2x128xf32>
    %91 = arith.addf %66, %90 : vector<2x128xf32>
    %92 = tpu.concatenate %67, %91 in 1 : vector<2x128xf32>, vector<2x128xf32> -> vector<2x256xf32>
    %93 = tpu.concatenate %92, %32, %31 in 1 : vector<2x256xf32>, vector<2x128xf32>, vector<2x128xf32> -> vector<2x512xf32>
    %94 = arith.truncf %93 : vector<2x512xf32> to vector<2x512xbf16>
    %cst_65 = arith.constant dense<0.000000e+00> : vector<2x1xf32>
    %95 = tpu.matmul %94, %23, %cst_65 {dimension_numbers = #tpu.dot_dimension_numbers<[1], [0], [0], [1], [0, 0, 1, 1], [], []>} : vector<2x512xbf16>, vector<512x1xbf16>, vector<2x1xf32> -> vector<2x1xf32>
    %96 = vector.broadcast %24 : vector<1x1xf32> to vector<2x1xf32>
    %97 = arith.addf %95, %96 : vector<2x1xf32>
    %cst_66 = arith.constant 0.000000e+00 : f32
    %98 = vector.broadcast %cst_66 : f32 to vector<2x1xf32>
    %99 = arith.subf %98, %97 : vector<2x1xf32>
    %100 = math.exp %99 : vector<2x1xf32>
    %cst_67 = arith.constant 1.000000e+00 : f32
    %101 = vector.broadcast %cst_67 : f32 to vector<2x1xf32>
    %102 = arith.addf %101, %100 : vector<2x1xf32>
    %cst_68 = arith.constant 1.000000e+00 : f32
    %103 = vector.broadcast %cst_68 : f32 to vector<2x1xf32>
    %104 = arith.divf %103, %102 : vector<2x1xf32>
    %105 = tpu.concatenate %31, %92 in 1 : vector<2x128xf32>, vector<2x256xf32> -> vector<2x384xf32>
    %106 = arith.truncf %105 : vector<2x384xf32> to vector<2x384xbf16>
    %cst_69 = arith.constant dense<0.000000e+00> : vector<2x384xf32>
    %107 = tpu.matmul %106, %25, %cst_69 {dimension_numbers = #tpu.dot_dimension_numbers<[1], [0], [0], [1], [0, 0, 1, 1], [], []>} : vector<2x384xbf16>, vector<384x384xbf16>, vector<2x384xf32> -> vector<2x384xf32>
    %108 = vector.broadcast %27 : vector<1x384xf32> to vector<2x384xf32>
    %109 = arith.addf %107, %108 : vector<2x384xf32>
    %110 = arith.truncf %32 : vector<2x128xf32> to vector<2x128xbf16>
    %cst_70 = arith.constant dense<0.000000e+00> : vector<2x384xf32>
    %111 = tpu.matmul %110, %26, %cst_70 {dimension_numbers = #tpu.dot_dimension_numbers<[1], [0], [0], [1], [0, 0, 1, 1], [], []>} : vector<2x128xbf16>, vector<128x384xbf16>, vector<2x384xf32> -> vector<2x384xf32>
    %112 = vector.broadcast %28 : vector<1x384xf32> to vector<2x384xf32>
    %113 = arith.addf %111, %112 : vector<2x384xf32>
    %114 = vector.extract_strided_slice %109 {offsets = [0, 0], sizes = [2, 128], strides = [1, 1]} : vector<2x384xf32> to vector<2x128xf32>
    %115 = vector.extract_strided_slice %113 {offsets = [0, 0], sizes = [2, 128], strides = [1, 1]} : vector<2x384xf32> to vector<2x128xf32>
    %116 = arith.addf %114, %115 : vector<2x128xf32>
    %cst_71 = arith.constant 0.000000e+00 : f32
    %117 = vector.broadcast %cst_71 : f32 to vector<2x128xf32>
    %118 = arith.subf %117, %116 : vector<2x128xf32>
    %119 = math.exp %118 : vector<2x128xf32>
    %cst_72 = arith.constant 1.000000e+00 : f32
    %120 = vector.broadcast %cst_72 : f32 to vector<2x128xf32>
    %121 = arith.addf %120, %119 : vector<2x128xf32>
    %cst_73 = arith.constant 1.000000e+00 : f32
    %122 = vector.broadcast %cst_73 : f32 to vector<2x128xf32>
    %123 = arith.divf %122, %121 : vector<2x128xf32>
    %124 = vector.extract_strided_slice %109 {offsets = [0, 128], sizes = [2, 128], strides = [1, 1]} : vector<2x384xf32> to vector<2x128xf32>
    %125 = vector.extract_strided_slice %113 {offsets = [0, 128], sizes = [2, 128], strides = [1, 1]} : vector<2x384xf32> to vector<2x128xf32>
    %126 = arith.addf %124, %125 : vector<2x128xf32>
    %cst_74 = arith.constant 0.000000e+00 : f32
    %127 = vector.broadcast %cst_74 : f32 to vector<2x128xf32>
    %128 = arith.subf %127, %126 : vector<2x128xf32>
    %129 = math.exp %128 : vector<2x128xf32>
    %cst_75 = arith.constant 1.000000e+00 : f32
    %130 = vector.broadcast %cst_75 : f32 to vector<2x128xf32>
    %131 = arith.addf %130, %129 : vector<2x128xf32>
    %cst_76 = arith.constant 1.000000e+00 : f32
    %132 = vector.broadcast %cst_76 : f32 to vector<2x128xf32>
    %133 = arith.divf %132, %131 : vector<2x128xf32>
    %134 = vector.extract_strided_slice %109 {offsets = [0, 256], sizes = [2, 128], strides = [1, 1]} : vector<2x384xf32> to vector<2x128xf32>
    %135 = vector.extract_strided_slice %113 {offsets = [0, 256], sizes = [2, 128], strides = [1, 1]} : vector<2x384xf32> to vector<2x128xf32>
    %136 = arith.mulf %123, %135 : vector<2x128xf32>
    %137 = arith.addf %134, %136 : vector<2x128xf32>
    %138 = math.tanh %137 : vector<2x128xf32>
    %cst_77 = arith.constant 1.000000e+00 : f32
    %139 = vector.broadcast %cst_77 : f32 to vector<2x128xf32>
    %140 = arith.subf %139, %133 : vector<2x128xf32>
    %141 = arith.mulf %140, %138 : vector<2x128xf32>
    %142 = arith.mulf %133, %32 : vector<2x128xf32>
    %143 = arith.addf %141, %142 : vector<2x128xf32>
    %144 = tpu.concatenate %143, %92 in 1 : vector<2x128xf32>, vector<2x256xf32> -> vector<2x384xf32>
    %145 = arith.truncf %144 : vector<2x384xf32> to vector<2x384xbf16>
    %cst_78 = arith.constant dense<0.000000e+00> : vector<2x128xf32>
    %146 = tpu.matmul %145, %29, %cst_78 {dimension_numbers = #tpu.dot_dimension_numbers<[1], [0], [0], [1], [0, 0, 1, 1], [], []>} : vector<2x384xbf16>, vector<384x128xbf16>, vector<2x128xf32> -> vector<2x128xf32>
    %147 = vector.broadcast %30 : vector<1x128xf32> to vector<2x128xf32>
    %148 = arith.addf %146, %147 : vector<2x128xf32>
    %cst_79 = arith.constant dense<0xFF800000> : vector<2xf32>
    %149 = vector.multi_reduction <maximumf>, %148, %cst_79 [1] : vector<2x128xf32> to vector<2xf32>
    %150 = vector.shape_cast %149 : vector<2xf32> to vector<2x1xf32>
    %151 = vector.broadcast %150 : vector<2x1xf32> to vector<2x128xf32>
    %152 = arith.subf %148, %151 : vector<2x128xf32>
    %153 = math.exp %152 : vector<2x128xf32>
    %cst_80 = arith.constant dense<0.000000e+00> : vector<2xf32>
    %154 = vector.multi_reduction <add>, %153, %cst_80 [1] : vector<2x128xf32> to vector<2xf32>
    %155 = vector.shape_cast %154 : vector<2xf32> to vector<2x1xf32>
    %156 = vector.broadcast %155 : vector<2x1xf32> to vector<2x128xf32>
    %157 = arith.divf %153, %156 : vector<2x128xf32>
    %cst_81 = arith.constant 1.000000e+00 : f32
    %158 = vector.broadcast %cst_81 : f32 to vector<2x1xf32>
    %159 = arith.subf %158, %104 : vector<2x1xf32>
    %160 = vector.broadcast %159 : vector<2x1xf32> to vector<2x8xf32>
    %161 = arith.mulf %160, %65 : vector<2x8xf32>
    %162 = vector.broadcast %104 : vector<2x1xf32> to vector<2x128xf32>
    %163 = arith.mulf %162, %157 : vector<2x128xf32>
    %164 = arith.addf %163, %36 : vector<2x128xf32>
    %165 = tpu.iota {dimensions = array<i32: 2>} : vector<2x8x128xi32>
    %166 = vector.shape_cast %35 : vector<2x8xi32> to vector<2x8x1xi32>
    %167 = vector.broadcast %166 : vector<2x8x1xi32> to vector<2x8x128xi32>
    %168 = arith.cmpi eq, %165, %167 : vector<2x8x128xi32>
    %169 = arith.extui %168 : vector<2x8x128xi1> to vector<2x8x128xi32>
    %170 = arith.sitofp %169 : vector<2x8x128xi32> to vector<2x8x128xf32>
    %171 = vector.shape_cast %161 : vector<2x8xf32> to vector<2x1x8xf32>
    "tpu.trace_start"() <{level = 10 : i32, message = "bqt,btv->bqv"}> : () -> ()
    %cst_82 = arith.constant dense<0.000000e+00> : vector<2x1x128xf32>
    %172 = tpu.matmul %171, %170, %cst_82 {dimension_numbers = #tpu.dot_dimension_numbers<[2], [1], [1], [2], [0, 0, 0, 1, 1, 2], [0], [0]>} : vector<2x1x8xf32>, vector<2x8x128xf32>, vector<2x1x128xf32> -> vector<2x1x128xf32>
    "tpu.trace_stop"() : () -> ()
    %173 = vector.shape_cast %172 : vector<2x1x128xf32> to vector<2x128xf32>
    %174 = arith.addf %164, %173 : vector<2x128xf32>
    %cst_83 = arith.constant 9.99999996E-13 : f32
    %175 = vector.broadcast %cst_83 : f32 to vector<2x128xf32>
    %176 = arith.addf %174, %175 : vector<2x128xf32>
    %177 = math.log %176 : vector<2x128xf32>
    %c0_84 = arith.constant 0 : index
    %c0_85 = arith.constant 0 : index
    %178 = vector.load %arg20[%c0_84, %c0_85] : memref<2x128xf32, #tpu.memory_space<vmem>>, vector<2x128xf32>
    tpu.vector_store %arg20[%c0_84, %c0_85], %177 {strides = array<i32>} : memref<2x128xf32, #tpu.memory_space<vmem>>, vector<2x128xf32>,
    %c0_86 = arith.constant 0 : index
    %c0_87 = arith.constant 0 : index
    %179 = vector.load %arg21[%c0_86, %c0_87] : memref<2x128xf32, #tpu.memory_space<vmem>>, vector<2x128xf32>
    tpu.vector_store %arg21[%c0_86, %c0_87], %143 {strides = array<i32>} : memref<2x128xf32, #tpu.memory_space<vmem>>, vector<2x128xf32>,
    return
  }
}

</mosaic_0001>

<llo_original>
// kernel: decoder_forward.1
$region0: #{decoder_forward.1}
  #allocation0 [shape = 'u32[]', space=smem, size = 0x4, offset = 0x4, fixed_abs, tag = 'smem constant byte address 0x4 - core index']
  #allocation1 [shape = 'u32[144,128]{1,0:T(1,128)}', space=vmem, size = 0x12000, scoped, tag = 'internal scratch']
  #allocation2 [shape = 'f32[2,128]{1,0:T(2,128)}', space=vmem, size = 0x400, scoped, tag = 'scratch operand']
  #allocation3 [shape = 's32[2]{0}', space=sflag, size = 0x8, scoped, tag = 'scratch operand']
  #allocation4 [shape = 'f32[1,1]{1,0:T(1,128)S(1)}', space=vmem, size = 0x200, scoped, tag = 'scoped memory for decoder_forward.1']
  #allocation5 [shape = 'f32[1,1]{1,0:T(1,128)S(1)}', space=vmem, size = 0x200, scoped, tag = 'scoped memory for decoder_forward.1']
  #allocation10 [shape = 's32[]', space=sflag, size = 0x4, offset = 0, fixed_abs, tag = 'sflag constant byte address 0x0 - dummy sync flag']
  #allocation11 [shape = 's32[]', space=sflag, size = 0x4, offset = 0, fixed_abs, tag = 'sflag constant byte address 0x0 - dummy sync flag']
  %s0 = inlined_call_operand.vmem [shape: s32[2], index: 0, kind: input, shape index: {}]
  %s1 = inlined_call_operand.vmem [shape: f32[2,128], index: 1, kind: input, shape index: {}, may-alias: {1,21}]
  %s2 = inlined_call_operand.vmem [shape: f32[50,128], index: 2, kind: input, shape index: {}]
  %s3 = inlined_call_operand.vmem [shape: bf16[6,8,128], index: 3, kind: input, shape index: {}]
  %s4 = inlined_call_operand.vmem [shape: bf16[6,8,128], index: 4, kind: input, shape index: {}]
  %s5 = inlined_call_operand.vmem [shape: s32[2,8], index: 5, kind: input, shape index: {}]
  %s6 = inlined_call_operand.vmem [shape: f32[2,128], index: 6, kind: input, shape index: {}]
  %s7 = inlined_call_operand.vmem [shape: bf16[128,128], index: 7, kind: input, shape index: {}]
  %s8 = inlined_call_operand.vmem [shape: f32[1,128], index: 8, kind: input, shape index: {}]
  %s9 = inlined_call_operand.vmem [shape: f32[1,128], index: 9, kind: input, shape index: {}]
  %s10 = inlined_call_operand.vmem [shape: bf16[128,1], index: 10, kind: input, shape index: {}]
  %s11 = inlined_call_operand.<no memory space> [shape: f32[1,1], index: 11, kind: input, shape index: {}]
  %s12 = inlined_call_operand.vmem [shape: bf16[512,1], index: 12, kind: input, shape index: {}]
  %s13 = inlined_call_operand.<no memory space> [shape: f32[1,1], index: 13, kind: input, shape index: {}]
  %s14 = inlined_call_operand.vmem [shape: bf16[384,384], index: 14, kind: input, shape index: {}]
  %s15 = inlined_call_operand.vmem [shape: bf16[128,384], index: 15, kind: input, shape index: {}]
  %s16 = inlined_call_operand.vmem [shape: f32[1,384], index: 16, kind: input, shape index: {}]
  %s17 = inlined_call_operand.vmem [shape: f32[1,384], index: 17, kind: input, shape index: {}]
  %s18 = inlined_call_operand.vmem [shape: bf16[384,128], index: 18, kind: input, shape index: {}]
  %s19 = inlined_call_operand.vmem [shape: f32[1,128], index: 19, kind: input, shape index: {}]
  %s20 = inlined_call_operand.hbm [shape: f32[2,128], index: 20, kind: output, shape index: {0}]
  %s21 = inlined_call_operand.vmem [shape: f32[2,128], index: 21, kind: output, shape index: {1}, may-alias: {1,21}]
  %22 = xla_tuple %s20, %s21
  %s23 = sld [smem:[#allocation0]]
  $region158: #{decoder_forward.1} parent=0
    _
  %s25 = ssub.s32 1, %s23
  %s26 = scalar_select 0, %s25, %s23
  %v27 = vstv %s11
  %28 = vst [vmem:[#allocation4] sm:$0x1] %v27
  %v29 = vstv %s13
  %30 = vst [vmem:[#allocation5] sm:$0x1] %v29
  $region1: #{decoder_forward.1} parent=0
    #allocation6 [shape = 'u8[512]{0}', space=smem, size = 0x200, scoped, tag = 'input window, operand 0, single buffered']
    #allocation7 [shape = 's32[1]{0}', space=sflag, size = 0x4, scoped, tag = 'scoped memory for decoder_forward.1']
    #allocation8 [shape = 's32[1]{0}', space=sflag, size = 0x4, scoped, tag = 'scoped memory for decoder_forward.1']
    #allocation9 [shape = 'u8[1024]{0}', space=vmem, size = 0x400, scoped, tag = 'output window, operand 0, single buffered']
    %31 = vsyncpa [#allocation8], 0
    %32 = vsyncpa [#allocation7], 0
    // Predicated region
    $region2: #{decoder_forward.1} parent=1 // pred_check
      _
    $region3: #{decoder_forward.1} parent=1 // pred_check_branch
      %34 = sbr.rel (0) target = $region5
    $region4: #{decoder_forward.1} parent=1 // pred_region
      %s36 = ssub.s32 16, 16
      %37 = vsyncadd [#allocation8], %s36
      %s39 = sshll.u32 %s0, 4
      %s40 = int_to_ptr.vmem [resolvable:$true] %s39
      %42 = dma.vmem_to_smem %s40, 16, [#allocation6], [#allocation8]
    $region5: #{decoder_forward.1} parent=1 // pred_fallthru
      _
    // Predicated region
    $region6: #{decoder_forward.1} parent=1 // pred_check
      _
    $region7: #{decoder_forward.1} parent=1 // pred_check_branch
      %44 = sbr.rel (0) target = $region9
    $region8: #{decoder_forward.1} parent=1 // pred_region
      _
    $region9: #{decoder_forward.1} parent=1 // pred_fallthru
      _
    // Predicated region
    $region10: #{decoder_forward.1} parent=1 // pred_check
      _
    $region11: #{decoder_forward.1} parent=1 // pred_check_branch
      %46 = sbr.rel (0) target = $region13
    $region12: #{decoder_forward.1} parent=1 // pred_region
      _
    $region13: #{decoder_forward.1} parent=1 // pred_fallthru
      _
    // Predicated region
    $region14: #{decoder_forward.1} parent=1 // pred_check
      _
    $region15: #{decoder_forward.1} parent=1 // pred_check_branch
      %48 = sbr.rel (0) target = $region17
    $region16: #{decoder_forward.1} parent=1 // pred_region
      _
    $region17: #{decoder_forward.1} parent=1 // pred_fallthru
      _
    // Predicated region
    $region18: #{decoder_forward.1} parent=1 // pred_check
      _
    $region19: #{decoder_forward.1} parent=1 // pred_check_branch
      %50 = sbr.rel (0) target = $region21
    $region20: #{decoder_forward.1} parent=1 // pred_region
      _
    $region21: #{decoder_forward.1} parent=1 // pred_fallthru
      _
    // Predicated region
    $region22: #{decoder_forward.1} parent=1 // pred_check
      _
    $region23: #{decoder_forward.1} parent=1 // pred_check_branch
      %52 = sbr.rel (0) target = $region25
    $region24: #{decoder_forward.1} parent=1 // pred_region
      _
    $region25: #{decoder_forward.1} parent=1 // pred_fallthru
      _
    // Predicated region
    $region26: #{decoder_forward.1} parent=1 // pred_check
      _
    $region27: #{decoder_forward.1} parent=1 // pred_check_branch
      %54 = sbr.rel (0) target = $region29
    $region28: #{decoder_forward.1} parent=1 // pred_region
      _
    $region29: #{decoder_forward.1} parent=1 // pred_fallthru
      _
    // Predicated region
    $region30: #{decoder_forward.1} parent=1 // pred_check
      _
    $region31: #{decoder_forward.1} parent=1 // pred_check_branch
      %56 = sbr.rel (0) target = $region33
    $region32: #{decoder_forward.1} parent=1 // pred_region
      _
    $region33: #{decoder_forward.1} parent=1 // pred_fallthru
      _
    // Predicated region
    $region34: #{decoder_forward.1} parent=1 // pred_check
      _
    $region35: #{decoder_forward.1} parent=1 // pred_check_branch
      %58 = sbr.rel (0) target = $region37
    $region36: #{decoder_forward.1} parent=1 // pred_region
      _
    $region37: #{decoder_forward.1} parent=1 // pred_fallthru
      _
    // Predicated region
    $region38: #{decoder_forward.1} parent=1 // pred_check
      _
    $region39: #{decoder_forward.1} parent=1 // pred_check_branch
      %60 = sbr.rel (0) target = $region41
    $region40: #{decoder_forward.1} parent=1 // pred_region
      _
    $region41: #{decoder_forward.1} parent=1 // pred_fallthru
      _
    // Predicated region
    $region42: #{decoder_forward.1} parent=1 // pred_check
      _
    $region43: #{decoder_forward.1} parent=1 // pred_check_branch
      %62 = sbr.rel (0) target = $region45
    $region44: #{decoder_forward.1} parent=1 // pred_region
      _
    $region45: #{decoder_forward.1} parent=1 // pred_fallthru
      _
    // Predicated region
    $region46: #{decoder_forward.1} parent=1 // pred_check
      _
    $region47: #{decoder_forward.1} parent=1 // pred_check_branch
      %64 = sbr.rel (0) target = $region49
    $region48: #{decoder_forward.1} parent=1 // pred_region
      _
    $region49: #{decoder_forward.1} parent=1 // pred_fallthru
      _
    // Predicated region
    $region50: #{decoder_forward.1} parent=1 // pred_check
      _
    $region51: #{decoder_forward.1} parent=1 // pred_check_branch
      %66 = sbr.rel (0) target = $region53
    $region52: #{decoder_forward.1} parent=1 // pred_region
      _
    $region53: #{decoder_forward.1} parent=1 // pred_fallthru
      _
    // Predicated region
    $region54: #{decoder_forward.1} parent=1 // pred_check
      _
    $region55: #{decoder_forward.1} parent=1 // pred_check_branch
      %68 = sbr.rel (0) target = $region57
    $region56: #{decoder_forward.1} parent=1 // pred_region
      _
    $region57: #{decoder_forward.1} parent=1 // pred_fallthru
      _
    // Predicated region
    $region58: #{decoder_forward.1} parent=1 // pred_check
      _
    $region59: #{decoder_forward.1} parent=1 // pred_check_branch
      %70 = sbr.rel (0) target = $region61
    $region60: #{decoder_forward.1} parent=1 // pred_region
      _
    $region61: #{decoder_forward.1} parent=1 // pred_fallthru
      _
    // Predicated region
    $region62: #{decoder_forward.1} parent=1 // pred_check
      _
    $region63: #{decoder_forward.1} parent=1 // pred_check_branch
      %72 = sbr.rel (0) target = $region65
    $region64: #{decoder_forward.1} parent=1 // pred_region
      _
    $region65: #{decoder_forward.1} parent=1 // pred_fallthru
      _
    // Predicated region
    $region66: #{decoder_forward.1} parent=1 // pred_check
      _
    $region67: #{decoder_forward.1} parent=1 // pred_check_branch
      %74 = sbr.rel (0) target = $region69
    $region68: #{decoder_forward.1} parent=1 // pred_region
      _
    $region69: #{decoder_forward.1} parent=1 // pred_fallthru
      _
    // Predicated region
    $region70: #{decoder_forward.1} parent=1 // pred_check
      _
    $region71: #{decoder_forward.1} parent=1 // pred_check_branch
      %76 = sbr.rel (0) target = $region73
    $region72: #{decoder_forward.1} parent=1 // pred_region
      _
    $region73: #{decoder_forward.1} parent=1 // pred_fallthru
      _
    // Predicated region
    $region74: #{decoder_forward.1} parent=1 // pred_check
      _
    $region75: #{decoder_forward.1} parent=1 // pred_check_branch
      %78 = sbr.rel (0) target = $region77
    $region76: #{decoder_forward.1} parent=1 // pred_region
      _
    $region77: #{decoder_forward.1} parent=1 // pred_fallthru
      _
    // Predicated region
    $region78: #{decoder_forward.1} parent=1 // pred_check
      _
    $region79: #{decoder_forward.1} parent=1 // pred_check_branch
      %80 = sbr.rel (0) target = $region81
    $region80: #{decoder_forward.1} parent=1 // pred_region
      %81 = dma.done [#allocation8], 16
    $region81: #{decoder_forward.1} parent=1 // pred_fallthru
      _
    %82 = sfence
    %s84 = sld [smem:[#allocation6]]
    %s85 = scalar_lea.vmem %s2, %s84
    %p87 = scmp.lt.u32.totalorder 1, 8
    %p88 = pneg %p87
    // Predicated region
    $region82: #{decoder_forward.1} parent=1 // pred_check
      _
    $region83: #{decoder_forward.1} parent=1 // pred_check_branch
      %90 = sbr.rel (%p87) target = $region85
    $region84: #{decoder_forward.1} parent=1 // pred_region
      %s105 = sand.u32 1, 7
      %p106 = scmp.eq.s32.totalorder %s105, 0
      %p107 = pneg %p106
      // Predicated region
      $region97: #{decoder_forward.1} parent=84 // pred_check
        _
      $region98: #{decoder_forward.1} parent=84 // pred_check_branch
        %109 = sbr.rel (%p106) target = $region100
      $region99: #{decoder_forward.1} parent=84 // pred_region
        %s110 = sand.u32 1, 7
        %s111 = ssub.s32 1, %s110
        %s112 = scalar_lea.vmem %s85, %s111
        %s113 = ssub.s32 1, %s110
        %s114 = scalar_lea.vmem [#allocation2], %s113
        %s115 = sshllo.u32 0, %s110
        loop: start=0, step=1, limit=1
        $region101: #{decoder_forward.1} parent=99 // loop_pre_header
          _
        $region102: #{decoder_forward.1} parent=99 // loop_header
          %s117 = sphi 0, %s121
          %p118 = scmp.ge.s32.totalorder %s117, 1
          %s122 = sphi %s112, %s112
          %s123 = sphi %s114, %s114
        $region103: #{decoder_forward.1} parent=99 // loop_header_branch
          %120 = sbr.rel (%p118) target = $region107
        $region104: #{decoder_forward.1} parent=99 // loop_body
          %v124 = vld [vmem:[%s122] sm:%s115]
          %125 = vst [vmem:[%s123] sm:%s115] %v124
        $region105: #{decoder_forward.1} parent=99 // loop_footer
          %s121 = sadd.s32 1, %s117
        $region106: #{decoder_forward.1} parent=99 // loop_footer_branch
          %116 = sbr.rel target = $region102
        $region107: #{decoder_forward.1} parent=99 // loop_exit
          _
      $region100: #{decoder_forward.1} parent=84 // pred_fallthru
        _
    $region85: #{decoder_forward.1} parent=1 // pred_fallthru
      _
    // Predicated region
    $region86: #{decoder_forward.1} parent=1 // pred_check
      %p91 = pneg %p87
    $region87: #{decoder_forward.1} parent=1 // pred_check_branch
      %93 = sbr.rel (%p91) target = $region89
    $region88: #{decoder_forward.1} parent=1 // pred_region
      %s94 = sshllo.u32 0, 1
      loop: start=0, step=1, limit=1
      $region90: #{decoder_forward.1} parent=88 // loop_pre_header
        _
      $region91: #{decoder_forward.1} parent=88 // loop_header
        %s96 = sphi 0, %s100
        %p97 = scmp.ge.s32.totalorder %s96, 1
        %s101 = sphi %s85, %s85
        %s102 = sphi [#allocation2], [#allocation2]
      $region92: #{decoder_forward.1} parent=88 // loop_header_branch
        %99 = sbr.rel (%p97) target = $region96
      $region93: #{decoder_forward.1} parent=88 // loop_body
        %v103 = vld [vmem:[%s101] sm:%s94]
        %104 = vst [vmem:[%s102] sm:%s94] %v103
      $region94: #{decoder_forward.1} parent=88 // loop_footer
        %s100 = sadd.s32 1, %s96
      $region95: #{decoder_forward.1} parent=88 // loop_footer_branch
        %95 = sbr.rel target = $region91
      $region96: #{decoder_forward.1} parent=88 // loop_exit
        _
    $region89: #{decoder_forward.1} parent=1 // pred_fallthru
      _
    // Predicated region
    $region108: #{decoder_forward.1} parent=1 // pred_check
      _
    $region109: #{decoder_forward.1} parent=1 // pred_check_branch
      %128 = sbr.rel (0) target = $region111
    $region110: #{decoder_forward.1} parent=1 // pred_region
      %129 = vsyncadd [#allocation3], 16
    $region111: #{decoder_forward.1} parent=1 // pred_fallthru
      _
    %s130 = sld [smem:[#allocation6 + $0x1]]
    %s131 = scalar_lea.vmem %s2, %s130
    %s132 = scalar_lea.vmem [#allocation2], 1
    %s133 = scalar_lea.sflag [#allocation3], 1
    %p135 = scmp.lt.u32.totalorder 1, 8
    %p136 = pneg %p135
    // Predicated region
    $region112: #{decoder_forward.1} parent=1 // pred_check
      _
    $region113: #{decoder_forward.1} parent=1 // pred_check_branch
      %138 = sbr.rel (%p135) target = $region115
    $region114: #{decoder_forward.1} parent=1 // pred_region
      %s153 = sand.u32 1, 7
      %p154 = scmp.eq.s32.totalorder %s153, 0
      %p155 = pneg %p154
      // Predicated region
      $region127: #{decoder_forward.1} parent=114 // pred_check
        _
      $region128: #{decoder_forward.1} parent=114 // pred_check_branch
        %157 = sbr.rel (%p154) target = $region130
      $region129: #{decoder_forward.1} parent=114 // pred_region
        %s158 = sand.u32 1, 7
        %s159 = ssub.s32 1, %s158
        %s160 = scalar_lea.vmem %s131, %s159
        %s161 = ssub.s32 1, %s158
        %s162 = scalar_lea.vmem %s132, %s161 [#allocation2]
        %s163 = sshllo.u32 0, %s158
        loop: start=0, step=1, limit=1
        $region131: #{decoder_forward.1} parent=129 // loop_pre_header
          _
        $region132: #{decoder_forward.1} parent=129 // loop_header
          %s165 = sphi 0, %s169
          %p166 = scmp.ge.s32.totalorder %s165, 1
          %s170 = sphi %s160, %s160
          %s171 = sphi %s162, %s162
        $region133: #{decoder_forward.1} parent=129 // loop_header_branch
          %168 = sbr.rel (%p166) target = $region137
        $region134: #{decoder_forward.1} parent=129 // loop_body
          %v172 = vld [vmem:[%s170] sm:%s163]
          %173 = vst [vmem:[%s171] sm:%s163] %v172
        $region135: #{decoder_forward.1} parent=129 // loop_footer
          %s169 = sadd.s32 1, %s165
        $region136: #{decoder_forward.1} parent=129 // loop_footer_branch
          %164 = sbr.rel target = $region132
        $region137: #{decoder_forward.1} parent=129 // loop_exit
          _
      $region130: #{decoder_forward.1} parent=114 // pred_fallthru
        _
    $region115: #{decoder_forward.1} parent=1 // pred_fallthru
      _
    // Predicated region
    $region116: #{decoder_forward.1} parent=1 // pred_check
      %p139 = pneg %p135
    $region117: #{decoder_forward.1} parent=1 // pred_check_branch
      %141 = sbr.rel (%p139) target = $region119
    $region118: #{decoder_forward.1} parent=1 // pred_region
      %s142 = sshllo.u32 0, 1
      loop: start=0, step=1, limit=1
      $region120: #{decoder_forward.1} parent=118 // loop_pre_header
        _
      $region121: #{decoder_forward.1} parent=118 // loop_header
        %s144 = sphi 0, %s148
        %p145 = scmp.ge.s32.totalorder %s144, 1
        %s149 = sphi %s131, %s131
        %s150 = sphi %s132, %s132
      $region122: #{decoder_forward.1} parent=118 // loop_header_branch
        %147 = sbr.rel (%p145) target = $region126
      $region123: #{decoder_forward.1} parent=118 // loop_body
        %v151 = vld [vmem:[%s149] sm:%s142]
        %152 = vst [vmem:[%s150] sm:%s142] %v151
      $region124: #{decoder_forward.1} parent=118 // loop_footer
        %s148 = sadd.s32 1, %s144
      $region125: #{decoder_forward.1} parent=118 // loop_footer_branch
        %143 = sbr.rel target = $region121
      $region126: #{decoder_forward.1} parent=118 // loop_exit
        _
    $region119: #{decoder_forward.1} parent=1 // pred_fallthru
      _
    // Predicated region
    $region138: #{decoder_forward.1} parent=1 // pred_check
      _
    $region139: #{decoder_forward.1} parent=1 // pred_check_branch
      %176 = sbr.rel (0) target = $region141
    $region140: #{decoder_forward.1} parent=1 // pred_region
      %177 = vsyncadd %s133, 16
    $region141: #{decoder_forward.1} parent=1 // pred_fallthru
      _
    %s178 = smul.u32 1, 1
    %s179 = sshll.u32 %s178, 4
    %180 = dma.done [#allocation3], %s179
    %s181 = sshll.u32 %s178, 4
    %182 = dma.done %s133, %s181
    %v183 = vld [vmem:[%s7] sm:$0xf]
    %v184 = vld [vmem:[%s7 + $0x4] sm:$0xf]
    %v185 = vld [vmem:[%s7 + $0x8] sm:$0xf]
    %v186 = vld [vmem:[%s7 + $0xc] sm:$0xf]
    %v187 = vld [vmem:[%s7 + $0x10] sm:$0xf]
    %v188 = vld [vmem:[%s7 + $0x14] sm:$0xf]
    %v189 = vld [vmem:[%s7 + $0x18] sm:$0xf]
    %v190 = vld [vmem:[%s7 + $0x1c] sm:$0xf]
    %v191 = vld [vmem:[%s7 + $0x20] sm:$0xf]
    %v192 = vld [vmem:[%s7 + $0x24] sm:$0xf]
    %v193 = vld [vmem:[%s7 + $0x28] sm:$0xf]
    %v194 = vld [vmem:[%s7 + $0x2c] sm:$0xf]
    %v195 = vld [vmem:[%s7 + $0x30] sm:$0xf]
    %v196 = vld [vmem:[%s7 + $0x34] sm:$0xf]
    %v197 = vld [vmem:[%s7 + $0x38] sm:$0xf]
    %v198 = vld [vmem:[%s7 + $0x3c] sm:$0xf]
    %v199 = vld [vmem:[%s8] sm:$0x1]
    %v200 = vld [vmem:[%s9] sm:$0x1]
    %v201 = vld [vmem:[%s10] sm:$0xf]
    %v202 = vld [vmem:[%s10 + $0x4] sm:$0xf]
    %v203 = vld [vmem:[%s10 + $0x8] sm:$0xf]
    %v204 = vld [vmem:[%s10 + $0xc] sm:$0xf]
    %v205 = vld [vmem:[%s10 + $0x10] sm:$0xf]
    %v206 = vld [vmem:[%s10 + $0x14] sm:$0xf]
    %v207 = vld [vmem:[%s10 + $0x18] sm:$0xf]
    %v208 = vld [vmem:[%s10 + $0x1c] sm:$0xf]
    %v209 = vld [vmem:[%s10 + $0x20] sm:$0xf]
    %v210 = vld [vmem:[%s10 + $0x24] sm:$0xf]
    %v211 = vld [vmem:[%s10 + $0x28] sm:$0xf]
    %v212 = vld [vmem:[%s10 + $0x2c] sm:$0xf]
    %v213 = vld [vmem:[%s10 + $0x30] sm:$0xf]
    %v214 = vld [vmem:[%s10 + $0x34] sm:$0xf]
    %v215 = vld [vmem:[%s10 + $0x38] sm:$0xf]
    %v216 = vld [vmem:[%s10 + $0x3c] sm:$0xf]
    %v217 = vld [vmem:[#allocation4] sm:$0x1]
    %v218 = vld [vmem:[%s12] sm:$0xf]
    %v219 = vld [vmem:[%s12 + $0x4] sm:$0xf]
    %v220 = vld [vmem:[%s12 + $0x8] sm:$0xf]
    %v221 = vld [vmem:[%s12 + $0xc] sm:$0xf]
    %v222 = vld [vmem:[%s12 + $0x10] sm:$0xf]
    %v223 = vld [vmem:[%s12 + $0x14] sm:$0xf]
    %v224 = vld [vmem:[%s12 + $0x18] sm:$0xf]
    %v225 = vld [vmem:[%s12 + $0x1c] sm:$0xf]
    %v226 = vld [vmem:[%s12 + $0x20] sm:$0xf]
    %v227 = vld [vmem:[%s12 + $0x24] sm:$0xf]
    %v228 = vld [vmem:[%s12 + $0x28] sm:$0xf]
    %v229 = vld [vmem:[%s12 + $0x2c] sm:$0xf]
    %v230 = vld [vmem:[%s12 + $0x30] sm:$0xf]
    %v231 = vld [vmem:[%s12 + $0x34] sm:$0xf]
    %v232 = vld [vmem:[%s12 + $0x38] sm:$0xf]
    %v233 = vld [vmem:[%s12 + $0x3c] sm:$0xf]
    %v234 = vld [vmem:[%s12 + $0x40] sm:$0xf]
    %v235 = vld [vmem:[%s12 + $0x44] sm:$0xf]
    %v236 = vld [vmem:[%s12 + $0x48] sm:$0xf]
    %v237 = vld [vmem:[%s12 + $0x4c] sm:$0xf]
    %v238 = vld [vmem:[%s12 + $0x50] sm:$0xf]
    %v239 = vld [vmem:[%s12 + $0x54] sm:$0xf]
    %v240 = vld [vmem:[%s12 + $0x58] sm:$0xf]
    %v241 = vld [vmem:[%s12 + $0x5c] sm:$0xf]
    %v242 = vld [vmem:[%s12 + $0x60] sm:$0xf]
    %v243 = vld [vmem:[%s12 + $0x64] sm:$0xf]
    %v244 = vld [vmem:[%s12 + $0x68] sm:$0xf]
    %v245 = vld [vmem:[%s12 + $0x6c] sm:$0xf]
    %v246 = vld [vmem:[%s12 + $0x70] sm:$0xf]
    %v247 = vld [vmem:[%s12 + $0x74] sm:$0xf]
    %v248 = vld [vmem:[%s12 + $0x78] sm:$0xf]
    %v249 = vld [vmem:[%s12 + $0x7c] sm:$0xf]
    %v250 = vld [vmem:[%s12 + $0x80] sm:$0xf]
    %v251 = vld [vmem:[%s12 + $0x84] sm:$0xf]
    %v252 = vld [vmem:[%s12 + $0x88] sm:$0xf]
    %v253 = vld [vmem:[%s12 + $0x8c] sm:$0xf]
    %v254 = vld [vmem:[%s12 + $0x90] sm:$0xf]
    %v255 = vld [vmem:[%s12 + $0x94] sm:$0xf]
    %v256 = vld [vmem:[%s12 + $0x98] sm:$0xf]
    %v257 = vld [vmem:[%s12 + $0x9c] sm:$0xf]
    %v258 = vld [vmem:[%s12 + $0xa0] sm:$0xf]
    %v259 = vld [vmem:[%s12 + $0xa4] sm:$0xf]
    %v260 = vld [vmem:[%s12 + $0xa8] sm:$0xf]
    %v261 = vld [vmem:[%s12 + $0xac] sm:$0xf]
    %v262 = vld [vmem:[%s12 + $0xb0] sm:$0xf]
    %v263 = vld [vmem:[%s12 + $0xb4] sm:$0xf]
    %v264 = vld [vmem:[%s12 + $0xb8] sm:$0xf]
    %v265 = vld [vmem:[%s12 + $0xbc] sm:$0xf]
    %v266 = vld [vmem:[%s12 + $0xc0] sm:$0xf]
    %v267 = vld [vmem:[%s12 + $0xc4] sm:$0xf]
    %v268 = vld [vmem:[%s12 + $0xc8] sm:$0xf]
    %v269 = vld [vmem:[%s12 + $0xcc] sm:$0xf]
    %v270 = vld [vmem:[%s12 + $0xd0] sm:$0xf]
    %v271 = vld [vmem:[%s12 + $0xd4] sm:$0xf]
    %v272 = vld [vmem:[%s12 + $0xd8] sm:$0xf]
    %v273 = vld [vmem:[%s12 + $0xdc] sm:$0xf]
    %v274 = vld [vmem:[%s12 + $0xe0] sm:$0xf]
    %v275 = vld [vmem:[%s12 + $0xe4] sm:$0xf]
    %v276 = vld [vmem:[%s12 + $0xe8] sm:$0xf]
    %v277 = vld [vmem:[%s12 + $0xec] sm:$0xf]
    %v278 = vld [vmem:[%s12 + $0xf0] sm:$0xf]
    %v279 = vld [vmem:[%s12 + $0xf4] sm:$0xf]
    %v280 = vld [vmem:[%s12 + $0xf8] sm:$0xf]
    %v281 = vld [vmem:[%s12 + $0xfc] sm:$0xf]
    %v282 = vld [vmem:[#allocation5] sm:$0x1]
    %v283 = vld [vmem:[%s14] sm:$0xff]
    %v284 = vld [vmem:[%s14 + $0x8] sm:$0xf]
    %v285 = vld [vmem:[%s14 + $0xc] sm:$0xff]
    %v286 = vld [vmem:[%s14 + $0x14] sm:$0xf]
    %v287 = vld [vmem:[%s14 + $0x18] sm:$0xff]
    %v288 = vld [vmem:[%s14 + $0x20] sm:$0xf]
    %v289 = vld [vmem:[%s14 + $0x24] sm:$0xff]
    %v290 = vld [vmem:[%s14 + $0x2c] sm:$0xf]
    %v291 = vld [vmem:[%s14 + $0x30] sm:$0xff]
    %v292 = vld [vmem:[%s14 + $0x38] sm:$0xf]
    %v293 = vld [vmem:[%s14 + $0x3c] sm:$0xff]
    %v294 = vld [vmem:[%s14 + $0x44] sm:$0xf]
    %v295 = vld [vmem:[%s14 + $0x48] sm:$0xff]
    %v296 = vld [vmem:[%s14 + $0x50] sm:$0xf]
    %v297 = vld [vmem:[%s14 + $0x54] sm:$0xff]
    %v298 = vld [vmem:[%s14 + $0x5c] sm:$0xf]
    %v299 = vld [vmem:[%s14 + $0x60] sm:$0xff]
    %v300 = vld [vmem:[%s14 + $0x68] sm:$0xf]
    %v301 = vld [vmem:[%s14 + $0x6c] sm:$0xff]
    %v302 = vld [vmem:[%s14 + $0x74] sm:$0xf]
    %v303 = vld [vmem:[%s14 + $0x78] sm:$0xff]
    %v304 = vld [vmem:[%s14 + $0x80] sm:$0xf]
    %v305 = vld [vmem:[%s14 + $0x84] sm:$0xff]
    %v306 = vld [vmem:[%s14 + $0x8c] sm:$0xf]
    %v307 = vld [vmem:[%s14 + $0x90] sm:$0xff]
    %v308 = vld [vmem:[%s14 + $0x98] sm:$0xf]
    %v309 = vld [vmem:[%s14 + $0x9c] sm:$0xff]
    %v310 = vld [vmem:[%s14 + $0xa4] sm:$0xf]
    %v311 = vld [vmem:[%s14 + $0xa8] sm:$0xff]
    %v312 = vld [vmem:[%s14 + $0xb0] sm:$0xf]
    %v313 = vld [vmem:[%s14 + $0xb4] sm:$0xff]
    %v314 = vld [vmem:[%s14 + $0xbc] sm:$0xf]
    %v315 = vld [vmem:[%s14 + $0xc0] sm:$0xff]
    %v316 = vld [vmem:[%s14 + $0xc8] sm:$0xf]
    %v317 = vld [vmem:[%s14 + $0xcc] sm:$0xff]
    %v318 = vld [vmem:[%s14 + $0xd4] sm:$0xf]
    %v319 = vld [vmem:[%s14 + $0xd8] sm:$0xff]
    %v320 = vld [vmem:[%s14 + $0xe0] sm:$0xf]
    %v321 = vld [vmem:[%s14 + $0xe4] sm:$0xff]
    %v322 = vld [vmem:[%s14 + $0xec] sm:$0xf]
    %v323 = vld [vmem:[%s14 + $0xf0] sm:$0xff]
    %v324 = vld [vmem:[%s14 + $0xf8] sm:$0xf]
    %v325 = vld [vmem:[%s14 + $0xfc] sm:$0xff]
    %v326 = vld [vmem:[%s14 + $0x104] sm:$0xf]
    %v327 = vld [vmem:[%s14 + $0x108] sm:$0xff]
    %v328 = vld [vmem:[%s14 + $0x110] sm:$0xf]
    %v329 = vld [vmem:[%s14 + $0x114] sm:$0xff]
    %v330 = vld [vmem:[%s14 + $0x11c] sm:$0xf]
    %v331 = vld [vmem:[%s14 + $0x120] sm:$0xff]
    %v332 = vld [vmem:[%s14 + $0x128] sm:$0xf]
    %v333 = vld [vmem:[%s14 + $0x12c] sm:$0xff]
    %v334 = vld [vmem:[%s14 + $0x134] sm:$0xf]
    %v335 = vld [vmem:[%s14 + $0x138] sm:$0xff]
    %v336 = vld [vmem:[%s14 + $0x140] sm:$0xf]
    %v337 = vld [vmem:[%s14 + $0x144] sm:$0xff]
    %v338 = vld [vmem:[%s14 + $0x14c] sm:$0xf]
    %v339 = vld [vmem:[%s14 + $0x150] sm:$0xff]
    %v340 = vld [vmem:[%s14 + $0x158] sm:$0xf]
    %v341 = vld [vmem:[%s14 + $0x15c] sm:$0xff]
    %v342 = vld [vmem:[%s14 + $0x164] sm:$0xf]
    %v343 = vld [vmem:[%s14 + $0x168] sm:$0xff]
    %v344 = vld [vmem:[%s14 + $0x170] sm:$0xf]
    %v345 = vld [vmem:[%s14 + $0x174] sm:$0xff]
    %v346 = vld [vmem:[%s14 + $0x17c] sm:$0xf]
    %v347 = vld [vmem:[%s14 + $0x180] sm:$0xff]
    %v348 = vld [vmem:[%s14 + $0x188] sm:$0xf]
    %v349 = vld [vmem:[%s14 + $0x18c] sm:$0xff]
    %v350 = vld [vmem:[%s14 + $0x194] sm:$0xf]
    %v351 = vld [vmem:[%s14 + $0x198] sm:$0xff]
    %v352 = vld [vmem:[%s14 + $0x1a0] sm:$0xf]
    %v353 = vld [vmem:[%s14 + $0x1a4] sm:$0xff]
    %v354 = vld [vmem:[%s14 + $0x1ac] sm:$0xf]
    %v355 = vld [vmem:[%s14 + $0x1b0] sm:$0xff]
    %v356 = vld [vmem:[%s14 + $0x1b8] sm:$0xf]
    %v357 = vld [vmem:[%s14 + $0x1bc] sm:$0xff]
    %v358 = vld [vmem:[%s14 + $0x1c4] sm:$0xf]
    %v359 = vld [vmem:[%s14 + $0x1c8] sm:$0xff]
    %v360 = vld [vmem:[%s14 + $0x1d0] sm:$0xf]
    %v361 = vld [vmem:[%s14 + $0x1d4] sm:$0xff]
    %v362 = vld [vmem:[%s14 + $0x1dc] sm:$0xf]
    %v363 = vld [vmem:[%s14 + $0x1e0] sm:$0xff]
    %v364 = vld [vmem:[%s14 + $0x1e8] sm:$0xf]
    %v365 = vld [vmem:[%s14 + $0x1ec] sm:$0xff]
    %v366 = vld [vmem:[%s14 + $0x1f4] sm:$0xf]
    %v367 = vld [vmem:[%s14 + $0x1f8] sm:$0xff]
    %v368 = vld [vmem:[%s14 + $0x200] sm:$0xf]
    %v369 = vld [vmem:[%s14 + $0x204] sm:$0xff]
    %v370 = vld [vmem:[%s14 + $0x20c] sm:$0xf]
    %v371 = vld [vmem:[%s14 + $0x210] sm:$0xff]
    %v372 = vld [vmem:[%s14 + $0x218] sm:$0xf]
    %v373 = vld [vmem:[%s14 + $0x21c] sm:$0xff]
    %v374 = vld [vmem:[%s14 + $0x224] sm:$0xf]
    %v375 = vld [vmem:[%s14 + $0x228] sm:$0xff]
    %v376 = vld [vmem:[%s14 + $0x230] sm:$0xf]
    %v377 = vld [vmem:[%s14 + $0x234] sm:$0xff]
    %v378 = vld [vmem:[%s14 + $0x23c] sm:$0xf]
    %v379 = vld [vmem:[%s15] sm:$0xff]
    %v380 = vld [vmem:[%s15 + $0x8] sm:$0xf]
    %v381 = vld [vmem:[%s15 + $0xc] sm:$0xff]
    %v382 = vld [vmem:[%s15 + $0x14] sm:$0xf]
    %v383 = vld [vmem:[%s15 + $0x18] sm:$0xff]
    %v384 = vld [vmem:[%s15 + $0x20] sm:$0xf]
    %v385 = vld [vmem:[%s15 + $0x24] sm:$0xff]
    %v386 = vld [vmem:[%s15 + $0x2c] sm:$0xf]
    %v387 = vld [vmem:[%s15 + $0x30] sm:$0xff]
    %v388 = vld [vmem:[%s15 + $0x38] sm:$0xf]
    %v389 = vld [vmem:[%s15 + $0x3c] sm:$0xff]
    %v390 = vld [vmem:[%s15 + $0x44] sm:$0xf]
    %v391 = vld [vmem:[%s15 + $0x48] sm:$0xff]
    %v392 = vld [vmem:[%s15 + $0x50] sm:$0xf]
    %v393 = vld [vmem:[%s15 + $0x54] sm:$0xff]
    %v394 = vld [vmem:[%s15 + $0x5c] sm:$0xf]
    %v395 = vld [vmem:[%s15 + $0x60] sm:$0xff]
    %v396 = vld [vmem:[%s15 + $0x68] sm:$0xf]
    %v397 = vld [vmem:[%s15 + $0x6c] sm:$0xff]
    %v398 = vld [vmem:[%s15 + $0x74] sm:$0xf]
    %v399 = vld [vmem:[%s15 + $0x78] sm:$0xff]
    %v400 = vld [vmem:[%s15 + $0x80] sm:$0xf]
    %v401 = vld [vmem:[%s15 + $0x84] sm:$0xff]
    %v402 = vld [vmem:[%s15 + $0x8c] sm:$0xf]
    %v403 = vld [vmem:[%s15 + $0x90] sm:$0xff]
    %v404 = vld [vmem:[%s15 + $0x98] sm:$0xf]
    %v405 = vld [vmem:[%s15 + $0x9c] sm:$0xff]
    %v406 = vld [vmem:[%s15 + $0xa4] sm:$0xf]
    %v407 = vld [vmem:[%s15 + $0xa8] sm:$0xff]
    %v408 = vld [vmem:[%s15 + $0xb0] sm:$0xf]
    %v409 = vld [vmem:[%s15 + $0xb4] sm:$0xff]
    %v410 = vld [vmem:[%s15 + $0xbc] sm:$0xf]
    %v411 = vld [vmem:[%s16] sm:$0x7]
    %v412 = vld [vmem:[%s17] sm:$0x7]
    %v413 = vld [vmem:[%s18] sm:$0xf]
    %v414 = vld [vmem:[%s18 + $0x4] sm:$0xf]
    %v415 = vld [vmem:[%s18 + $0x8] sm:$0xf]
    %v416 = vld [vmem:[%s18 + $0xc] sm:$0xf]
    %v417 = vld [vmem:[%s18 + $0x10] sm:$0xf]
    %v418 = vld [vmem:[%s18 + $0x14] sm:$0xf]
    %v419 = vld [vmem:[%s18 + $0x18] sm:$0xf]
    %v420 = vld [vmem:[%s18 + $0x1c] sm:$0xf]
    %v421 = vld [vmem:[%s18 + $0x20] sm:$0xf]
    %v422 = vld [vmem:[%s18 + $0x24] sm:$0xf]
    %v423 = vld [vmem:[%s18 + $0x28] sm:$0xf]
    %v424 = vld [vmem:[%s18 + $0x2c] sm:$0xf]
    %v425 = vld [vmem:[%s18 + $0x30] sm:$0xf]
    %v426 = vld [vmem:[%s18 + $0x34] sm:$0xf]
    %v427 = vld [vmem:[%s18 + $0x38] sm:$0xf]
    %v428 = vld [vmem:[%s18 + $0x3c] sm:$0xf]
    %v429 = vld [vmem:[%s18 + $0x40] sm:$0xf]
    %v430 = vld [vmem:[%s18 + $0x44] sm:$0xf]
    %v431 = vld [vmem:[%s18 + $0x48] sm:$0xf]
    %v432 = vld [vmem:[%s18 + $0x4c] sm:$0xf]
    %v433 = vld [vmem:[%s18 + $0x50] sm:$0xf]
    %v434 = vld [vmem:[%s18 + $0x54] sm:$0xf]
    %v435 = vld [vmem:[%s18 + $0x58] sm:$0xf]
    %v436 = vld [vmem:[%s18 + $0x5c] sm:$0xf]
    %v437 = vld [vmem:[%s18 + $0x60] sm:$0xf]
    %v438 = vld [vmem:[%s18 + $0x64] sm:$0xf]
    %v439 = vld [vmem:[%s18 + $0x68] sm:$0xf]
    %v440 = vld [vmem:[%s18 + $0x6c] sm:$0xf]
    %v441 = vld [vmem:[%s18 + $0x70] sm:$0xf]
    %v442 = vld [vmem:[%s18 + $0x74] sm:$0xf]
    %v443 = vld [vmem:[%s18 + $0x78] sm:$0xf]
    %v444 = vld [vmem:[%s18 + $0x7c] sm:$0xf]
    %v445 = vld [vmem:[%s18 + $0x80] sm:$0xf]
    %v446 = vld [vmem:[%s18 + $0x84] sm:$0xf]
    %v447 = vld [vmem:[%s18 + $0x88] sm:$0xf]
    %v448 = vld [vmem:[%s18 + $0x8c] sm:$0xf]
    %v449 = vld [vmem:[%s18 + $0x90] sm:$0xf]
    %v450 = vld [vmem:[%s18 + $0x94] sm:$0xf]
    %v451 = vld [vmem:[%s18 + $0x98] sm:$0xf]
    %v452 = vld [vmem:[%s18 + $0x9c] sm:$0xf]
    %v453 = vld [vmem:[%s18 + $0xa0] sm:$0xf]
    %v454 = vld [vmem:[%s18 + $0xa4] sm:$0xf]
    %v455 = vld [vmem:[%s18 + $0xa8] sm:$0xf]
    %v456 = vld [vmem:[%s18 + $0xac] sm:$0xf]
    %v457 = vld [vmem:[%s18 + $0xb0] sm:$0xf]
    %v458 = vld [vmem:[%s18 + $0xb4] sm:$0xf]
    %v459 = vld [vmem:[%s18 + $0xb8] sm:$0xf]
    %v460 = vld [vmem:[%s18 + $0xbc] sm:$0xf]
    %v461 = vld [vmem:[%s19] sm:$0x1]
    %v462 = vld [vmem:[#allocation2] sm:$0x3]
    %v463 = vld [vmem:[%s1] sm:$0x3]
    %v464 = vld [vmem:[%s3] sm:$0xf]
    %v465 = vld [vmem:[%s3 + $0x4] sm:$0xf]
    %v466 = vld [vmem:[%s3 + $0x8] sm:$0xf]
    %v467 = vld [vmem:[%s3 + $0xc] sm:$0xf]
    %v468 = vld [vmem:[%s3 + $0x10] sm:$0xf]
    %v469 = vld [vmem:[%s3 + $0x14] sm:$0xf]
    %v470 = vld [vmem:[%s4] sm:$0xf]
    %v471 = vld [vmem:[%s4 + $0x4] sm:$0xf]
    %v472 = vld [vmem:[%s4 + $0x8] sm:$0xf]
    %v473 = vld [vmem:[%s4 + $0xc] sm:$0xf]
    %v474 = vld [vmem:[%s4 + $0x10] sm:$0xf]
    %v475 = vld [vmem:[%s4 + $0x14] sm:$0xf]
    %v476 = vld [vmem:[%s5] sm:$0x3]
    %v477 = vld [vmem:[%s6] sm:$0x3]
    %v478 = vpack.c.bf16 %v463, %v463
    %v480 = vlaneseq
    %v481 = vshrl.u32 %v480, 7
    %v482 = vsub.s32 0, %v481
    %v483 = vrot.slane %v199, %v482
    %v501 = vunpack.c.l.b16 %v183
    %v502 = vunpack.c.l.b16 %v184
    %v503 = vunpack.c.l.b16 %v185
    %v504 = vunpack.c.l.b16 %v186
    %v505 = vunpack.c.l.b16 %v187
    %v506 = vunpack.c.l.b16 %v188
    %v507 = vunpack.c.l.b16 %v189
    %v508 = vunpack.c.l.b16 %v190
    %v509 = vunpack.c.l.b16 %v191
    %v510 = vunpack.c.l.b16 %v192
    %v511 = vunpack.c.l.b16 %v193
    %v512 = vunpack.c.l.b16 %v194
    %v513 = vunpack.c.l.b16 %v195
    %v514 = vunpack.c.l.b16 %v196
    %v515 = vunpack.c.l.b16 %v197
    %v516 = vunpack.c.l.b16 %v198
    %v517 = vpack.c.b16 %v502, %v501
    %v518 = vpack.c.b16 %v504, %v503
    %v519 = vpack.c.b16 %v506, %v505
    %v520 = vpack.c.b16 %v508, %v507
    %v521 = vpack.c.b16 %v510, %v509
    %v522 = vpack.c.b16 %v512, %v511
    %v523 = vpack.c.b16 %v514, %v513
    %v524 = vpack.c.b16 %v516, %v515
    %533 = vmatprep.subr.bf16.mxu0 0
    %534 = vmatpush1.bf16.msra.mxu0 %v517
    %535 = vmatprep.subr.bf16.mxu0 0
    %536 = vmatpush1.bf16.msra.mxu0 %v518
    %537 = vmatprep.subr.bf16.mxu0 0
    %538 = vmatpush1.bf16.msra.mxu0 %v519
    %539 = vmatprep.subr.bf16.mxu0 0
    %540 = vmatpush1.bf16.msra.mxu0 %v520
    %541 = vmatprep.subr.bf16.mxu0 0
    %542 = vmatpush1.bf16.msra.mxu0 %v521
    %543 = vmatprep.subr.bf16.mxu0 0
    %544 = vmatpush1.bf16.msra.mxu0 %v522
    %545 = vmatprep.subr.bf16.mxu0 0
    %546 = vmatpush1.bf16.msra.mxu0 %v523
    %547 = vmatprep.subr.bf16.mxu0 0
    %548 = vmatpush1.bf16.msra.mxu0 %v524
    %549 = vmatprep.subr.bf16.mxu0 0
    %550 = vmatpush1.bf16.msra.mxu0 0
    %551 = vmatprep.subr.bf16.mxu0 0
    %552 = vmatpush1.bf16.msra.mxu0 0
    %553 = vmatprep.subr.bf16.mxu0 0
    %554 = vmatpush1.bf16.msra.mxu0 0
    %555 = vmatprep.subr.bf16.mxu0 0
    %556 = vmatpush1.bf16.msra.mxu0 0
    %557 = vmatprep.subr.bf16.mxu0 0
    %558 = vmatpush1.bf16.msra.mxu0 0
    %559 = vmatprep.subr.bf16.mxu0 0
    %560 = vmatpush1.bf16.msra.mxu0 0
    %561 = vmatprep.subr.bf16.mxu0 0
    %562 = vmatpush1.bf16.msra.mxu0 0
    %563 = vmatprep.subr.bf16.mxu0 0
    %564 = vmatpush1.bf16.msra.mxu0 0
    %565 = vmatprep.mubr.bf16.mxu0 0
    %566 = vmatmul.mubr.bf16.gmra.mrb[0].mxu0 %v478
    %v567 = vpop.f32.mrb[0].mxu0
    %v568 = vadd.f32 %v483, %v567
    %v569 = vpop.f32.mrb[0].mxu0
    %v570 = vpop.f32.mrb[0].mxu0
    %v571 = vpop.f32.mrb[0].mxu0
    %572 = vdwg.mxu0
    %v574 = vrot.slane %v568, 6
    %v576 = vrot.slane %v568, 4
    %vm578 = vcmask 1041408
    %v579 = vsel %vm578, %v568, %v574
    %vm580 = vcmask 1043456
    %v581 = vsel %vm580, %v579, %v576
    %v582 = vunpack.c.l.bf16 %v470
    %v583 = vunpack.c.l.bf16 %v471
    %v584 = vunpack.c.l.bf16 %v472
    %v585 = vunpack.c.l.bf16 %v473
    %v586 = vunpack.c.l.bf16 %v474
    %v587 = vunpack.c.l.bf16 %v475
    %v589 = vcombine.high %v581, %v581
    %v591 = vunpack.c.l.s4 1966171168
    %v592 = vunpack.c.0.s8 %v591
    %v593 = vlaneseq
    %v594 = vshrl.u32 %v593, 7
    %v595 = vsub.s32 %v592, %v594
    %v596 = vrot.slane %v581, %v595
    %v598 = vunpack.c.l.s4 1966171168
    %v599 = vunpack.c.0.s8 %v598
    %v600 = vlaneseq
    %v601 = vshrl.u32 %v600, 7
    %v602 = vsub.s32 %v599, %v601
    %v603 = vrot.slane %v589, %v602
    %v604 = vcombine.high %v596, %v596
    %v605 = vcombine.high %v603, %v603
    %v607 = vunpack.c.l.s4 1966171168
    %v608 = vunpack.c.0.s8 %v607
    %v609 = vlaneseq
    %v610 = vshrl.u32 %v609, 7
    %v611 = vsub.s32 %v608, %v610
    %v612 = vrot.slane %v596, %v611
    %v614 = vunpack.c.l.s4 1966171168
    %v615 = vunpack.c.0.s8 %v614
    %v616 = vlaneseq
    %v617 = vshrl.u32 %v616, 7
    %v618 = vsub.s32 %v615, %v617
    %v619 = vrot.slane %v603, %v618
    %v621 = vunpack.c.l.s4 1966171168
    %v622 = vunpack.c.0.s8 %v621
    %v623 = vlaneseq
    %v624 = vshrl.u32 %v623, 7
    %v625 = vsub.s32 %v622, %v624
    %v626 = vrot.slane %v604, %v625
    %v628 = vunpack.c.l.s4 1966171168
    %v629 = vunpack.c.0.s8 %v628
    %v630 = vlaneseq
    %v631 = vshrl.u32 %v630, 7
    %v632 = vsub.s32 %v629, %v631
    %v633 = vrot.slane %v605, %v632
    %v634 = vcombine.high %v612, %v612
    %v635 = vcombine.high %v626, %v626
    %v636 = vlaneseq
    %v637 = vshrl.u32 %v636, 7
    %v638 = vsub.s32 0, %v637
    %v639 = vrot.slane %v612, %v638
    %v640 = vlaneseq
    %v641 = vshrl.u32 %v640, 7
    %v642 = vsub.s32 0, %v641
    %v643 = vrot.slane %v626, %v642
    %v644 = vlaneseq
    %v645 = vshrl.u32 %v644, 7
    %v646 = vsub.s32 0, %v645
    %v647 = vrot.slane %v634, %v646
    %v648 = vlaneseq
    %v649 = vshrl.u32 %v648, 7
    %v650 = vsub.s32 0, %v649
    %v651 = vrot.slane %v635, %v650
    %v652 = vlaneseq
    %v653 = vshrl.u32 %v652, 7
    %v654 = vsub.s32 0, %v653
    %v655 = vrot.slane %v619, %v654
    %v656 = vlaneseq
    %v657 = vshrl.u32 %v656, 7
    %v658 = vsub.s32 0, %v657
    %v659 = vrot.slane %v633, %v658
    %v666 = vadd.f32 %v582, %v639
    %v667 = vadd.f32 %v583, %v643
    %v668 = vadd.f32 %v584, %v647
    %v669 = vadd.f32 %v585, %v651
    %v670 = vadd.f32 %v586, %v655
    %v671 = vadd.f32 %v587, %v659
    %v672 = vmax.f32 %v666, 0.0
    %v673 = vmax.f32 %v667, 0.0
    %v674 = vmax.f32 %v668, 0.0
    %v675 = vmax.f32 %v669, 0.0
    %v676 = vmax.f32 %v670, 0.0
    %v677 = vmax.f32 %v671, 0.0
    %v679 = vlaneseq
    %v680 = vshrl.u32 %v679, 7
    %v681 = vsub.s32 0, %v680
    %v682 = vrot.slane %v200, %v681
    %v684 = vmul.f32 %v672, %v682
    %v685 = vmul.f32 %v673, %v682
    %v686 = vmul.f32 %v674, %v682
    %v687 = vmul.f32 %v675, %v682
    %v688 = vmul.f32 %v676, %v682
    %v689 = vmul.f32 %v677, %v682
    %690 = vadd.xlane.f32.xlu0 %v684
    %v691 = vpop.xlane.xlu0 %690
    %692 = vadd.xlane.f32.xlu0 %v685
    %v693 = vpop.xlane.xlu0 %692
    %694 = vadd.xlane.f32.xlu0 %v686
    %v695 = vpop.xlane.xlu0 %694
    %696 = vadd.xlane.f32.xlu0 %v687
    %v697 = vpop.xlane.xlu0 %696
    %698 = vadd.xlane.f32.xlu0 %v688
    %v699 = vpop.xlane.xlu0 %698
    %700 = vadd.xlane.f32.xlu0 %v689
    %v701 = vpop.xlane.xlu0 %700
    %v708 = vlaneseq
    %v709 = vand.u32 %v708, 127
    %v710 = vlaneseq
    %v711 = vshrl.u32 %v710, 7
    %v712 = vsub.s32 %v709, %v711
    %v713 = vrot.slane %v691, %v712
    %v714 = vlaneseq
    %v715 = vshrl.u32 %v714, 7
    %v716 = vsub.s32 %v709, %v715
    %v717 = vrot.slane %v693, %v716
    %v718 = vlaneseq
    %v719 = vshrl.u32 %v718, 7
    %v720 = vsub.s32 %v709, %v719
    %v721 = vrot.slane %v695, %v720
    %v722 = vlaneseq
    %v723 = vshrl.u32 %v722, 7
    %v724 = vsub.s32 %v709, %v723
    %v725 = vrot.slane %v697, %v724
    %v726 = vlaneseq
    %v727 = vshrl.u32 %v726, 7
    %v728 = vsub.s32 %v709, %v727
    %v729 = vrot.slane %v699, %v728
    %v730 = vlaneseq
    %v731 = vshrl.u32 %v730, 7
    %v732 = vsub.s32 %v709, %v731
    %v733 = vrot.slane %v701, %v732
    %vm734 = vcmask 1041409
    %v735 = vsel %vm734, %v717, %v713
    %vm736 = vcmask 1042434
    %v737 = vsel %vm736, %v721, %v735
    %vm738 = vcmask 1043459
    %v739 = vsel %vm738, %v725, %v737
    %vm740 = vcmask 1044484
    %v741 = vsel %vm740, %v729, %v739
    %vm742 = vcmask 1045509
    %v743 = vsel %vm742, %v733, %v741
    %vm745 = vcmask 62464
    %v746 = vsel %vm745, %v743, -inf
    %747 = vmax.xlane.f32.xlu0 %v746
    %v748 = vpop.xlane.xlu0 %747
    %v750 = vlaneseq
    %v751 = vshrl.u32 %v750, 7
    %v752 = vsub.s32 0, %v751
    %v753 = vrot.slane %v748, %v752
    %v754 = vlaneseq
    %v755 = vshrl.u32 %v754, 7
    %v756 = vsub.s32 1, %v755
    %v757 = vrot.slane %v748, %v756
    %v758 = vlaneseq
    %v759 = vshrl.u32 %v758, 7
    %v760 = vsub.s32 2, %v759
    %v761 = vrot.slane %v748, %v760
    %v762 = vlaneseq
    %v763 = vshrl.u32 %v762, 7
    %v764 = vsub.s32 3, %v763
    %v765 = vrot.slane %v748, %v764
    %v766 = vlaneseq
    %v767 = vshrl.u32 %v766, 7
    %v768 = vsub.s32 4, %v767
    %v769 = vrot.slane %v748, %v768
    %v770 = vlaneseq
    %v771 = vshrl.u32 %v770, 7
    %v772 = vsub.s32 5, %v771
    %v773 = vrot.slane %v748, %v772
    %v780 = vsub.f32 %v691, %v753
    %v781 = vsub.f32 %v693, %v757
    %v782 = vsub.f32 %v695, %v761
    %v783 = vsub.f32 %v697, %v765
    %v784 = vsub.f32 %v699, %v769
    %v785 = vsub.f32 %v701, %v773
    %v786 = vmul.f32 %v780, 1.442695
    %v787 = vpow.pop %v786
    %v788 = vmul.f32 %v781, 1.442695
    %v789 = vpow.pop %v788
    %v790 = vmul.f32 %v782, 1.442695
    %v791 = vpow.pop %v790
    %v792 = vmul.f32 %v783, 1.442695
    %v793 = vpow.pop %v792
    %v794 = vmul.f32 %v784, 1.442695
    %v795 = vpow.pop %v794
    %v796 = vmul.f32 %v785, 1.442695
    %v797 = vpow.pop %v796
    %804 = vset.pattern.permute.xlu0 0
    %805 = vperm.xlu0 %804, %v787
    %v806 = vpop.permute.xlu0 %805
    %807 = vset.pattern.permute.xlu0 0
    %808 = vperm.xlu0 %807, %v789
    %v809 = vpop.permute.xlu0 %808
    %810 = vset.pattern.permute.xlu0 0
    %811 = vperm.xlu0 %810, %v791
    %v812 = vpop.permute.xlu0 %811
    %813 = vset.pattern.permute.xlu0 0
    %814 = vperm.xlu0 %813, %v793
    %v815 = vpop.permute.xlu0 %814
    %816 = vset.pattern.permute.xlu0 0
    %817 = vperm.xlu0 %816, %v795
    %v818 = vpop.permute.xlu0 %817
    %819 = vset.pattern.permute.xlu0 0
    %820 = vperm.xlu0 %819, %v797
    %v821 = vpop.permute.xlu0 %820
    %v822 = vlaneseq
    %v823 = vshrl.u32 %v822, 7
    %v824 = vsub.s32 %v709, %v823
    %v825 = vrot.slane %v806, %v824
    %v826 = vlaneseq
    %v827 = vshrl.u32 %v826, 7
    %v828 = vsub.s32 %v709, %v827
    %v829 = vrot.slane %v809, %v828
    %v830 = vlaneseq
    %v831 = vshrl.u32 %v830, 7
    %v832 = vsub.s32 %v709, %v831
    %v833 = vrot.slane %v812, %v832
    %v834 = vlaneseq
    %v835 = vshrl.u32 %v834, 7
    %v836 = vsub.s32 %v709, %v835
    %v837 = vrot.slane %v815, %v836
    %v838 = vlaneseq
    %v839 = vshrl.u32 %v838, 7
    %v840 = vsub.s32 %v709, %v839
    %v841 = vrot.slane %v818, %v840
    %v842 = vlaneseq
    %v843 = vshrl.u32 %v842, 7
    %v844 = vsub.s32 %v709, %v843
    %v845 = vrot.slane %v821, %v844
    %v846 = vsel %vm734, %v829, %v825
    %v847 = vsel %vm736, %v833, %v846
    %v848 = vsel %vm738, %v837, %v847
    %v849 = vsel %vm740, %v841, %v848
    %v850 = vsel %vm742, %v845, %v849
    %v852 = vsel %vm745, %v850, 0.0
    %853 = vadd.xlane.f32.xlu0 %v852
    %v854 = vpop.xlane.xlu0 %853
    %v856 = vlaneseq
    %v857 = vshrl.u32 %v856, 7
    %v858 = vsub.s32 0, %v857
    %v859 = vrot.slane %v854, %v858
    %v860 = vlaneseq
    %v861 = vshrl.u32 %v860, 7
    %v862 = vsub.s32 1, %v861
    %v863 = vrot.slane %v854, %v862
    %v864 = vlaneseq
    %v865 = vshrl.u32 %v864, 7
    %v866 = vsub.s32 2, %v865
    %v867 = vrot.slane %v854, %v866
    %v868 = vlaneseq
    %v869 = vshrl.u32 %v868, 7
    %v870 = vsub.s32 3, %v869
    %v871 = vrot.slane %v854, %v870
    %v872 = vlaneseq
    %v873 = vshrl.u32 %v872, 7
    %v874 = vsub.s32 4, %v873
    %v875 = vrot.slane %v854, %v874
    %v876 = vlaneseq
    %v877 = vshrl.u32 %v876, 7
    %v878 = vsub.s32 5, %v877
    %v879 = vrot.slane %v854, %v878
    %v886 = vrcp.pop %v859
    %v887 = vmul.f32 %v787, %v886
    %v888 = vrcp.pop %v863
    %v889 = vmul.f32 %v789, %v888
    %v890 = vrcp.pop %v867
    %v891 = vmul.f32 %v791, %v890
    %v892 = vrcp.pop %v871
    %v893 = vmul.f32 %v793, %v892
    %v894 = vrcp.pop %v875
    %v895 = vmul.f32 %v795, %v894
    %v896 = vrcp.pop %v879
    %v897 = vmul.f32 %v797, %v896
    %v898 = vpack.c.bf16 %v887, %v887
    %v899 = vpack.c.bf16 %v889, %v889
    %v900 = vpack.c.bf16 %v891, %v891
    %v901 = vpack.c.bf16 %v893, %v893
    %v902 = vpack.c.bf16 %v895, %v895
    %v903 = vpack.c.bf16 %v897, %v897
    %v905 = vunpack.c.l.b16 %v898
    %906 = vset.pattern.permute.xlu0 0
    %907 = vperm.xlu0 %906, %v905
    %v908 = vpop.permute.xlu0 %907
    %v909 = vlaneseq
    %v910 = vshrl.u32 %v909, 7
    %v911 = vsub.s32 %v709, %v910
    %v912 = vrot.slane %v908, %v911
    %v913 = vpack.c.b16 %v912, %v912
    %vm914 = vcmask 64512
    %v916 = vsel %vm914, %v913, 0
    %v919 = vsel %vm580, %v464, 0
    %921 = vmatprep.subr.bf16.mxu0 0
    %922 = vmatpush1.bf16.msra.mxu0 %v919
    %923 = vmatprep.subr.bf16.mxu0 0
    %924 = vmatpush1.bf16.msra.mxu0 0
    %925 = vmatprep.subr.bf16.mxu0 0
    %926 = vmatpush1.bf16.msra.mxu0 0
    %927 = vmatprep.subr.bf16.mxu0 0
    %928 = vmatpush1.bf16.msra.mxu0 0
    %929 = vmatprep.subr.bf16.mxu0 0
    %930 = vmatpush1.bf16.msra.mxu0 0
    %931 = vmatprep.subr.bf16.mxu0 0
    %932 = vmatpush1.bf16.msra.mxu0 0
    %933 = vmatprep.subr.bf16.mxu0 0
    %934 = vmatpush1.bf16.msra.mxu0 0
    %935 = vmatprep.subr.bf16.mxu0 0
    %936 = vmatpush1.bf16.msra.mxu0 0
    %937 = vmatprep.subr.bf16.mxu0 0
    %938 = vmatpush1.bf16.msra.mxu0 0
    %939 = vmatprep.subr.bf16.mxu0 0
    %940 = vmatpush1.bf16.msra.mxu0 0
    %941 = vmatprep.subr.bf16.mxu0 0
    %942 = vmatpush1.bf16.msra.mxu0 0
    %943 = vmatprep.subr.bf16.mxu0 0
    %944 = vmatpush1.bf16.msra.mxu0 0
    %945 = vmatprep.subr.bf16.mxu0 0
    %946 = vmatpush1.bf16.msra.mxu0 0
    %947 = vmatprep.subr.bf16.mxu0 0
    %948 = vmatpush1.bf16.msra.mxu0 0
    %949 = vmatprep.subr.bf16.mxu0 0
    %950 = vmatpush1.bf16.msra.mxu0 0
    %951 = vmatprep.subr.bf16.mxu0 0
    %952 = vmatpush1.bf16.msra.mxu0 0
    %953 = vmatprep.mubr.bf16.mxu0 0
    %954 = vmatmul.mubr.bf16.gmra.mrb[0].mxu0 %v916
    %v955 = vpop.f32.mrb[0].mxu0
    %v956 = vadd.f32 0.0, %v955
    %v957 = vpop.f32.mrb[0].mxu0
    %v958 = vpop.f32.mrb[0].mxu0
    %v959 = vpop.f32.mrb[0].mxu0
    %960 = vdwg.mxu0
    %v962 = vunpack.c.l.b16 %v899
    %963 = vset.pattern.permute.xlu0 0
    %964 = vperm.xlu0 %963, %v962
    %v965 = vpop.permute.xlu0 %964
    %v966 = vlaneseq
    %v967 = vshrl.u32 %v966, 7
    %v968 = vsub.s32 %v709, %v967
    %v969 = vrot.slane %v965, %v968
    %v970 = vpack.c.b16 %v969, %v969
    %v972 = vsel %vm914, %v970, 0
    %v975 = vsel %vm580, %v465, 0
    %977 = vmatprep.subr.bf16.mxu0 0
    %978 = vmatpush1.bf16.msra.mxu0 %v975
    %979 = vmatprep.subr.bf16.mxu0 0
    %980 = vmatpush1.bf16.msra.mxu0 0
    %981 = vmatprep.subr.bf16.mxu0 0
    %982 = vmatpush1.bf16.msra.mxu0 0
    %983 = vmatprep.subr.bf16.mxu0 0
    %984 = vmatpush1.bf16.msra.mxu0 0
    %985 = vmatprep.subr.bf16.mxu0 0
    %986 = vmatpush1.bf16.msra.mxu0 0
    %987 = vmatprep.subr.bf16.mxu0 0
    %988 = vmatpush1.bf16.msra.mxu0 0
    %989 = vmatprep.subr.bf16.mxu0 0
    %990 = vmatpush1.bf16.msra.mxu0 0
    %991 = vmatprep.subr.bf16.mxu0 0
    %992 = vmatpush1.bf16.msra.mxu0 0
    %993 = vmatprep.subr.bf16.mxu0 0
    %994 = vmatpush1.bf16.msra.mxu0 0
    %995 = vmatprep.subr.bf16.mxu0 0
    %996 = vmatpush1.bf16.msra.mxu0 0
    %997 = vmatprep.subr.bf16.mxu0 0
    %998 = vmatpush1.bf16.msra.mxu0 0
    %999 = vmatprep.subr.bf16.mxu0 0
    %1000 = vmatpush1.bf16.msra.mxu0 0
    %1001 = vmatprep.subr.bf16.mxu0 0
    %1002 = vmatpush1.bf16.msra.mxu0 0
    %1003 = vmatprep.subr.bf16.mxu0 0
    %1004 = vmatpush1.bf16.msra.mxu0 0
    %1005 = vmatprep.subr.bf16.mxu0 0
    %1006 = vmatpush1.bf16.msra.mxu0 0
    %1007 = vmatprep.subr.bf16.mxu0 0
    %1008 = vmatpush1.bf16.msra.mxu0 0
    %1009 = vmatprep.mubr.bf16.mxu0 0
    %1010 = vmatmul.mubr.bf16.gmra.mrb[0].mxu0 %v972
    %v1011 = vpop.f32.mrb[0].mxu0
    %v1012 = vadd.f32 0.0, %v1011
    %v1013 = vpop.f32.mrb[0].mxu0
    %v1014 = vpop.f32.mrb[0].mxu0
    %v1015 = vpop.f32.mrb[0].mxu0
    %1016 = vdwg.mxu0
    %v1018 = vunpack.c.l.b16 %v900
    %1019 = vset.pattern.permute.xlu0 0
    %1020 = vperm.xlu0 %1019, %v1018
    %v1021 = vpop.permute.xlu0 %1020
    %v1022 = vlaneseq
    %v1023 = vshrl.u32 %v1022, 7
    %v1024 = vsub.s32 %v709, %v1023
    %v1025 = vrot.slane %v1021, %v1024
    %v1026 = vpack.c.b16 %v1025, %v1025
    %v1028 = vsel %vm914, %v1026, 0
    %v1031 = vsel %vm580, %v466, 0
    %1033 = vmatprep.subr.bf16.mxu0 0
    %1034 = vmatpush1.bf16.msra.mxu0 %v1031
    %1035 = vmatprep.subr.bf16.mxu0 0
    %1036 = vmatpush1.bf16.msra.mxu0 0
    %1037 = vmatprep.subr.bf16.mxu0 0
    %1038 = vmatpush1.bf16.msra.mxu0 0
    %1039 = vmatprep.subr.bf16.mxu0 0
    %1040 = vmatpush1.bf16.msra.mxu0 0
    %1041 = vmatprep.subr.bf16.mxu0 0
    %1042 = vmatpush1.bf16.msra.mxu0 0
    %1043 = vmatprep.subr.bf16.mxu0 0
    %1044 = vmatpush1.bf16.msra.mxu0 0
    %1045 = vmatprep.subr.bf16.mxu0 0
    %1046 = vmatpush1.bf16.msra.mxu0 0
    %1047 = vmatprep.subr.bf16.mxu0 0
    %1048 = vmatpush1.bf16.msra.mxu0 0
    %1049 = vmatprep.subr.bf16.mxu0 0
    %1050 = vmatpush1.bf16.msra.mxu0 0
    %1051 = vmatprep.subr.bf16.mxu0 0
    %1052 = vmatpush1.bf16.msra.mxu0 0
    %1053 = vmatprep.subr.bf16.mxu0 0
    %1054 = vmatpush1.bf16.msra.mxu0 0
    %1055 = vmatprep.subr.bf16.mxu0 0
    %1056 = vmatpush1.bf16.msra.mxu0 0
    %1057 = vmatprep.subr.bf16.mxu0 0
    %1058 = vmatpush1.bf16.msra.mxu0 0
    %1059 = vmatprep.subr.bf16.mxu0 0
    %1060 = vmatpush1.bf16.msra.mxu0 0
    %1061 = vmatprep.subr.bf16.mxu0 0
    %1062 = vmatpush1.bf16.msra.mxu0 0
    %1063 = vmatprep.subr.bf16.mxu0 0
    %1064 = vmatpush1.bf16.msra.mxu0 0
    %1065 = vmatprep.mubr.bf16.mxu0 0
    %1066 = vmatmul.mubr.bf16.gmra.mrb[0].mxu0 %v1028
    %v1067 = vpop.f32.mrb[0].mxu0
    %v1068 = vadd.f32 0.0, %v1067
    %v1069 = vpop.f32.mrb[0].mxu0
    %v1070 = vpop.f32.mrb[0].mxu0
    %v1071 = vpop.f32.mrb[0].mxu0
    %1072 = vdwg.mxu0
    %v1074 = vunpack.c.l.b16 %v901
    %1075 = vset.pattern.permute.xlu0 0
    %1076 = vperm.xlu0 %1075, %v1074
    %v1077 = vpop.permute.xlu0 %1076
    %v1078 = vlaneseq
    %v1079 = vshrl.u32 %v1078, 7
    %v1080 = vsub.s32 %v709, %v1079
    %v1081 = vrot.slane %v1077, %v1080
    %v1082 = vpack.c.b16 %v1081, %v1081
    %v1084 = vsel %vm914, %v1082, 0
    %v1087 = vsel %vm580, %v467, 0
    %1089 = vmatprep.subr.bf16.mxu0 0
    %1090 = vmatpush1.bf16.msra.mxu0 %v1087
    %1091 = vmatprep.subr.bf16.mxu0 0
    %1092 = vmatpush1.bf16.msra.mxu0 0
    %1093 = vmatprep.subr.bf16.mxu0 0
    %1094 = vmatpush1.bf16.msra.mxu0 0
    %1095 = vmatprep.subr.bf16.mxu0 0
    %1096 = vmatpush1.bf16.msra.mxu0 0
    %1097 = vmatprep.subr.bf16.mxu0 0
    %1098 = vmatpush1.bf16.msra.mxu0 0
    %1099 = vmatprep.subr.bf16.mxu0 0
    %1100 = vmatpush1.bf16.msra.mxu0 0
    %1101 = vmatprep.subr.bf16.mxu0 0
    %1102 = vmatpush1.bf16.msra.mxu0 0
    %1103 = vmatprep.subr.bf16.mxu0 0
    %1104 = vmatpush1.bf16.msra.mxu0 0
    %1105 = vmatprep.subr.bf16.mxu0 0
    %1106 = vmatpush1.bf16.msra.mxu0 0
    %1107 = vmatprep.subr.bf16.mxu0 0
    %1108 = vmatpush1.bf16.msra.mxu0 0
    %1109 = vmatprep.subr.bf16.mxu0 0
    %1110 = vmatpush1.bf16.msra.mxu0 0
    %1111 = vmatprep.subr.bf16.mxu0 0
    %1112 = vmatpush1.bf16.msra.mxu0 0
    %1113 = vmatprep.subr.bf16.mxu0 0
    %1114 = vmatpush1.bf16.msra.mxu0 0
    %1115 = vmatprep.subr.bf16.mxu0 0
    %1116 = vmatpush1.bf16.msra.mxu0 0
    %1117 = vmatprep.subr.bf16.mxu0 0
    %1118 = vmatpush1.bf16.msra.mxu0 0
    %1119 = vmatprep.subr.bf16.mxu0 0
    %1120 = vmatpush1.bf16.msra.mxu0 0
    %1121 = vmatprep.mubr.bf16.mxu0 0
    %1122 = vmatmul.mubr.bf16.gmra.mrb[0].mxu0 %v1084
    %v1123 = vpop.f32.mrb[0].mxu0
    %v1124 = vadd.f32 0.0, %v1123
    %v1125 = vpop.f32.mrb[0].mxu0
    %v1126 = vpop.f32.mrb[0].mxu0
    %v1127 = vpop.f32.mrb[0].mxu0
    %1128 = vdwg.mxu0
    %v1130 = vunpack.c.l.b16 %v902
    %1131 = vset.pattern.permute.xlu0 0
    %1132 = vperm.xlu0 %1131, %v1130
    %v1133 = vpop.permute.xlu0 %1132
    %v1134 = vlaneseq
    %v1135 = vshrl.u32 %v1134, 7
    %v1136 = vsub.s32 %v709, %v1135
    %v1137 = vrot.slane %v1133, %v1136
    %v1138 = vpack.c.b16 %v1137, %v1137
    %v1140 = vsel %vm914, %v1138, 0
    %v1143 = vsel %vm580, %v468, 0
    %1145 = vmatprep.subr.bf16.mxu0 0
    %1146 = vmatpush1.bf16.msra.mxu0 %v1143
    %1147 = vmatprep.subr.bf16.mxu0 0
    %1148 = vmatpush1.bf16.msra.mxu0 0
    %1149 = vmatprep.subr.bf16.mxu0 0
    %1150 = vmatpush1.bf16.msra.mxu0 0
    %1151 = vmatprep.subr.bf16.mxu0 0
    %1152 = vmatpush1.bf16.msra.mxu0 0
    %1153 = vmatprep.subr.bf16.mxu0 0
    %1154 = vmatpush1.bf16.msra.mxu0 0
    %1155 = vmatprep.subr.bf16.mxu0 0
    %1156 = vmatpush1.bf16.msra.mxu0 0
    %1157 = vmatprep.subr.bf16.mxu0 0
    %1158 = vmatpush1.bf16.msra.mxu0 0
    %1159 = vmatprep.subr.bf16.mxu0 0
    %1160 = vmatpush1.bf16.msra.mxu0 0
    %1161 = vmatprep.subr.bf16.mxu0 0
    %1162 = vmatpush1.bf16.msra.mxu0 0
    %1163 = vmatprep.subr.bf16.mxu0 0
    %1164 = vmatpush1.bf16.msra.mxu0 0
    %1165 = vmatprep.subr.bf16.mxu0 0
    %1166 = vmatpush1.bf16.msra.mxu0 0
    %1167 = vmatprep.subr.bf16.mxu0 0
    %1168 = vmatpush1.bf16.msra.mxu0 0
    %1169 = vmatprep.subr.bf16.mxu0 0
    %1170 = vmatpush1.bf16.msra.mxu0 0
    %1171 = vmatprep.subr.bf16.mxu0 0
    %1172 = vmatpush1.bf16.msra.mxu0 0
    %1173 = vmatprep.subr.bf16.mxu0 0
    %1174 = vmatpush1.bf16.msra.mxu0 0
    %1175 = vmatprep.subr.bf16.mxu0 0
    %1176 = vmatpush1.bf16.msra.mxu0 0
    %1177 = vmatprep.mubr.bf16.mxu0 0
    %1178 = vmatmul.mubr.bf16.gmra.mrb[0].mxu0 %v1140
    %v1179 = vpop.f32.mrb[0].mxu0
    %v1180 = vadd.f32 0.0, %v1179
    %v1181 = vpop.f32.mrb[0].mxu0
    %v1182 = vpop.f32.mrb[0].mxu0
    %v1183 = vpop.f32.mrb[0].mxu0
    %1184 = vdwg.mxu0
    %v1186 = vunpack.c.l.b16 %v903
    %1187 = vset.pattern.permute.xlu0 0
    %1188 = vperm.xlu0 %1187, %v1186
    %v1189 = vpop.permute.xlu0 %1188
    %v1190 = vlaneseq
    %v1191 = vshrl.u32 %v1190, 7
    %v1192 = vsub.s32 %v709, %v1191
    %v1193 = vrot.slane %v1189, %v1192
    %v1194 = vpack.c.b16 %v1193, %v1193
    %v1196 = vsel %vm914, %v1194, 0
    %v1199 = vsel %vm580, %v469, 0
    %1201 = vmatprep.subr.bf16.mxu0 0
    %1202 = vmatpush1.bf16.msra.mxu0 %v1199
    %1203 = vmatprep.subr.bf16.mxu0 0
    %1204 = vmatpush1.bf16.msra.mxu0 0
    %1205 = vmatprep.subr.bf16.mxu0 0
    %1206 = vmatpush1.bf16.msra.mxu0 0
    %1207 = vmatprep.subr.bf16.mxu0 0
    %1208 = vmatpush1.bf16.msra.mxu0 0
    %1209 = vmatprep.subr.bf16.mxu0 0
    %1210 = vmatpush1.bf16.msra.mxu0 0
    %1211 = vmatprep.subr.bf16.mxu0 0
    %1212 = vmatpush1.bf16.msra.mxu0 0
    %1213 = vmatprep.subr.bf16.mxu0 0
    %1214 = vmatpush1.bf16.msra.mxu0 0
    %1215 = vmatprep.subr.bf16.mxu0 0
    %1216 = vmatpush1.bf16.msra.mxu0 0
    %1217 = vmatprep.subr.bf16.mxu0 0
    %1218 = vmatpush1.bf16.msra.mxu0 0
    %1219 = vmatprep.subr.bf16.mxu0 0
    %1220 = vmatpush1.bf16.msra.mxu0 0
    %1221 = vmatprep.subr.bf16.mxu0 0
    %1222 = vmatpush1.bf16.msra.mxu0 0
    %1223 = vmatprep.subr.bf16.mxu0 0
    %1224 = vmatpush1.bf16.msra.mxu0 0
    %1225 = vmatprep.subr.bf16.mxu0 0
    %1226 = vmatpush1.bf16.msra.mxu0 0
    %1227 = vmatprep.subr.bf16.mxu0 0
    %1228 = vmatpush1.bf16.msra.mxu0 0
    %1229 = vmatprep.subr.bf16.mxu0 0
    %1230 = vmatpush1.bf16.msra.mxu0 0
    %1231 = vmatprep.subr.bf16.mxu0 0
    %1232 = vmatpush1.bf16.msra.mxu0 0
    %1233 = vmatprep.mubr.bf16.mxu0 0
    %1234 = vmatmul.mubr.bf16.gmra.mrb[0].mxu0 %v1196
    %v1235 = vpop.f32.mrb[0].mxu0
    %v1236 = vadd.f32 0.0, %v1235
    %v1237 = vpop.f32.mrb[0].mxu0
    %v1238 = vpop.f32.mrb[0].mxu0
    %v1239 = vpop.f32.mrb[0].mxu0
    %1240 = vdwg.mxu0
    %v1241 = vsel %vm578, %v463, -inf
    %1242 = vmax.xlane.f32.xlu0 %v1241
    %v1243 = vpop.xlane.xlu0 %1242
    %v1244 = vsub.f32 %v463, %v1243
    %v1245 = vmul.f32 %v1244, 1.442695
    %v1246 = vpow.pop %v1245
    %v1247 = vsel %vm578, %v1246, 0.0
    %1248 = vadd.xlane.f32.xlu0 %v1247
    %v1249 = vpop.xlane.xlu0 %1248
    %v1250 = vrcp.pop %v1249
    %v1251 = vmul.f32 %v1246, %v1250
    %v1252 = vpack.c.bf16 %v1251, %v1251
    %v1254 = vlaneseq
    %v1255 = vshrl.u32 %v1254, 7
    %v1256 = vsub.s32 0, %v1255
    %v1257 = vrot.slane %v217, %v1256
    %v1275 = vunpack.c.l.b16 %v201
    %v1276 = vunpack.c.l.b16 %v202
    %v1277 = vunpack.c.l.b16 %v203
    %v1278 = vunpack.c.l.b16 %v204
    %v1279 = vunpack.c.l.b16 %v205
    %v1280 = vunpack.c.l.b16 %v206
    %v1281 = vunpack.c.l.b16 %v207
    %v1282 = vunpack.c.l.b16 %v208
    %v1283 = vunpack.c.l.b16 %v209
    %v1284 = vunpack.c.l.b16 %v210
    %v1285 = vunpack.c.l.b16 %v211
    %v1286 = vunpack.c.l.b16 %v212
    %v1287 = vunpack.c.l.b16 %v213
    %v1288 = vunpack.c.l.b16 %v214
    %v1289 = vunpack.c.l.b16 %v215
    %v1290 = vunpack.c.l.b16 %v216
    %v1291 = vpack.c.b16 %v1276, %v1275
    %v1292 = vpack.c.b16 %v1278, %v1277
    %v1293 = vpack.c.b16 %v1280, %v1279
    %v1294 = vpack.c.b16 %v1282, %v1281
    %v1295 = vpack.c.b16 %v1284, %v1283
    %v1296 = vpack.c.b16 %v1286, %v1285
    %v1297 = vpack.c.b16 %v1288, %v1287
    %v1298 = vpack.c.b16 %v1290, %v1289
    %1307 = vmatprep.subr.bf16.mxu0 0
    %1308 = vmatpush1.bf16.msra.mxu0 %v1291
    %1309 = vmatprep.subr.bf16.mxu0 0
    %1310 = vmatpush1.bf16.msra.mxu0 %v1292
    %1311 = vmatprep.subr.bf16.mxu0 0
    %1312 = vmatpush1.bf16.msra.mxu0 %v1293
    %1313 = vmatprep.subr.bf16.mxu0 0
    %1314 = vmatpush1.bf16.msra.mxu0 %v1294
    %1315 = vmatprep.subr.bf16.mxu0 0
    %1316 = vmatpush1.bf16.msra.mxu0 %v1295
    %1317 = vmatprep.subr.bf16.mxu0 0
    %1318 = vmatpush1.bf16.msra.mxu0 %v1296
    %1319 = vmatprep.subr.bf16.mxu0 0
    %1320 = vmatpush1.bf16.msra.mxu0 %v1297
    %1321 = vmatprep.subr.bf16.mxu0 0
    %1322 = vmatpush1.bf16.msra.mxu0 %v1298
    %1323 = vmatprep.subr.bf16.mxu0 0
    %1324 = vmatpush1.bf16.msra.mxu0 0
    %1325 = vmatprep.subr.bf16.mxu0 0
    %1326 = vmatpush1.bf16.msra.mxu0 0
    %1327 = vmatprep.subr.bf16.mxu0 0
    %1328 = vmatpush1.bf16.msra.mxu0 0
    %1329 = vmatprep.subr.bf16.mxu0 0
    %1330 = vmatpush1.bf16.msra.mxu0 0
    %1331 = vmatprep.subr.bf16.mxu0 0
    %1332 = vmatpush1.bf16.msra.mxu0 0
    %1333 = vmatprep.subr.bf16.mxu0 0
    %1334 = vmatpush1.bf16.msra.mxu0 0
    %1335 = vmatprep.subr.bf16.mxu0 0
    %1336 = vmatpush1.bf16.msra.mxu0 0
    %1337 = vmatprep.subr.bf16.mxu0 0
    %1338 = vmatpush1.bf16.msra.mxu0 0
    %1339 = vmatprep.mubr.bf16.mxu0 0
    %1340 = vmatmul.mubr.bf16.gmra.mrb[0].mxu0 %v1252
    %v1341 = vpop.f32.mrb[0].mxu0
    %v1342 = vadd.f32 %v1257, %v1341
    %v1343 = vpop.f32.mrb[0].mxu0
    %v1344 = vpop.f32.mrb[0].mxu0
    %v1345 = vpop.f32.mrb[0].mxu0
    %1346 = vdwg.mxu0
    %v1347 = vsub.f32 0.0, %v1342
    %v1348 = vmul.f32 %v1347, 1.442695
    %v1349 = vpow.pop %v1348
    %v1350 = vadd.f32 %v1349, 1.0
    %v1351 = vrcp.pop %v1350
    %v1352 = vmul.f32 1.0, %v1351
    %1354 = vset.pattern.permute.xlu0 0
    %1355 = vperm.xlu0 %1354, %v1352
    %v1356 = vpop.permute.xlu0 %1355
    %v1360 = vrot.slane %v1236, 7
    %v1361 = vsel %vm734, %v1360, %v1180
    %v1363 = vmul.f32 %v1356, %v1361
    %v1365 = vrot.slane %v1363, 1
    %v1368 = vadd.f32 %v956, %v1363
    %v1369 = vadd.f32 %v1012, %v1365
    %v1372 = vrot.slane %v1124, 7
    %v1373 = vsel %vm734, %v1372, %v1068
    %v1377 = vrot.slane %v1369, 7
    %v1378 = vsel %vm734, %v1377, %v1368
    %v1380 = vpack.c.bf16 %v1373, %v1373
    %v1381 = vpack.c.bf16 %v1378, %v1378
    %v1382 = vpack.c.bf16 %v462, %v462
    %v1384 = vlaneseq
    %v1385 = vshrl.u32 %v1384, 7
    %v1386 = vsub.s32 0, %v1385
    %v1387 = vrot.slane %v282, %v1386
    %v1453 = vunpack.c.l.b16 %v218
    %v1454 = vunpack.c.l.b16 %v219
    %v1455 = vunpack.c.l.b16 %v220
    %v1456 = vunpack.c.l.b16 %v221
    %v1457 = vunpack.c.l.b16 %v222
    %v1458 = vunpack.c.l.b16 %v223
    %v1459 = vunpack.c.l.b16 %v224
    %v1460 = vunpack.c.l.b16 %v225
    %v1461 = vunpack.c.l.b16 %v226
    %v1462 = vunpack.c.l.b16 %v227
    %v1463 = vunpack.c.l.b16 %v228
    %v1464 = vunpack.c.l.b16 %v229
    %v1465 = vunpack.c.l.b16 %v230
    %v1466 = vunpack.c.l.b16 %v231
    %v1467 = vunpack.c.l.b16 %v232
    %v1468 = vunpack.c.l.b16 %v233
    %v1469 = vunpack.c.l.b16 %v234
    %v1470 = vunpack.c.l.b16 %v235
    %v1471 = vunpack.c.l.b16 %v236
    %v1472 = vunpack.c.l.b16 %v237
    %v1473 = vunpack.c.l.b16 %v238
    %v1474 = vunpack.c.l.b16 %v239
    %v1475 = vunpack.c.l.b16 %v240
    %v1476 = vunpack.c.l.b16 %v241
    %v1477 = vunpack.c.l.b16 %v242
    %v1478 = vunpack.c.l.b16 %v243
    %v1479 = vunpack.c.l.b16 %v244
    %v1480 = vunpack.c.l.b16 %v245
    %v1481 = vunpack.c.l.b16 %v246
    %v1482 = vunpack.c.l.b16 %v247
    %v1483 = vunpack.c.l.b16 %v248
    %v1484 = vunpack.c.l.b16 %v249
    %v1485 = vunpack.c.l.b16 %v250
    %v1486 = vunpack.c.l.b16 %v251
    %v1487 = vunpack.c.l.b16 %v252
    %v1488 = vunpack.c.l.b16 %v253
    %v1489 = vunpack.c.l.b16 %v254
    %v1490 = vunpack.c.l.b16 %v255
    %v1491 = vunpack.c.l.b16 %v256
    %v1492 = vunpack.c.l.b16 %v257
    %v1493 = vunpack.c.l.b16 %v258
    %v1494 = vunpack.c.l.b16 %v259
    %v1495 = vunpack.c.l.b16 %v260
    %v1496 = vunpack.c.l.b16 %v261
    %v1497 = vunpack.c.l.b16 %v262
    %v1498 = vunpack.c.l.b16 %v263
    %v1499 = vunpack.c.l.b16 %v264
    %v1500 = vunpack.c.l.b16 %v265
    %v1501 = vunpack.c.l.b16 %v266
    %v1502 = vunpack.c.l.b16 %v267
    %v1503 = vunpack.c.l.b16 %v268
    %v1504 = vunpack.c.l.b16 %v269
    %v1505 = vunpack.c.l.b16 %v270
    %v1506 = vunpack.c.l.b16 %v271
    %v1507 = vunpack.c.l.b16 %v272
    %v1508 = vunpack.c.l.b16 %v273
    %v1509 = vunpack.c.l.b16 %v274
    %v1510 = vunpack.c.l.b16 %v275
    %v1511 = vunpack.c.l.b16 %v276
    %v1512 = vunpack.c.l.b16 %v277
    %v1513 = vunpack.c.l.b16 %v278
    %v1514 = vunpack.c.l.b16 %v279
    %v1515 = vunpack.c.l.b16 %v280
    %v1516 = vunpack.c.l.b16 %v281
    %v1517 = vpack.c.b16 %v1454, %v1453
    %v1518 = vpack.c.b16 %v1456, %v1455
    %v1519 = vpack.c.b16 %v1458, %v1457
    %v1520 = vpack.c.b16 %v1460, %v1459
    %v1521 = vpack.c.b16 %v1462, %v1461
    %v1522 = vpack.c.b16 %v1464, %v1463
    %v1523 = vpack.c.b16 %v1466, %v1465
    %v1524 = vpack.c.b16 %v1468, %v1467
    %v1525 = vpack.c.b16 %v1470, %v1469
    %v1526 = vpack.c.b16 %v1472, %v1471
    %v1527 = vpack.c.b16 %v1474, %v1473
    %v1528 = vpack.c.b16 %v1476, %v1475
    %v1529 = vpack.c.b16 %v1478, %v1477
    %v1530 = vpack.c.b16 %v1480, %v1479
    %v1531 = vpack.c.b16 %v1482, %v1481
    %v1532 = vpack.c.b16 %v1484, %v1483
    %v1533 = vpack.c.b16 %v1486, %v1485
    %v1534 = vpack.c.b16 %v1488, %v1487
    %v1535 = vpack.c.b16 %v1490, %v1489
    %v1536 = vpack.c.b16 %v1492, %v1491
    %v1537 = vpack.c.b16 %v1494, %v1493
    %v1538 = vpack.c.b16 %v1496, %v1495
    %v1539 = vpack.c.b16 %v1498, %v1497
    %v1540 = vpack.c.b16 %v1500, %v1499
    %v1541 = vpack.c.b16 %v1502, %v1501
    %v1542 = vpack.c.b16 %v1504, %v1503
    %v1543 = vpack.c.b16 %v1506, %v1505
    %v1544 = vpack.c.b16 %v1508, %v1507
    %v1545 = vpack.c.b16 %v1510, %v1509
    %v1546 = vpack.c.b16 %v1512, %v1511
    %v1547 = vpack.c.b16 %v1514, %v1513
    %v1548 = vpack.c.b16 %v1516, %v1515
    %1581 = vmatprep.subr.bf16.mxu0 0
    %1582 = vmatpush1.bf16.msra.mxu0 %v1517
    %1583 = vmatprep.subr.bf16.mxu0 0
    %1584 = vmatpush1.bf16.msra.mxu0 %v1518
    %1585 = vmatprep.subr.bf16.mxu0 0
    %1586 = vmatpush1.bf16.msra.mxu0 %v1519
    %1587 = vmatprep.subr.bf16.mxu0 0
    %1588 = vmatpush1.bf16.msra.mxu0 %v1520
    %1589 = vmatprep.subr.bf16.mxu0 0
    %1590 = vmatpush1.bf16.msra.mxu0 %v1521
    %1591 = vmatprep.subr.bf16.mxu0 0
    %1592 = vmatpush1.bf16.msra.mxu0 %v1522
    %1593 = vmatprep.subr.bf16.mxu0 0
    %1594 = vmatpush1.bf16.msra.mxu0 %v1523
    %1595 = vmatprep.subr.bf16.mxu0 0
    %1596 = vmatpush1.bf16.msra.mxu0 %v1524
    %1597 = vmatprep.subr.bf16.mxu0 0
    %1598 = vmatpush1.bf16.msra.mxu0 %v1525
    %1599 = vmatprep.subr.bf16.mxu0 0
    %1600 = vmatpush1.bf16.msra.mxu0 %v1526
    %1601 = vmatprep.subr.bf16.mxu0 0
    %1602 = vmatpush1.bf16.msra.mxu0 %v1527
    %1603 = vmatprep.subr.bf16.mxu0 0
    %1604 = vmatpush1.bf16.msra.mxu0 %v1528
    %1605 = vmatprep.subr.bf16.mxu0 0
    %1606 = vmatpush1.bf16.msra.mxu0 %v1529
    %1607 = vmatprep.subr.bf16.mxu0 0
    %1608 = vmatpush1.bf16.msra.mxu0 %v1530
    %1609 = vmatprep.subr.bf16.mxu0 0
    %1610 = vmatpush1.bf16.msra.mxu0 %v1531
    %1611 = vmatprep.subr.bf16.mxu0 0
    %1612 = vmatpush1.bf16.msra.mxu0 %v1532
    %1613 = vmatprep.mubr.bf16.mxu0 %v1381
    %1614 = vmatmul.mubr.bf16.gmra.mrb[0].mxu0 %v1380
    %v1615 = vpop.f32.mrb[0].mxu0
    %v1616 = vadd.f32 %v1387, %v1615
    %v1617 = vpop.f32.mrb[0].mxu0
    %v1618 = vpop.f32.mrb[0].mxu0
    %v1619 = vpop.f32.mrb[0].mxu0
    %1620 = vdwg.mxu0
    %1621 = vmatprep.subr.bf16.mxu0 0
    %1622 = vmatpush1.bf16.msra.mxu0 %v1533
    %1623 = vmatprep.subr.bf16.mxu0 0
    %1624 = vmatpush1.bf16.msra.mxu0 %v1534
    %1625 = vmatprep.subr.bf16.mxu0 0
    %1626 = vmatpush1.bf16.msra.mxu0 %v1535
    %1627 = vmatprep.subr.bf16.mxu0 0
    %1628 = vmatpush1.bf16.msra.mxu0 %v1536
    %1629 = vmatprep.subr.bf16.mxu0 0
    %1630 = vmatpush1.bf16.msra.mxu0 %v1537
    %1631 = vmatprep.subr.bf16.mxu0 0
    %1632 = vmatpush1.bf16.msra.mxu0 %v1538
    %1633 = vmatprep.subr.bf16.mxu0 0
    %1634 = vmatpush1.bf16.msra.mxu0 %v1539
    %1635 = vmatprep.subr.bf16.mxu0 0
    %1636 = vmatpush1.bf16.msra.mxu0 %v1540
    %1637 = vmatprep.subr.bf16.mxu0 0
    %1638 = vmatpush1.bf16.msra.mxu0 %v1541
    %1639 = vmatprep.subr.bf16.mxu0 0
    %1640 = vmatpush1.bf16.msra.mxu0 %v1542
    %1641 = vmatprep.subr.bf16.mxu0 0
    %1642 = vmatpush1.bf16.msra.mxu0 %v1543
    %1643 = vmatprep.subr.bf16.mxu0 0
    %1644 = vmatpush1.bf16.msra.mxu0 %v1544
    %1645 = vmatprep.subr.bf16.mxu0 0
    %1646 = vmatpush1.bf16.msra.mxu0 %v1545
    %1647 = vmatprep.subr.bf16.mxu0 0
    %1648 = vmatpush1.bf16.msra.mxu0 %v1546
    %1649 = vmatprep.subr.bf16.mxu0 0
    %1650 = vmatpush1.bf16.msra.mxu0 %v1547
    %1651 = vmatprep.subr.bf16.mxu0 0
    %1652 = vmatpush1.bf16.msra.mxu0 %v1548
    %1653 = vmatprep.mubr.bf16.mxu0 %v1382
    %1654 = vmatmul.mubr.bf16.gmra.mrb[0].mxu0 %v478
    %v1655 = vpop.f32.mrb[0].mxu0
    %v1656 = vadd.f32 %v1616, %v1655
    %v1657 = vpop.f32.mrb[0].mxu0
    %v1658 = vpop.f32.mrb[0].mxu0
    %v1659 = vpop.f32.mrb[0].mxu0
    %1660 = vdwg.mxu0
    %v1661 = vsub.f32 0.0, %v1656
    %v1662 = vmul.f32 %v1661, 1.442695
    %v1663 = vpow.pop %v1662
    %v1664 = vadd.f32 %v1663, 1.0
    %v1665 = vrcp.pop %v1664
    %v1666 = vmul.f32 1.0, %v1665
    %v1668 = vlaneseq
    %v1669 = vshrl.u32 %v1668, 7
    %v1670 = vsub.s32 0, %v1669
    %v1671 = vrot.slane %v411, %v1670
    %v1672 = vlaneseq
    %v1673 = vshrl.u32 %v1672, 7
    %v1674 = vsub.s32 1, %v1673
    %v1675 = vrot.slane %v411, %v1674
    %v1676 = vlaneseq
    %v1677 = vshrl.u32 %v1676, 7
    %v1678 = vsub.s32 2, %v1677
    %v1679 = vrot.slane %v411, %v1678
    %v1779 = vunpack.c.l.b16 %v283
    %v1780 = vunpack.c.h.b16 %v283
    %v1781 = vunpack.c.l.b16 %v284
    %v1782 = vunpack.c.l.b16 %v285
    %v1783 = vunpack.c.h.b16 %v285
    %v1784 = vunpack.c.l.b16 %v286
    %v1785 = vunpack.c.l.b16 %v287
    %v1786 = vunpack.c.h.b16 %v287
    %v1787 = vunpack.c.l.b16 %v288
    %v1788 = vunpack.c.l.b16 %v289
    %v1789 = vunpack.c.h.b16 %v289
    %v1790 = vunpack.c.l.b16 %v290
    %v1791 = vunpack.c.l.b16 %v291
    %v1792 = vunpack.c.h.b16 %v291
    %v1793 = vunpack.c.l.b16 %v292
    %v1794 = vunpack.c.l.b16 %v293
    %v1795 = vunpack.c.h.b16 %v293
    %v1796 = vunpack.c.l.b16 %v294
    %v1797 = vunpack.c.l.b16 %v295
    %v1798 = vunpack.c.h.b16 %v295
    %v1799 = vunpack.c.l.b16 %v296
    %v1800 = vunpack.c.l.b16 %v297
    %v1801 = vunpack.c.h.b16 %v297
    %v1802 = vunpack.c.l.b16 %v298
    %v1803 = vunpack.c.l.b16 %v299
    %v1804 = vunpack.c.h.b16 %v299
    %v1805 = vunpack.c.l.b16 %v300
    %v1806 = vunpack.c.l.b16 %v301
    %v1807 = vunpack.c.h.b16 %v301
    %v1808 = vunpack.c.l.b16 %v302
    %v1809 = vunpack.c.l.b16 %v303
    %v1810 = vunpack.c.h.b16 %v303
    %v1811 = vunpack.c.l.b16 %v304
    %v1812 = vunpack.c.l.b16 %v305
    %v1813 = vunpack.c.h.b16 %v305
    %v1814 = vunpack.c.l.b16 %v306
    %v1815 = vunpack.c.l.b16 %v307
    %v1816 = vunpack.c.h.b16 %v307
    %v1817 = vunpack.c.l.b16 %v308
    %v1818 = vunpack.c.l.b16 %v309
    %v1819 = vunpack.c.h.b16 %v309
    %v1820 = vunpack.c.l.b16 %v310
    %v1821 = vunpack.c.l.b16 %v311
    %v1822 = vunpack.c.h.b16 %v311
    %v1823 = vunpack.c.l.b16 %v312
    %v1824 = vunpack.c.l.b16 %v313
    %v1825 = vunpack.c.h.b16 %v313
    %v1826 = vunpack.c.l.b16 %v314
    %v1827 = vunpack.c.l.b16 %v315
    %v1828 = vunpack.c.h.b16 %v315
    %v1829 = vunpack.c.l.b16 %v316
    %v1830 = vunpack.c.l.b16 %v317
    %v1831 = vunpack.c.h.b16 %v317
    %v1832 = vunpack.c.l.b16 %v318
    %v1833 = vunpack.c.l.b16 %v319
    %v1834 = vunpack.c.h.b16 %v319
    %v1835 = vunpack.c.l.b16 %v320
    %v1836 = vunpack.c.l.b16 %v321
    %v1837 = vunpack.c.h.b16 %v321
    %v1838 = vunpack.c.l.b16 %v322
    %v1839 = vunpack.c.l.b16 %v323
    %v1840 = vunpack.c.h.b16 %v323
    %v1841 = vunpack.c.l.b16 %v324
    %v1842 = vunpack.c.l.b16 %v325
    %v1843 = vunpack.c.h.b16 %v325
    %v1844 = vunpack.c.l.b16 %v326
    %v1845 = vunpack.c.l.b16 %v327
    %v1846 = vunpack.c.h.b16 %v327
    %v1847 = vunpack.c.l.b16 %v328
    %v1848 = vunpack.c.l.b16 %v329
    %v1849 = vunpack.c.h.b16 %v329
    %v1850 = vunpack.c.l.b16 %v330
    %v1851 = vunpack.c.l.b16 %v331
    %v1852 = vunpack.c.h.b16 %v331
    %v1853 = vunpack.c.l.b16 %v332
    %v1854 = vunpack.c.l.b16 %v333
    %v1855 = vunpack.c.h.b16 %v333
    %v1856 = vunpack.c.l.b16 %v334
    %v1857 = vunpack.c.l.b16 %v335
    %v1858 = vunpack.c.h.b16 %v335
    %v1859 = vunpack.c.l.b16 %v336
    %v1860 = vunpack.c.l.b16 %v337
    %v1861 = vunpack.c.h.b16 %v337
    %v1862 = vunpack.c.l.b16 %v338
    %v1863 = vunpack.c.l.b16 %v339
    %v1864 = vunpack.c.h.b16 %v339
    %v1865 = vunpack.c.l.b16 %v340
    %v1866 = vunpack.c.l.b16 %v341
    %v1867 = vunpack.c.h.b16 %v341
    %v1868 = vunpack.c.l.b16 %v342
    %v1869 = vunpack.c.l.b16 %v343
    %v1870 = vunpack.c.h.b16 %v343
    %v1871 = vunpack.c.l.b16 %v344
    %v1872 = vunpack.c.l.b16 %v345
    %v1873 = vunpack.c.h.b16 %v345
    %v1874 = vunpack.c.l.b16 %v346
    %v1875 = vunpack.c.l.b16 %v347
    %v1876 = vunpack.c.h.b16 %v347
    %v1877 = vunpack.c.l.b16 %v348
    %v1878 = vunpack.c.l.b16 %v349
    %v1879 = vunpack.c.h.b16 %v349
    %v1880 = vunpack.c.l.b16 %v350
    %v1881 = vunpack.c.l.b16 %v351
    %v1882 = vunpack.c.h.b16 %v351
    %v1883 = vunpack.c.l.b16 %v352
    %v1884 = vunpack.c.l.b16 %v353
    %v1885 = vunpack.c.h.b16 %v353
    %v1886 = vunpack.c.l.b16 %v354
    %v1887 = vunpack.c.l.b16 %v355
    %v1888 = vunpack.c.h.b16 %v355
    %v1889 = vunpack.c.l.b16 %v356
    %v1890 = vunpack.c.l.b16 %v357
    %v1891 = vunpack.c.h.b16 %v357
    %v1892 = vunpack.c.l.b16 %v358
    %v1893 = vunpack.c.l.b16 %v359
    %v1894 = vunpack.c.h.b16 %v359
    %v1895 = vunpack.c.l.b16 %v360
    %v1896 = vunpack.c.l.b16 %v361
    %v1897 = vunpack.c.h.b16 %v361
    %v1898 = vunpack.c.l.b16 %v362
    %v1899 = vunpack.c.l.b16 %v363
    %v1900 = vunpack.c.h.b16 %v363
    %v1901 = vunpack.c.l.b16 %v364
    %v1902 = vunpack.c.l.b16 %v365
    %v1903 = vunpack.c.h.b16 %v365
    %v1904 = vunpack.c.l.b16 %v366
    %v1905 = vunpack.c.l.b16 %v367
    %v1906 = vunpack.c.h.b16 %v367
    %v1907 = vunpack.c.l.b16 %v368
    %v1908 = vunpack.c.l.b16 %v369
    %v1909 = vunpack.c.h.b16 %v369
    %v1910 = vunpack.c.l.b16 %v370
    %v1911 = vunpack.c.l.b16 %v371
    %v1912 = vunpack.c.h.b16 %v371
    %v1913 = vunpack.c.l.b16 %v372
    %v1914 = vunpack.c.l.b16 %v373
    %v1915 = vunpack.c.h.b16 %v373
    %v1916 = vunpack.c.l.b16 %v374
    %v1917 = vunpack.c.l.b16 %v375
    %v1918 = vunpack.c.h.b16 %v375
    %v1919 = vunpack.c.l.b16 %v376
    %v1920 = vunpack.c.l.b16 %v377
    %v1921 = vunpack.c.h.b16 %v377
    %v1922 = vunpack.c.l.b16 %v378
    %v1923 = vpack.c.b16 %v1782, %v1779
    %v1924 = vpack.c.b16 %v1783, %v1780
    %v1925 = vpack.c.b16 %v1784, %v1781
    %v1926 = vpack.c.b16 %v1788, %v1785
    %v1927 = vpack.c.b16 %v1789, %v1786
    %v1928 = vpack.c.b16 %v1790, %v1787
    %v1929 = vpack.c.b16 %v1794, %v1791
    %v1930 = vpack.c.b16 %v1795, %v1792
    %v1931 = vpack.c.b16 %v1796, %v1793
    %v1932 = vpack.c.b16 %v1800, %v1797
    %v1933 = vpack.c.b16 %v1801, %v1798
    %v1934 = vpack.c.b16 %v1802, %v1799
    %v1935 = vpack.c.b16 %v1806, %v1803
    %v1936 = vpack.c.b16 %v1807, %v1804
    %v1937 = vpack.c.b16 %v1808, %v1805
    %v1938 = vpack.c.b16 %v1812, %v1809
    %v1939 = vpack.c.b16 %v1813, %v1810
    %v1940 = vpack.c.b16 %v1814, %v1811
    %v1941 = vpack.c.b16 %v1818, %v1815
    %v1942 = vpack.c.b16 %v1819, %v1816
    %v1943 = vpack.c.b16 %v1820, %v1817
    %v1944 = vpack.c.b16 %v1824, %v1821
    %v1945 = vpack.c.b16 %v1825, %v1822
    %v1946 = vpack.c.b16 %v1826, %v1823
    %v1947 = vpack.c.b16 %v1830, %v1827
    %v1948 = vpack.c.b16 %v1831, %v1828
    %v1949 = vpack.c.b16 %v1832, %v1829
    %v1950 = vpack.c.b16 %v1836, %v1833
    %v1951 = vpack.c.b16 %v1837, %v1834
    %v1952 = vpack.c.b16 %v1838, %v1835
    %v1953 = vpack.c.b16 %v1842, %v1839
    %v1954 = vpack.c.b16 %v1843, %v1840
    %v1955 = vpack.c.b16 %v1844, %v1841
    %v1956 = vpack.c.b16 %v1848, %v1845
    %v1957 = vpack.c.b16 %v1849, %v1846
    %v1958 = vpack.c.b16 %v1850, %v1847
    %v1959 = vpack.c.b16 %v1854, %v1851
    %v1960 = vpack.c.b16 %v1855, %v1852
    %v1961 = vpack.c.b16 %v1856, %v1853
    %v1962 = vpack.c.b16 %v1860, %v1857
    %v1963 = vpack.c.b16 %v1861, %v1858
    %v1964 = vpack.c.b16 %v1862, %v1859
    %v1965 = vpack.c.b16 %v1866, %v1863
    %v1966 = vpack.c.b16 %v1867, %v1864
    %v1967 = vpack.c.b16 %v1868, %v1865
    %v1968 = vpack.c.b16 %v1872, %v1869
    %v1969 = vpack.c.b16 %v1873, %v1870
    %v1970 = vpack.c.b16 %v1874, %v1871
    %v1971 = vpack.c.b16 %v1878, %v1875
    %v1972 = vpack.c.b16 %v1879, %v1876
    %v1973 = vpack.c.b16 %v1880, %v1877
    %v1974 = vpack.c.b16 %v1884, %v1881
    %v1975 = vpack.c.b16 %v1885, %v1882
    %v1976 = vpack.c.b16 %v1886, %v1883
    %v1977 = vpack.c.b16 %v1890, %v1887
    %v1978 = vpack.c.b16 %v1891, %v1888
    %v1979 = vpack.c.b16 %v1892, %v1889
    %v1980 = vpack.c.b16 %v1896, %v1893
    %v1981 = vpack.c.b16 %v1897, %v1894
    %v1982 = vpack.c.b16 %v1898, %v1895
    %v1983 = vpack.c.b16 %v1902, %v1899
    %v1984 = vpack.c.b16 %v1903, %v1900
    %v1985 = vpack.c.b16 %v1904, %v1901
    %v1986 = vpack.c.b16 %v1908, %v1905
    %v1987 = vpack.c.b16 %v1909, %v1906
    %v1988 = vpack.c.b16 %v1910, %v1907
    %v1989 = vpack.c.b16 %v1914, %v1911
    %v1990 = vpack.c.b16 %v1915, %v1912
    %v1991 = vpack.c.b16 %v1916, %v1913
    %v1992 = vpack.c.b16 %v1920, %v1917
    %v1993 = vpack.c.b16 %v1921, %v1918
    %v1994 = vpack.c.b16 %v1922, %v1919
    %2067 = vmatprep.subr.bf16.mxu0 %v1924
    %2068 = vmatpush1.bf16.msra.mxu0 %v1923
    %2069 = vmatprep.subr.bf16.mxu0 %v1927
    %2070 = vmatpush1.bf16.msra.mxu0 %v1926
    %2071 = vmatprep.subr.bf16.mxu0 %v1930
    %2072 = vmatpush1.bf16.msra.mxu0 %v1929
    %2073 = vmatprep.subr.bf16.mxu0 %v1933
    %2074 = vmatpush1.bf16.msra.mxu0 %v1932
    %2075 = vmatprep.subr.bf16.mxu0 %v1936
    %2076 = vmatpush1.bf16.msra.mxu0 %v1935
    %2077 = vmatprep.subr.bf16.mxu0 %v1939
    %2078 = vmatpush1.bf16.msra.mxu0 %v1938
    %2079 = vmatprep.subr.bf16.mxu0 %v1942
    %2080 = vmatpush1.bf16.msra.mxu0 %v1941
    %2081 = vmatprep.subr.bf16.mxu0 %v1945
    %2082 = vmatpush1.bf16.msra.mxu0 %v1944
    %2083 = vmatprep.subr.bf16.mxu0 %v1948
    %2084 = vmatpush1.bf16.msra.mxu0 %v1947
    %2085 = vmatprep.subr.bf16.mxu0 %v1951
    %2086 = vmatpush1.bf16.msra.mxu0 %v1950
    %2087 = vmatprep.subr.bf16.mxu0 %v1954
    %2088 = vmatpush1.bf16.msra.mxu0 %v1953
    %2089 = vmatprep.subr.bf16.mxu0 %v1957
    %2090 = vmatpush1.bf16.msra.mxu0 %v1956
    %2091 = vmatprep.subr.bf16.mxu0 %v1960
    %2092 = vmatpush1.bf16.msra.mxu0 %v1959
    %2093 = vmatprep.subr.bf16.mxu0 %v1963
    %2094 = vmatpush1.bf16.msra.mxu0 %v1962
    %2095 = vmatprep.subr.bf16.mxu0 %v1966
    %2096 = vmatpush1.bf16.msra.mxu0 %v1965
    %2097 = vmatprep.subr.bf16.mxu0 %v1969
    %2098 = vmatpush1.bf16.msra.mxu0 %v1968
    %2099 = vmatprep.mubr.bf16.mxu0 %v1380
    %2100 = vmatmul.mubr.bf16.gmra.mrb[0].mxu0 %v1382
    %v2101 = vpop.f32.mrb[0].mxu0
    %v2102 = vadd.f32 %v1671, %v2101
    %v2103 = vpop.f32.mrb[0].mxu0
    %v2104 = vadd.f32 %v1675, %v2103
    %v2105 = vpop.f32.mrb[0].mxu0
    %v2106 = vpop.f32.mrb[0].mxu0
    %2107 = vdwg.mxu0
    %2108 = vmatprep.subr.bf16.mxu0 %v1972
    %2109 = vmatpush1.bf16.msra.mxu0 %v1971
    %2110 = vmatprep.subr.bf16.mxu0 %v1975
    %2111 = vmatpush1.bf16.msra.mxu0 %v1974
    %2112 = vmatprep.subr.bf16.mxu0 %v1978
    %2113 = vmatpush1.bf16.msra.mxu0 %v1977
    %2114 = vmatprep.subr.bf16.mxu0 %v1981
    %2115 = vmatpush1.bf16.msra.mxu0 %v1980
    %2116 = vmatprep.subr.bf16.mxu0 %v1984
    %2117 = vmatpush1.bf16.msra.mxu0 %v1983
    %2118 = vmatprep.subr.bf16.mxu0 %v1987
    %2119 = vmatpush1.bf16.msra.mxu0 %v1986
    %2120 = vmatprep.subr.bf16.mxu0 %v1990
    %2121 = vmatpush1.bf16.msra.mxu0 %v1989
    %2122 = vmatprep.subr.bf16.mxu0 %v1993
    %2123 = vmatpush1.bf16.msra.mxu0 %v1992
    %2124 = vmatprep.subr.bf16.mxu0 0
    %2125 = vmatpush1.bf16.msra.mxu0 0
    %2126 = vmatprep.subr.bf16.mxu0 0
    %2127 = vmatpush1.bf16.msra.mxu0 0
    %2128 = vmatprep.subr.bf16.mxu0 0
    %2129 = vmatpush1.bf16.msra.mxu0 0
    %2130 = vmatprep.subr.bf16.mxu0 0
    %2131 = vmatpush1.bf16.msra.mxu0 0
    %2132 = vmatprep.subr.bf16.mxu0 0
    %2133 = vmatpush1.bf16.msra.mxu0 0
    %2134 = vmatprep.subr.bf16.mxu0 0
    %2135 = vmatpush1.bf16.msra.mxu0 0
    %2136 = vmatprep.subr.bf16.mxu0 0
    %2137 = vmatpush1.bf16.msra.mxu0 0
    %2138 = vmatprep.subr.bf16.mxu0 0
    %2139 = vmatpush1.bf16.msra.mxu0 0
    %2140 = vmatprep.mubr.bf16.mxu0 0
    %2141 = vmatmul.mubr.bf16.gmra.mrb[0].mxu0 %v1381
    %v2142 = vpop.f32.mrb[0].mxu0
    %v2143 = vadd.f32 %v2102, %v2142
    %v2144 = vpop.f32.mrb[0].mxu0
    %v2145 = vadd.f32 %v2104, %v2144
    %v2146 = vpop.f32.mrb[0].mxu0
    %v2147 = vpop.f32.mrb[0].mxu0
    %2148 = vdwg.mxu0
    %2149 = vmatprep.subr.bf16.mxu0 0
    %2150 = vmatpush1.bf16.msra.mxu0 %v1925
    %2151 = vmatprep.subr.bf16.mxu0 0
    %2152 = vmatpush1.bf16.msra.mxu0 %v1928
    %2153 = vmatprep.subr.bf16.mxu0 0
    %2154 = vmatpush1.bf16.msra.mxu0 %v1931
    %2155 = vmatprep.subr.bf16.mxu0 0
    %2156 = vmatpush1.bf16.msra.mxu0 %v1934
    %2157 = vmatprep.subr.bf16.mxu0 0
    %2158 = vmatpush1.bf16.msra.mxu0 %v1937
    %2159 = vmatprep.subr.bf16.mxu0 0
    %2160 = vmatpush1.bf16.msra.mxu0 %v1940
    %2161 = vmatprep.subr.bf16.mxu0 0
    %2162 = vmatpush1.bf16.msra.mxu0 %v1943
    %2163 = vmatprep.subr.bf16.mxu0 0
    %2164 = vmatpush1.bf16.msra.mxu0 %v1946
    %2165 = vmatprep.subr.bf16.mxu0 0
    %2166 = vmatpush1.bf16.msra.mxu0 %v1949
    %2167 = vmatprep.subr.bf16.mxu0 0
    %2168 = vmatpush1.bf16.msra.mxu0 %v1952
    %2169 = vmatprep.subr.bf16.mxu0 0
    %2170 = vmatpush1.bf16.msra.mxu0 %v1955
    %2171 = vmatprep.subr.bf16.mxu0 0
    %2172 = vmatpush1.bf16.msra.mxu0 %v1958
    %2173 = vmatprep.subr.bf16.mxu0 0
    %2174 = vmatpush1.bf16.msra.mxu0 %v1961
    %2175 = vmatprep.subr.bf16.mxu0 0
    %2176 = vmatpush1.bf16.msra.mxu0 %v1964
    %2177 = vmatprep.subr.bf16.mxu0 0
    %2178 = vmatpush1.bf16.msra.mxu0 %v1967
    %2179 = vmatprep.subr.bf16.mxu0 0
    %2180 = vmatpush1.bf16.msra.mxu0 %v1970
    %2181 = vmatprep.mubr.bf16.mxu0 %v1380
    %2182 = vmatmul.mubr.bf16.gmra.mrb[0].mxu0 %v1382
    %v2183 = vpop.f32.mrb[0].mxu0
    %v2184 = vadd.f32 %v1679, %v2183
    %v2185 = vpop.f32.mrb[0].mxu0
    %v2186 = vpop.f32.mrb[0].mxu0
    %v2187 = vpop.f32.mrb[0].mxu0
    %2188 = vdwg.mxu0
    %2189 = vmatprep.subr.bf16.mxu0 0
    %2190 = vmatpush1.bf16.msra.mxu0 %v1973
    %2191 = vmatprep.subr.bf16.mxu0 0
    %2192 = vmatpush1.bf16.msra.mxu0 %v1976
    %2193 = vmatprep.subr.bf16.mxu0 0
    %2194 = vmatpush1.bf16.msra.mxu0 %v1979
    %2195 = vmatprep.subr.bf16.mxu0 0
    %2196 = vmatpush1.bf16.msra.mxu0 %v1982
    %2197 = vmatprep.subr.bf16.mxu0 0
    %2198 = vmatpush1.bf16.msra.mxu0 %v1985
    %2199 = vmatprep.subr.bf16.mxu0 0
    %2200 = vmatpush1.bf16.msra.mxu0 %v1988
    %2201 = vmatprep.subr.bf16.mxu0 0
    %2202 = vmatpush1.bf16.msra.mxu0 %v1991
    %2203 = vmatprep.subr.bf16.mxu0 0
    %2204 = vmatpush1.bf16.msra.mxu0 %v1994
    %2205 = vmatprep.subr.bf16.mxu0 0
    %2206 = vmatpush1.bf16.msra.mxu0 0
    %2207 = vmatprep.subr.bf16.mxu0 0
    %2208 = vmatpush1.bf16.msra.mxu0 0
    %2209 = vmatprep.subr.bf16.mxu0 0
    %2210 = vmatpush1.bf16.msra.mxu0 0
    %2211 = vmatprep.subr.bf16.mxu0 0
    %2212 = vmatpush1.bf16.msra.mxu0 0
    %2213 = vmatprep.subr.bf16.mxu0 0
    %2214 = vmatpush1.bf16.msra.mxu0 0
    %2215 = vmatprep.subr.bf16.mxu0 0
    %2216 = vmatpush1.bf16.msra.mxu0 0
    %2217 = vmatprep.subr.bf16.mxu0 0
    %2218 = vmatpush1.bf16.msra.mxu0 0
    %2219 = vmatprep.subr.bf16.mxu0 0
    %2220 = vmatpush1.bf16.msra.mxu0 0
    %2221 = vmatprep.mubr.bf16.mxu0 0
    %2222 = vmatmul.mubr.bf16.gmra.mrb[0].mxu0 %v1381
    %v2223 = vpop.f32.mrb[0].mxu0
    %v2224 = vadd.f32 %v2184, %v2223
    %v2225 = vpop.f32.mrb[0].mxu0
    %v2226 = vpop.f32.mrb[0].mxu0
    %v2227 = vpop.f32.mrb[0].mxu0
    %2228 = vdwg.mxu0
    %v2230 = vlaneseq
    %v2231 = vshrl.u32 %v2230, 7
    %v2232 = vsub.s32 0, %v2231
    %v2233 = vrot.slane %v412, %v2232
    %v2234 = vlaneseq
    %v2235 = vshrl.u32 %v2234, 7
    %v2236 = vsub.s32 1, %v2235
    %v2237 = vrot.slane %v412, %v2236
    %v2238 = vlaneseq
    %v2239 = vshrl.u32 %v2238, 7
    %v2240 = vsub.s32 2, %v2239
    %v2241 = vrot.slane %v412, %v2240
    %v2277 = vunpack.c.l.b16 %v379
    %v2278 = vunpack.c.h.b16 %v379
    %v2279 = vunpack.c.l.b16 %v380
    %v2280 = vunpack.c.l.b16 %v381
    %v2281 = vunpack.c.h.b16 %v381
    %v2282 = vunpack.c.l.b16 %v382
    %v2283 = vunpack.c.l.b16 %v383
    %v2284 = vunpack.c.h.b16 %v383
    %v2285 = vunpack.c.l.b16 %v384
    %v2286 = vunpack.c.l.b16 %v385
    %v2287 = vunpack.c.h.b16 %v385
    %v2288 = vunpack.c.l.b16 %v386
    %v2289 = vunpack.c.l.b16 %v387
    %v2290 = vunpack.c.h.b16 %v387
    %v2291 = vunpack.c.l.b16 %v388
    %v2292 = vunpack.c.l.b16 %v389
    %v2293 = vunpack.c.h.b16 %v389
    %v2294 = vunpack.c.l.b16 %v390
    %v2295 = vunpack.c.l.b16 %v391
    %v2296 = vunpack.c.h.b16 %v391
    %v2297 = vunpack.c.l.b16 %v392
    %v2298 = vunpack.c.l.b16 %v393
    %v2299 = vunpack.c.h.b16 %v393
    %v2300 = vunpack.c.l.b16 %v394
    %v2301 = vunpack.c.l.b16 %v395
    %v2302 = vunpack.c.h.b16 %v395
    %v2303 = vunpack.c.l.b16 %v396
    %v2304 = vunpack.c.l.b16 %v397
    %v2305 = vunpack.c.h.b16 %v397
    %v2306 = vunpack.c.l.b16 %v398
    %v2307 = vunpack.c.l.b16 %v399
    %v2308 = vunpack.c.h.b16 %v399
    %v2309 = vunpack.c.l.b16 %v400
    %v2310 = vunpack.c.l.b16 %v401
    %v2311 = vunpack.c.h.b16 %v401
    %v2312 = vunpack.c.l.b16 %v402
    %v2313 = vunpack.c.l.b16 %v403
    %v2314 = vunpack.c.h.b16 %v403
    %v2315 = vunpack.c.l.b16 %v404
    %v2316 = vunpack.c.l.b16 %v405
    %v2317 = vunpack.c.h.b16 %v405
    %v2318 = vunpack.c.l.b16 %v406
    %v2319 = vunpack.c.l.b16 %v407
    %v2320 = vunpack.c.h.b16 %v407
    %v2321 = vunpack.c.l.b16 %v408
    %v2322 = vunpack.c.l.b16 %v409
    %v2323 = vunpack.c.h.b16 %v409
    %v2324 = vunpack.c.l.b16 %v410
    %v2325 = vpack.c.b16 %v2280, %v2277
    %v2326 = vpack.c.b16 %v2281, %v2278
    %v2327 = vpack.c.b16 %v2282, %v2279
    %v2328 = vpack.c.b16 %v2286, %v2283
    %v2329 = vpack.c.b16 %v2287, %v2284
    %v2330 = vpack.c.b16 %v2288, %v2285
    %v2331 = vpack.c.b16 %v2292, %v2289
    %v2332 = vpack.c.b16 %v2293, %v2290
    %v2333 = vpack.c.b16 %v2294, %v2291
    %v2334 = vpack.c.b16 %v2298, %v2295
    %v2335 = vpack.c.b16 %v2299, %v2296
    %v2336 = vpack.c.b16 %v2300, %v2297
    %v2337 = vpack.c.b16 %v2304, %v2301
    %v2338 = vpack.c.b16 %v2305, %v2302
    %v2339 = vpack.c.b16 %v2306, %v2303
    %v2340 = vpack.c.b16 %v2310, %v2307
    %v2341 = vpack.c.b16 %v2311, %v2308
    %v2342 = vpack.c.b16 %v2312, %v2309
    %v2343 = vpack.c.b16 %v2316, %v2313
    %v2344 = vpack.c.b16 %v2317, %v2314
    %v2345 = vpack.c.b16 %v2318, %v2315
    %v2346 = vpack.c.b16 %v2322, %v2319
    %v2347 = vpack.c.b16 %v2323, %v2320
    %v2348 = vpack.c.b16 %v2324, %v2321
    %2373 = vmatprep.subr.bf16.mxu0 %v2326
    %2374 = vmatpush1.bf16.msra.mxu0 %v2325
    %2375 = vmatprep.subr.bf16.mxu0 %v2329
    %2376 = vmatpush1.bf16.msra.mxu0 %v2328
    %2377 = vmatprep.subr.bf16.mxu0 %v2332
    %2378 = vmatpush1.bf16.msra.mxu0 %v2331
    %2379 = vmatprep.subr.bf16.mxu0 %v2335
    %2380 = vmatpush1.bf16.msra.mxu0 %v2334
    %2381 = vmatprep.subr.bf16.mxu0 %v2338
    %2382 = vmatpush1.bf16.msra.mxu0 %v2337
    %2383 = vmatprep.subr.bf16.mxu0 %v2341
    %2384 = vmatpush1.bf16.msra.mxu0 %v2340
    %2385 = vmatprep.subr.bf16.mxu0 %v2344
    %2386 = vmatpush1.bf16.msra.mxu0 %v2343
    %2387 = vmatprep.subr.bf16.mxu0 %v2347
    %2388 = vmatpush1.bf16.msra.mxu0 %v2346
    %2389 = vmatprep.subr.bf16.mxu0 0
    %2390 = vmatpush1.bf16.msra.mxu0 0
    %2391 = vmatprep.subr.bf16.mxu0 0
    %2392 = vmatpush1.bf16.msra.mxu0 0
    %2393 = vmatprep.subr.bf16.mxu0 0
    %2394 = vmatpush1.bf16.msra.mxu0 0
    %2395 = vmatprep.subr.bf16.mxu0 0
    %2396 = vmatpush1.bf16.msra.mxu0 0
    %2397 = vmatprep.subr.bf16.mxu0 0
    %2398 = vmatpush1.bf16.msra.mxu0 0
    %2399 = vmatprep.subr.bf16.mxu0 0
    %2400 = vmatpush1.bf16.msra.mxu0 0
    %2401 = vmatprep.subr.bf16.mxu0 0
    %2402 = vmatpush1.bf16.msra.mxu0 0
    %2403 = vmatprep.subr.bf16.mxu0 0
    %2404 = vmatpush1.bf16.msra.mxu0 0
    %2405 = vmatprep.mubr.bf16.mxu0 0
    %2406 = vmatmul.mubr.bf16.gmra.mrb[0].mxu0 %v478
    %v2407 = vpop.f32.mrb[0].mxu0
    %v2408 = vadd.f32 %v2233, %v2407
    %v2409 = vpop.f32.mrb[0].mxu0
    %v2410 = vadd.f32 %v2237, %v2409
    %v2411 = vpop.f32.mrb[0].mxu0
    %v2412 = vpop.f32.mrb[0].mxu0
    %2413 = vdwg.mxu0
    %2414 = vmatprep.subr.bf16.mxu0 0
    %2415 = vmatpush1.bf16.msra.mxu0 %v2327
    %2416 = vmatprep.subr.bf16.mxu0 0
    %2417 = vmatpush1.bf16.msra.mxu0 %v2330
    %2418 = vmatprep.subr.bf16.mxu0 0
    %2419 = vmatpush1.bf16.msra.mxu0 %v2333
    %2420 = vmatprep.subr.bf16.mxu0 0
    %2421 = vmatpush1.bf16.msra.mxu0 %v2336
    %2422 = vmatprep.subr.bf16.mxu0 0
    %2423 = vmatpush1.bf16.msra.mxu0 %v2339
    %2424 = vmatprep.subr.bf16.mxu0 0
    %2425 = vmatpush1.bf16.msra.mxu0 %v2342
    %2426 = vmatprep.subr.bf16.mxu0 0
    %2427 = vmatpush1.bf16.msra.mxu0 %v2345
    %2428 = vmatprep.subr.bf16.mxu0 0
    %2429 = vmatpush1.bf16.msra.mxu0 %v2348
    %2430 = vmatprep.subr.bf16.mxu0 0
    %2431 = vmatpush1.bf16.msra.mxu0 0
    %2432 = vmatprep.subr.bf16.mxu0 0
    %2433 = vmatpush1.bf16.msra.mxu0 0
    %2434 = vmatprep.subr.bf16.mxu0 0
    %2435 = vmatpush1.bf16.msra.mxu0 0
    %2436 = vmatprep.subr.bf16.mxu0 0
    %2437 = vmatpush1.bf16.msra.mxu0 0
    %2438 = vmatprep.subr.bf16.mxu0 0
    %2439 = vmatpush1.bf16.msra.mxu0 0
    %2440 = vmatprep.subr.bf16.mxu0 0
    %2441 = vmatpush1.bf16.msra.mxu0 0
    %2442 = vmatprep.subr.bf16.mxu0 0
    %2443 = vmatpush1.bf16.msra.mxu0 0
    %2444 = vmatprep.subr.bf16.mxu0 0
    %2445 = vmatpush1.bf16.msra.mxu0 0
    %2446 = vmatprep.mubr.bf16.mxu0 0
    %2447 = vmatmul.mubr.bf16.gmra.mrb[0].mxu0 %v478
    %v2448 = vpop.f32.mrb[0].mxu0
    %v2449 = vadd.f32 %v2241, %v2448
    %v2450 = vpop.f32.mrb[0].mxu0
    %v2451 = vpop.f32.mrb[0].mxu0
    %v2452 = vpop.f32.mrb[0].mxu0
    %2453 = vdwg.mxu0
    %v2454 = vadd.f32 %v2143, %v2408
    %v2455 = vsub.f32 0.0, %v2454
    %v2456 = vmul.f32 %v2455, 1.442695
    %v2457 = vpow.pop %v2456
    %v2458 = vadd.f32 %v2457, 1.0
    %v2459 = vrcp.pop %v2458
    %v2460 = vmul.f32 1.0, %v2459
    %v2461 = vadd.f32 %v2145, %v2410
    %v2462 = vsub.f32 0.0, %v2461
    %v2463 = vmul.f32 %v2462, 1.442695
    %v2464 = vpow.pop %v2463
    %v2465 = vadd.f32 %v2464, 1.0
    %v2466 = vrcp.pop %v2465
    %v2467 = vmul.f32 1.0, %v2466
    %v2468 = vmul.f32 %v2460, %v2449
    %v2469 = vadd.f32 %v2224, %v2468
    %v2470 = vtanh.pop %v2469
    %v2471 = vsub.f32 1.0, %v2467
    %v2472 = vmul.f32 %v2471, %v2470
    %v2473 = vmul.f32 %v2467, %v463
    %v2474 = vadd.f32 %v2472, %v2473
    %v2475 = vpack.c.bf16 %v2474, %v2474
    %v2477 = vlaneseq
    %v2478 = vshrl.u32 %v2477, 7
    %v2479 = vsub.s32 0, %v2478
    %v2480 = vrot.slane %v461, %v2479
    %v2530 = vunpack.c.l.b16 %v413
    %v2531 = vunpack.c.l.b16 %v414
    %v2532 = vunpack.c.l.b16 %v415
    %v2533 = vunpack.c.l.b16 %v416
    %v2534 = vunpack.c.l.b16 %v417
    %v2535 = vunpack.c.l.b16 %v418
    %v2536 = vunpack.c.l.b16 %v419
    %v2537 = vunpack.c.l.b16 %v420
    %v2538 = vunpack.c.l.b16 %v421
    %v2539 = vunpack.c.l.b16 %v422
    %v2540 = vunpack.c.l.b16 %v423
    %v2541 = vunpack.c.l.b16 %v424
    %v2542 = vunpack.c.l.b16 %v425
    %v2543 = vunpack.c.l.b16 %v426
    %v2544 = vunpack.c.l.b16 %v427
    %v2545 = vunpack.c.l.b16 %v428
    %v2546 = vunpack.c.l.b16 %v429
    %v2547 = vunpack.c.l.b16 %v430
    %v2548 = vunpack.c.l.b16 %v431
    %v2549 = vunpack.c.l.b16 %v432
    %v2550 = vunpack.c.l.b16 %v433
    %v2551 = vunpack.c.l.b16 %v434
    %v2552 = vunpack.c.l.b16 %v435
    %v2553 = vunpack.c.l.b16 %v436
    %v2554 = vunpack.c.l.b16 %v437
    %v2555 = vunpack.c.l.b16 %v438
    %v2556 = vunpack.c.l.b16 %v439
    %v2557 = vunpack.c.l.b16 %v440
    %v2558 = vunpack.c.l.b16 %v441
    %v2559 = vunpack.c.l.b16 %v442
    %v2560 = vunpack.c.l.b16 %v443
    %v2561 = vunpack.c.l.b16 %v444
    %v2562 = vunpack.c.l.b16 %v445
    %v2563 = vunpack.c.l.b16 %v446
    %v2564 = vunpack.c.l.b16 %v447
    %v2565 = vunpack.c.l.b16 %v448
    %v2566 = vunpack.c.l.b16 %v449
    %v2567 = vunpack.c.l.b16 %v450
    %v2568 = vunpack.c.l.b16 %v451
    %v2569 = vunpack.c.l.b16 %v452
    %v2570 = vunpack.c.l.b16 %v453
    %v2571 = vunpack.c.l.b16 %v454
    %v2572 = vunpack.c.l.b16 %v455
    %v2573 = vunpack.c.l.b16 %v456
    %v2574 = vunpack.c.l.b16 %v457
    %v2575 = vunpack.c.l.b16 %v458
    %v2576 = vunpack.c.l.b16 %v459
    %v2577 = vunpack.c.l.b16 %v460
    %v2578 = vpack.c.b16 %v2531, %v2530
    %v2579 = vpack.c.b16 %v2533, %v2532
    %v2580 = vpack.c.b16 %v2535, %v2534
    %v2581 = vpack.c.b16 %v2537, %v2536
    %v2582 = vpack.c.b16 %v2539, %v2538
    %v2583 = vpack.c.b16 %v2541, %v2540
    %v2584 = vpack.c.b16 %v2543, %v2542
    %v2585 = vpack.c.b16 %v2545, %v2544
    %v2586 = vpack.c.b16 %v2547, %v2546
    %v2587 = vpack.c.b16 %v2549, %v2548
    %v2588 = vpack.c.b16 %v2551, %v2550
    %v2589 = vpack.c.b16 %v2553, %v2552
    %v2590 = vpack.c.b16 %v2555, %v2554
    %v2591 = vpack.c.b16 %v2557, %v2556
    %v2592 = vpack.c.b16 %v2559, %v2558
    %v2593 = vpack.c.b16 %v2561, %v2560
    %v2594 = vpack.c.b16 %v2563, %v2562
    %v2595 = vpack.c.b16 %v2565, %v2564
    %v2596 = vpack.c.b16 %v2567, %v2566
    %v2597 = vpack.c.b16 %v2569, %v2568
    %v2598 = vpack.c.b16 %v2571, %v2570
    %v2599 = vpack.c.b16 %v2573, %v2572
    %v2600 = vpack.c.b16 %v2575, %v2574
    %v2601 = vpack.c.b16 %v2577, %v2576
    %2626 = vmatprep.subr.bf16.mxu0 0
    %2627 = vmatpush1.bf16.msra.mxu0 %v2578
    %2628 = vmatprep.subr.bf16.mxu0 0
    %2629 = vmatpush1.bf16.msra.mxu0 %v2579
    %2630 = vmatprep.subr.bf16.mxu0 0
    %2631 = vmatpush1.bf16.msra.mxu0 %v2580
    %2632 = vmatprep.subr.bf16.mxu0 0
    %2633 = vmatpush1.bf16.msra.mxu0 %v2581
    %2634 = vmatprep.subr.bf16.mxu0 0
    %2635 = vmatpush1.bf16.msra.mxu0 %v2582
    %2636 = vmatprep.subr.bf16.mxu0 0
    %2637 = vmatpush1.bf16.msra.mxu0 %v2583
    %2638 = vmatprep.subr.bf16.mxu0 0
    %2639 = vmatpush1.bf16.msra.mxu0 %v2584
    %2640 = vmatprep.subr.bf16.mxu0 0
    %2641 = vmatpush1.bf16.msra.mxu0 %v2585
    %2642 = vmatprep.subr.bf16.mxu0 0
    %2643 = vmatpush1.bf16.msra.mxu0 %v2586
    %2644 = vmatprep.subr.bf16.mxu0 0
    %2645 = vmatpush1.bf16.msra.mxu0 %v2587
    %2646 = vmatprep.subr.bf16.mxu0 0
    %2647 = vmatpush1.bf16.msra.mxu0 %v2588
    %2648 = vmatprep.subr.bf16.mxu0 0
    %2649 = vmatpush1.bf16.msra.mxu0 %v2589
    %2650 = vmatprep.subr.bf16.mxu0 0
    %2651 = vmatpush1.bf16.msra.mxu0 %v2590
    %2652 = vmatprep.subr.bf16.mxu0 0
    %2653 = vmatpush1.bf16.msra.mxu0 %v2591
    %2654 = vmatprep.subr.bf16.mxu0 0
    %2655 = vmatpush1.bf16.msra.mxu0 %v2592
    %2656 = vmatprep.subr.bf16.mxu0 0
    %2657 = vmatpush1.bf16.msra.mxu0 %v2593
    %2658 = vmatprep.mubr.bf16.mxu0 %v1380
    %2659 = vmatmul.mubr.bf16.gmra.mrb[0].mxu0 %v2475
    %v2660 = vpop.f32.mrb[0].mxu0
    %v2661 = vadd.f32 %v2480, %v2660
    %v2662 = vpop.f32.mrb[0].mxu0
    %v2663 = vpop.f32.mrb[0].mxu0
    %v2664 = vpop.f32.mrb[0].mxu0
    %2665 = vdwg.mxu0
    %2666 = vmatprep.subr.bf16.mxu0 0
    %2667 = vmatpush1.bf16.msra.mxu0 %v2594
    %2668 = vmatprep.subr.bf16.mxu0 0
    %2669 = vmatpush1.bf16.msra.mxu0 %v2595
    %2670 = vmatprep.subr.bf16.mxu0 0
    %2671 = vmatpush1.bf16.msra.mxu0 %v2596
    %2672 = vmatprep.subr.bf16.mxu0 0
    %2673 = vmatpush1.bf16.msra.mxu0 %v2597
    %2674 = vmatprep.subr.bf16.mxu0 0
    %2675 = vmatpush1.bf16.msra.mxu0 %v2598
    %2676 = vmatprep.subr.bf16.mxu0 0
    %2677 = vmatpush1.bf16.msra.mxu0 %v2599
    %2678 = vmatprep.subr.bf16.mxu0 0
    %2679 = vmatpush1.bf16.msra.mxu0 %v2600
    %2680 = vmatprep.subr.bf16.mxu0 0
    %2681 = vmatpush1.bf16.msra.mxu0 %v2601
    %2682 = vmatprep.subr.bf16.mxu0 0
    %2683 = vmatpush1.bf16.msra.mxu0 0
    %2684 = vmatprep.subr.bf16.mxu0 0
    %2685 = vmatpush1.bf16.msra.mxu0 0
    %2686 = vmatprep.subr.bf16.mxu0 0
    %2687 = vmatpush1.bf16.msra.mxu0 0
    %2688 = vmatprep.subr.bf16.mxu0 0
    %2689 = vmatpush1.bf16.msra.mxu0 0
    %2690 = vmatprep.subr.bf16.mxu0 0
    %2691 = vmatpush1.bf16.msra.mxu0 0
    %2692 = vmatprep.subr.bf16.mxu0 0
    %2693 = vmatpush1.bf16.msra.mxu0 0
    %2694 = vmatprep.subr.bf16.mxu0 0
    %2695 = vmatpush1.bf16.msra.mxu0 0
    %2696 = vmatprep.subr.bf16.mxu0 0
    %2697 = vmatpush1.bf16.msra.mxu0 0
    %2698 = vmatprep.mubr.bf16.mxu0 0
    %2699 = vmatmul.mubr.bf16.gmra.mrb[0].mxu0 %v1381
    %v2700 = vpop.f32.mrb[0].mxu0
    %v2701 = vadd.f32 %v2661, %v2700
    %v2702 = vpop.f32.mrb[0].mxu0
    %v2703 = vpop.f32.mrb[0].mxu0
    %v2704 = vpop.f32.mrb[0].mxu0
    %2705 = vdwg.mxu0
    %v2706 = vsel %vm578, %v2701, -inf
    %2707 = vmax.xlane.f32.xlu0 %v2706
    %v2708 = vpop.xlane.xlu0 %2707
    %v2709 = vsub.f32 %v2701, %v2708
    %v2710 = vmul.f32 %v2709, 1.442695
    %v2711 = vpow.pop %v2710
    %v2712 = vsel %vm578, %v2711, 0.0
    %2713 = vadd.xlane.f32.xlu0 %v2712
    %v2714 = vpop.xlane.xlu0 %2713
    %v2715 = vrcp.pop %v2714
    %v2716 = vmul.f32 %v2711, %v2715
    %v2717 = vsub.f32 1.0, %v1666
    %2719 = vset.pattern.permute.xlu0 0
    %2720 = vperm.xlu0 %2719, %v2717
    %v2721 = vpop.permute.xlu0 %2720
    %2725 = vset.pattern.permute.xlu0 0
    %2726 = vperm.xlu0 %2725, %v887
    %v2727 = vpop.permute.xlu0 %2726
    %2728 = vset.pattern.permute.xlu0 0
    %2729 = vperm.xlu0 %2728, %v889
    %v2730 = vpop.permute.xlu0 %2729
    %v2731 = vlaneseq
    %v2732 = vshrl.u32 %v2731, 7
    %v2733 = vsub.s32 %v709, %v2732
    %v2734 = vrot.slane %v2727, %v2733
    %v2735 = vlaneseq
    %v2736 = vshrl.u32 %v2735, 7
    %v2737 = vsub.s32 %v709, %v2736
    %v2738 = vrot.slane %v2730, %v2737
    %v2739 = vsel %vm734, %v2738, %v2734
    %v2741 = vmul.f32 %v2721, %v2739
    %2743 = vset.pattern.permute.xlu0 0
    %2744 = vperm.xlu0 %2743, %v1666
    %v2745 = vpop.permute.xlu0 %2744
    %v2747 = vmul.f32 %v2745, %v2716
    %v2748 = vadd.f32 %v2747, %v477
    %v2749 = vlaneseq
    %v2750 = vshrl.u32 %v2749, 7
    %v2751 = vsub.s32 0, %v2750
    %v2752 = vrot.slane %v476, %v2751
    %2754 = vbcast.lane.b32.xlu0 %v2752, 256
    %v2755 = vpop.permute.xlu0 %2754
    %v2756 = vlaneseq
    %v2757 = vshrl.u32 %v2756, 7
    %v2758 = vsub.s32 1, %v2757
    %v2759 = vrot.slane %v476, %v2758
    %2761 = vbcast.lane.b32.xlu0 %v2759, 256
    %v2762 = vpop.permute.xlu0 %2761
    %vm2763 = vcmp.eq.s32.totalorder %v709, %v2755
    %vm2764 = vcmp.eq.s32.totalorder %v709, %v2762
    %v2765 = vsel %vm2763, 1, 0
    %v2766 = vsel %vm2764, 1, 0
    %v2767 = vcvt.s32.f32 %v2765
    %v2768 = vcvt.s32.f32 %v2766
    %v2771 = vunpack.c.l.s4 1966171168
    %v2772 = vunpack.c.0.s8 %v2771
    %v2773 = vlaneseq
    %v2774 = vshrl.u32 %v2773, 7
    %v2775 = vsub.s32 %v2772, %v2774
    %v2776 = vrot.slane %v2741, %v2775
    %v2777 = vcombine.high %v2776, %v2776
    %v2779 = vunpack.c.l.s4 1966171168
    %v2780 = vunpack.c.0.s8 %v2779
    %v2781 = vlaneseq
    %v2782 = vshrl.u32 %v2781, 7
    %v2783 = vsub.s32 %v2780, %v2782
    %v2784 = vrot.slane %v2776, %v2783
    %v2786 = vunpack.c.l.s4 1966171168
    %v2787 = vunpack.c.0.s8 %v2786
    %v2788 = vlaneseq
    %v2789 = vshrl.u32 %v2788, 7
    %v2790 = vsub.s32 %v2787, %v2789
    %v2791 = vrot.slane %v2777, %v2790
    %v2792 = vsel %vm914, %v2784, 0
    %2794 = vmatprep.subr.mxu0 0.0
    %2795 = vmatpush1.msra.mxu0 %v2767
    %2796 = vmatprep.subr.mxu0 0.0
    %2797 = vmatpush1.msra.mxu0 0.0
    %2798 = vmatprep.subr.mxu0 0.0
    %2799 = vmatpush1.msra.mxu0 0.0
    %2800 = vmatprep.subr.mxu0 0.0
    %2801 = vmatpush1.msra.mxu0 0.0
    %2802 = vmatprep.subr.mxu0 0.0
    %2803 = vmatpush1.msra.mxu0 0.0
    %2804 = vmatprep.subr.mxu0 0.0
    %2805 = vmatpush1.msra.mxu0 0.0
    %2806 = vmatprep.subr.mxu0 0.0
    %2807 = vmatpush1.msra.mxu0 0.0
    %2808 = vmatprep.subr.mxu0 0.0
    %2809 = vmatpush1.msra.mxu0 0.0
    %2810 = vmatprep.subr.mxu0 0.0
    %2811 = vmatpush1.msra.mxu0 0.0
    %2812 = vmatprep.subr.mxu0 0.0
    %2813 = vmatpush1.msra.mxu0 0.0
    %2814 = vmatprep.subr.mxu0 0.0
    %2815 = vmatpush1.msra.mxu0 0.0
    %2816 = vmatprep.subr.mxu0 0.0
    %2817 = vmatpush1.msra.mxu0 0.0
    %2818 = vmatprep.subr.mxu0 0.0
    %2819 = vmatpush1.msra.mxu0 0.0
    %2820 = vmatprep.subr.mxu0 0.0
    %2821 = vmatpush1.msra.mxu0 0.0
    %2822 = vmatprep.subr.mxu0 0.0
    %2823 = vmatpush1.msra.mxu0 0.0
    %2824 = vmatprep.subr.mxu0 0.0
    %2825 = vmatpush1.msra.mxu0 0.0
    %2826 = vmatprep.subr.mxu0 0.0
    %2827 = vmatpush1.msra.mxu0 0.0
    %2828 = vmatprep.subr.mxu0 0.0
    %2829 = vmatpush1.msra.mxu0 0.0
    %2830 = vmatprep.subr.mxu0 0.0
    %2831 = vmatpush1.msra.mxu0 0.0
    %2832 = vmatprep.subr.mxu0 0.0
    %2833 = vmatpush1.msra.mxu0 0.0
    %2834 = vmatprep.subr.mxu0 0.0
    %2835 = vmatpush1.msra.mxu0 0.0
    %2836 = vmatprep.subr.mxu0 0.0
    %2837 = vmatpush1.msra.mxu0 0.0
    %2838 = vmatprep.subr.mxu0 0.0
    %2839 = vmatpush1.msra.mxu0 0.0
    %2840 = vmatprep.subr.mxu0 0.0
    %2841 = vmatpush1.msra.mxu0 0.0
    %2842 = vmatprep.subr.mxu0 0.0
    %2843 = vmatpush1.msra.mxu0 0.0
    %2844 = vmatprep.subr.mxu0 0.0
    %2845 = vmatpush1.msra.mxu0 0.0
    %2846 = vmatprep.subr.mxu0 0.0
    %2847 = vmatpush1.msra.mxu0 0.0
    %2848 = vmatprep.subr.mxu0 0.0
    %2849 = vmatpush1.msra.mxu0 0.0
    %2850 = vmatprep.subr.mxu0 0.0
    %2851 = vmatpush1.msra.mxu0 0.0
    %2852 = vmatprep.subr.mxu0 0.0
    %2853 = vmatpush1.msra.mxu0 0.0
    %2854 = vmatprep.subr.mxu0 0.0
    %2855 = vmatpush1.msra.mxu0 0.0
    %2856 = vmatprep.subr.mxu0 0.0
    %2857 = vmatpush1.msra.mxu0 0.0
    %2858 = vmatprep.mubr.f32.mxu0 0.0
    %2859 = vmatmul.mubr.f32.gmra.mrb[0].mxu0 %v2792
    %v2860 = vpop.f32.mrb[0].mxu0
    %v2861 = vadd.f32 0.0, %v2860
    %v2862 = vpop.f32.mrb[0].mxu0
    %2863 = vdwg.mxu0
    %v2864 = vsel %vm914, %v2791, 0
    %2866 = vmatprep.subr.mxu0 0.0
    %2867 = vmatpush1.msra.mxu0 %v2768
    %2868 = vmatprep.subr.mxu0 0.0
    %2869 = vmatpush1.msra.mxu0 0.0
    %2870 = vmatprep.subr.mxu0 0.0
    %2871 = vmatpush1.msra.mxu0 0.0
    %2872 = vmatprep.subr.mxu0 0.0
    %2873 = vmatpush1.msra.mxu0 0.0
    %2874 = vmatprep.subr.mxu0 0.0
    %2875 = vmatpush1.msra.mxu0 0.0
    %2876 = vmatprep.subr.mxu0 0.0
    %2877 = vmatpush1.msra.mxu0 0.0
    %2878 = vmatprep.subr.mxu0 0.0
    %2879 = vmatpush1.msra.mxu0 0.0
    %2880 = vmatprep.subr.mxu0 0.0
    %2881 = vmatpush1.msra.mxu0 0.0
    %2882 = vmatprep.subr.mxu0 0.0
    %2883 = vmatpush1.msra.mxu0 0.0
    %2884 = vmatprep.subr.mxu0 0.0
    %2885 = vmatpush1.msra.mxu0 0.0
    %2886 = vmatprep.subr.mxu0 0.0
    %2887 = vmatpush1.msra.mxu0 0.0
    %2888 = vmatprep.subr.mxu0 0.0
    %2889 = vmatpush1.msra.mxu0 0.0
    %2890 = vmatprep.subr.mxu0 0.0
    %2891 = vmatpush1.msra.mxu0 0.0
    %2892 = vmatprep.subr.mxu0 0.0
    %2893 = vmatpush1.msra.mxu0 0.0
    %2894 = vmatprep.subr.mxu0 0.0
    %2895 = vmatpush1.msra.mxu0 0.0
    %2896 = vmatprep.subr.mxu0 0.0
    %2897 = vmatpush1.msra.mxu0 0.0
    %2898 = vmatprep.subr.mxu0 0.0
    %2899 = vmatpush1.msra.mxu0 0.0
    %2900 = vmatprep.subr.mxu0 0.0
    %2901 = vmatpush1.msra.mxu0 0.0
    %2902 = vmatprep.subr.mxu0 0.0
    %2903 = vmatpush1.msra.mxu0 0.0
    %2904 = vmatprep.subr.mxu0 0.0
    %2905 = vmatpush1.msra.mxu0 0.0
    %2906 = vmatprep.subr.mxu0 0.0
    %2907 = vmatpush1.msra.mxu0 0.0
    %2908 = vmatprep.subr.mxu0 0.0
    %2909 = vmatpush1.msra.mxu0 0.0
    %2910 = vmatprep.subr.mxu0 0.0
    %2911 = vmatpush1.msra.mxu0 0.0
    %2912 = vmatprep.subr.mxu0 0.0
    %2913 = vmatpush1.msra.mxu0 0.0
    %2914 = vmatprep.subr.mxu0 0.0
    %2915 = vmatpush1.msra.mxu0 0.0
    %2916 = vmatprep.subr.mxu0 0.0
    %2917 = vmatpush1.msra.mxu0 0.0
    %2918 = vmatprep.subr.mxu0 0.0
    %2919 = vmatpush1.msra.mxu0 0.0
    %2920 = vmatprep.subr.mxu0 0.0
    %2921 = vmatpush1.msra.mxu0 0.0
    %2922 = vmatprep.subr.mxu0 0.0
    %2923 = vmatpush1.msra.mxu0 0.0
    %2924 = vmatprep.subr.mxu0 0.0
    %2925 = vmatpush1.msra.mxu0 0.0
    %2926 = vmatprep.subr.mxu0 0.0
    %2927 = vmatpush1.msra.mxu0 0.0
    %2928 = vmatprep.subr.mxu0 0.0
    %2929 = vmatpush1.msra.mxu0 0.0
    %2930 = vmatprep.mubr.f32.mxu0 0.0
    %2931 = vmatmul.mubr.f32.gmra.mrb[0].mxu0 %v2864
    %v2932 = vpop.f32.mrb[0].mxu0
    %v2933 = vadd.f32 0.0, %v2932
    %v2934 = vpop.f32.mrb[0].mxu0
    %2935 = vdwg.mxu0
    %v2938 = vrot.slane %v2933, 7
    %v2939 = vsel %vm734, %v2938, %v2861
    %v2941 = vadd.f32 %v2748, %v2939
    %v2942 = vadd.f32 %v2941, 1e-12
    %v2943 = vlog2.pop %v2942
    %v2944 = vmul.f32 %v2943, 0.6931472
    %2945 = vst [vmem:[#allocation9] sm:$0x3] %v2944
    %2946 = vst [vmem:[%s21] sm:$0x3] %v2474
    // Predicated region
    $region142: #{decoder_forward.1} parent=1 // pred_check
      _
    $region143: #{decoder_forward.1} parent=1 // pred_check_branch
      %2948 = sbr.rel (0) target = $region145
    $region144: #{decoder_forward.1} parent=1 // pred_region
      %s2950 = ssub.s32 32, 32
      %2951 = vsyncadd [#allocation7], %s2950
      %s2953 = sshll.u32 [#allocation9], 4
      %s2954 = int_to_ptr.vmem [resolvable:$true] %s2953
      %2956 = dma.vmem_to_hbm [thread:$0]  %s2954, 32, %s20, [#allocation7]
    $region145: #{decoder_forward.1} parent=1 // pred_fallthru
      _
    // Predicated region
    $region146: #{decoder_forward.1} parent=1 // pred_check
      _
    $region147: #{decoder_forward.1} parent=1 // pred_check_branch
      %2958 = sbr.rel (0) target = $region149
    $region148: #{decoder_forward.1} parent=1 // pred_region
      _
    $region149: #{decoder_forward.1} parent=1 // pred_fallthru
      _
    // Predicated region
    $region150: #{decoder_forward.1} parent=1 // pred_check
      _
    $region151: #{decoder_forward.1} parent=1 // pred_check_branch
      %2960 = sbr.rel (0) target = $region153
    $region152: #{decoder_forward.1} parent=1 // pred_region
      %2961 = dma.done [#allocation7], 32
    $region153: #{decoder_forward.1} parent=1 // pred_fallthru
      _
    // Predicated region
    $region154: #{decoder_forward.1} parent=1 // pred_check
      _
    $region155: #{decoder_forward.1} parent=1 // pred_check_branch
      %2963 = sbr.rel (0) target = $region157
    $region156: #{decoder_forward.1} parent=1 // pred_region
      _
    $region157: #{decoder_forward.1} parent=1 // pred_fallthru
      _
    %2964 = vsyncpa [#allocation7], 1
    %2965 = vsyncpa [#allocation8], 1
  %2966 = vsyncmov [#allocation3]
  %s2967 = vpop.sfrf %2966
  %p2968 = scmp.eq.s32.totalorder %s2967, 0
  %p2969 = pneg %p2968
  %2971 = shalt.err (%p2969)
  %s2972 = scalar_lea.sflag [#allocation3], 1
  %2973 = vsyncmov %s2972
  %s2974 = vpop.sfrf %2973
  %p2975 = scmp.eq.s32.totalorder %s2974, 0
  %p2976 = pneg %p2975
  %2978 = shalt.err (%p2976)

</llo_original>
